<compile_context>
chip_gen: v5e
topology: v5e:2x2
jax: 0.10.0
libtpu: 0.0.40
codegen_flags: <defaults>
</compile_context>

<pallas_src>
import math

import jax
import jax.numpy as jnp
from jax.experimental import pallas as pl
from jax.experimental.pallas import tpu as pltpu

BN_EPS = 1e-5
HIDDEN_DIM = 64


# ----------------------------------------------------------------------------
# Single fused Pallas kernel for the whole AttentionBlock0 forward pass
# ----------------------------------------------------------------------------
def _attention_block0_kernel(
    hidden_ref, query_ref,
    stem_w_ref, ds_w_ref,
    r1_w1_ref, r1_w2_ref, r1_wd_ref,
    r2_w1_ref, r2_w2_ref,
    wq_ref, wkv_ref,
    pt0_w_ref, up0_w_ref,
    u1_w1_ref, u1_w2_ref, u1_wd_ref,
    u2_w1_ref, u2_w2_ref,
    pt1_w_ref,
    o_ref,
):
    f32 = jnp.float32
    bf16 = jnp.bfloat16

    def mm(x, w):
        # bf16 MXU matmul, f32 accumulation.
        return jnp.dot(x.astype(bf16), w, preferred_element_type=f32)

    def bn(h):
        # Training-mode BatchNorm over the point axis (gamma=1, beta=0, biased var).
        mu = jnp.mean(h, axis=0, keepdims=True)
        var = jnp.mean((h - mu) ** 2, axis=0, keepdims=True)
        return (h - mu) * jax.lax.rsqrt(var + BN_EPS)

    def conv_bn_relu(x, w):
        return jnp.maximum(bn(mm(x, w)), 0.0)

    def conv_bn(x, w):
        return bn(mm(x, w))

    def residual(x, w1, w2, wd=None):
        h = conv_bn(conv_bn_relu(x, w1), w2)
        d = x if wd is None else conv_bn(x, wd)
        return jnp.maximum(h + d, 0.0)

    # Load all (tiny) bf16 weights once.
    stem_w = stem_w_ref[...]
    ds_w = ds_w_ref[...]
    r1_w1, r1_w2, r1_wd = r1_w1_ref[...], r1_w2_ref[...], r1_wd_ref[...]
    r2_w1, r2_w2 = r2_w1_ref[...], r2_w2_ref[...]
    wq, wkv = wq_ref[...], wkv_ref[...]
    pt0_w, up0_w = pt0_w_ref[...], up0_w_ref[...]
    u1_w1, u1_w2, u1_wd = u1_w1_ref[...], u1_w2_ref[...], u1_wd_ref[...]
    u2_w1, u2_w2 = u2_w1_ref[...], u2_w2_ref[...]
    pt1_w = pt1_w_ref[...]

    hidden_v0 = hidden_ref[...]
    query_v0 = query_ref[...]

    # TODO(synk): initial_voxelize / voxel_to_point / point_to_voxel need sparse
    # coordinate hashing + trilinear scatter/gather (torchsparse); treated as
    # identity maps on features here.
    # TODO(synk): spnn.Conv3d 3^3 neighbor aggregation needs sparse kernel maps;
    # modeled as the center-tap per-point linear transform.

    # stem: Conv(in->32) + BN + ReLU (weights shared between hidden / query)
    hidden_vinit = conv_bn_relu(hidden_v0, stem_w)
    query_vinit = conv_bn_relu(query_v0, stem_w)

    def downsample(x):
        # TODO(synk): stride-2 sparse downsample keeps N here (no voxel hashing).
        x = conv_bn_relu(x, ds_w)                  # BasicConvolutionBlock 32->32
        x = residual(x, r1_w1, r1_w2, r1_wd)       # ResidualBlock 32->64
        x = residual(x, r2_w1, r2_w2)              # ResidualBlock 64->64
        return x

    hidden_l1 = downsample(hidden_vinit)
    query_l1 = downsample(query_vinit)

    # --- AttentionLayer ------------------------------------------------------
    # q from query (1/sqrt(d) pre-folded into wq); k|v from hidden computed in
    # one lane-dense 128-wide matmul.
    q = mm(query_l1, wq)                           # (N, 64), already scaled
    kv = mm(hidden_l1, wkv)                        # (N, 128)
    k = kv[:, :HIDDEN_DIM]
    v = kv[:, HIDDEN_DIM:]

    # score = q @ k^T : contract on D directly (no explicit transpose of k).
    s = jax.lax.dot_general(
        q.astype(bf16), k.astype(bf16),
        dimension_numbers=(((1,), (1,)), ((), ())),
        preferred_element_type=f32)                # (Nq, Nh)
    m = jnp.max(s, axis=-1, keepdims=True)
    p = jnp.exp(s - m)
    denom = jnp.sum(p, axis=-1, keepdims=True)
    ctx = jnp.dot(p.astype(bf16), v.astype(bf16), preferred_element_type=f32)
    query_atten = ctx * pl.reciprocal(denom, approx=True)     # (N, 64)

    # point_transforms[0]: Linear(32->64)+BN+ReLU  (bias cancelled by BN -> dropped)
    pt0 = conv_bn_relu(query_vinit, pt0_w)
    query_pbottom = query_atten + pt0

    # upsample[0]: Deconv(64->32) + BN + ReLU
    up0 = conv_bn_relu(query_pbottom, up0_w)                   # (N, 32)

    # upsample[1][0]: ResidualBlock on cat([up0, query_vinit], axis=1) with the
    # concat folded into split matmuls: cat @ W == up0 @ W[:32] + vinit @ W[32:]
    def cat_mm(w):                                             # w: (64, 96)
        return (jnp.dot(up0.astype(bf16), w[:32, :], preferred_element_type=f32)
                + jnp.dot(query_vinit.astype(bf16), w[32:, :], preferred_element_type=f32))

    h = jnp.maximum(bn(cat_mm(u1_w1)), 0.0)
    h = conv_bn(h, u1_w2)
    d = bn(cat_mm(u1_wd))
    r = jnp.maximum(h + d, 0.0)                                # (N, 96)
    # upsample[1][1]: ResidualBlock 96->96
    r = residual(r, u2_w1, u2_w2)

    # point_transforms[1]: Linear(64->96)+BN+ReLU, residual add fused in epilogue.
    pt1 = conv_bn_relu(query_pbottom, pt1_w)
    o_ref[...] = r + pt1


# ----------------------------------------------------------------------------
# Parameter construction (deterministic) and weight preparation
# ----------------------------------------------------------------------------
def _w(key, cin, cout):
    return jax.random.normal(key, (cin, cout), jnp.float32) / math.sqrt(cin)


def make_params(in_channels):
    cs = [32, 64, 128, 96, 96]
    key = jax.random.PRNGKey(42)
    keys = iter(jax.random.split(key, 32))
    p = {}
    p["stem_w"] = _w(next(keys), in_channels, cs[0])
    p["ds_conv_w"] = _w(next(keys), cs[0], cs[0])
    p["res1"] = dict(w1=_w(next(keys), cs[0], cs[1]),
                     w2=_w(next(keys), cs[1], cs[1]),
                     wd=_w(next(keys), cs[0], cs[1]))
    p["res2"] = dict(w1=_w(next(keys), cs[1], cs[1]),
                     w2=_w(next(keys), cs[1], cs[1]))
    p["wq"] = _w(next(keys), 64, 64)
    p["wk"] = _w(next(keys), 64, 64)
    p["wv"] = _w(next(keys), 64, 64)
    p["pt0_w"] = _w(next(keys), cs[0], cs[1])
    p["up0_w"] = _w(next(keys), cs[1], cs[0])
    p["ures1"] = dict(w1=_w(next(keys), cs[0] + cs[0], cs[4]),
                      w2=_w(next(keys), cs[4], cs[4]),
                      wd=_w(next(keys), cs[0] + cs[0], cs[4]))
    p["ures2"] = dict(w1=_w(next(keys), cs[4], cs[4]),
                      w2=_w(next(keys), cs[4], cs[4]))
    p["pt1_w"] = _w(next(keys), cs[1], cs[3])
    # NOTE: pt0/pt1 Linear biases are omitted: with training-mode BatchNorm1d
    # (batch statistics, gamma=1, beta=0) right after the Linear, a per-channel
    # bias is exactly cancelled by the mean subtraction -> output is unchanged.
    return p


def prepare_weights(params):
    """Fold 1/sqrt(d) into Wq, fuse Wk|Wv, and cast all weights to bf16 (once)."""
    bf = lambda w: w.astype(jnp.bfloat16)
    p = params
    wq_scaled = bf(p["wq"] * (1.0 / math.sqrt(HIDDEN_DIM)))
    wkv = bf(jnp.concatenate([p["wk"], p["wv"]], axis=1))      # (64, 128)
    return (
        bf(p["stem_w"]), bf(p["ds_conv_w"]),
        bf(p["res1"]["w1"]), bf(p["res1"]["w2"]), bf(p["res1"]["wd"]),
        bf(p["res2"]["w1"]), bf(p["res2"]["w2"]),
        wq_scaled, wkv,
        bf(p["pt0_w"]), bf(p["up0_w"]),
        bf(p["ures1"]["w1"]), bf(p["ures1"]["w2"]), bf(p["ures1"]["wd"]),
        bf(p["ures2"]["w1"]), bf(p["ures2"]["w2"]),
        bf(p["pt1_w"]),
    )


@jax.jit
def attention_block0_forward(weights, hidden_F, query_F):
    """hidden_F, query_F: (N, in_channels) dense point features -> (N, 96)."""
    n = hidden_F.shape[0]
    vmem = pl.BlockSpec(memory_space=pltpu.MemorySpace.VMEM)
    n_in = 2 + len(weights)
    return pl.pallas_call(
        _attention_block0_kernel,
        out_shape=jax.ShapeDtypeStruct((n, 96), jnp.float32),
        in_specs=[vmem] * n_in,
        out_specs=vmem,
    )(hidden_F, query_F, *weights)


# ----------------------------------------------------------------------------
# Driver
# ----------------------------------------------------------------------------
if __name__ == "__main__":
    in_channels = 4
    n_points = 64          # multiple of 16 (bf16 sublane packing)

    key = jax.random.PRNGKey(0)
    k_h, k_q = jax.random.split(key)
    hidden_F = jax.random.normal(k_h, (n_points, in_channels), jnp.float32)
    query_F = jax.random.normal(k_q, (n_points, in_channels), jnp.float32)

    params = make_params(in_channels)
    weights = prepare_weights(params)

    out = attention_block0_forward(weights, hidden_F, query_F)
    out = jax.block_until_ready(out)
    assert out.shape == (n_points, 96) and out.dtype == jnp.float32
    print("KERNEL_OK")
</pallas_src>

<mosaic_0001>
module attributes {stable_mosaic.version = 11 : i64} {
  func.func @_attention_block0_kernel(%arg0: memref<64x4xf32, #tpu.memory_space<vmem>>, %arg1: memref<64x4xf32, #tpu.memory_space<vmem>>, %arg2: memref<4x32xbf16, #tpu.memory_space<vmem>>, %arg3: memref<32x32xbf16, #tpu.memory_space<vmem>>, %arg4: memref<32x64xbf16, #tpu.memory_space<vmem>>, %arg5: memref<64x64xbf16, #tpu.memory_space<vmem>>, %arg6: memref<32x64xbf16, #tpu.memory_space<vmem>>, %arg7: memref<64x64xbf16, #tpu.memory_space<vmem>>, %arg8: memref<64x64xbf16, #tpu.memory_space<vmem>>, %arg9: memref<64x64xbf16, #tpu.memory_space<vmem>>, %arg10: memref<64x128xbf16, #tpu.memory_space<vmem>>, %arg11: memref<32x64xbf16, #tpu.memory_space<vmem>>, %arg12: memref<64x32xbf16, #tpu.memory_space<vmem>>, %arg13: memref<64x96xbf16, #tpu.memory_space<vmem>>, %arg14: memref<96x96xbf16, #tpu.memory_space<vmem>>, %arg15: memref<64x96xbf16, #tpu.memory_space<vmem>>, %arg16: memref<96x96xbf16, #tpu.memory_space<vmem>>, %arg17: memref<96x96xbf16, #tpu.memory_space<vmem>>, %arg18: memref<64x96xbf16, #tpu.memory_space<vmem>>, %arg19: memref<64x96xf32, #tpu.memory_space<vmem>>) attributes {dimension_semantics = [], scalar_prefetch = 0 : i64, scratch_operands = 0 : i64, tpu.core_type = #tpu.core_type<tc>} {
    %c0 = arith.constant 0 : index
    %c0_0 = arith.constant 0 : index
    %0 = vector.load %arg2[%c0, %c0_0] : memref<4x32xbf16, #tpu.memory_space<vmem>>, vector<4x32xbf16>
    %c0_1 = arith.constant 0 : index
    %c0_2 = arith.constant 0 : index
    %1 = vector.load %arg3[%c0_1, %c0_2] : memref<32x32xbf16, #tpu.memory_space<vmem>>, vector<32x32xbf16>
    %c0_3 = arith.constant 0 : index
    %c0_4 = arith.constant 0 : index
    %2 = vector.load %arg4[%c0_3, %c0_4] : memref<32x64xbf16, #tpu.memory_space<vmem>>, vector<32x64xbf16>
    %c0_5 = arith.constant 0 : index
    %c0_6 = arith.constant 0 : index
    %3 = vector.load %arg5[%c0_5, %c0_6] : memref<64x64xbf16, #tpu.memory_space<vmem>>, vector<64x64xbf16>
    %c0_7 = arith.constant 0 : index
    %c0_8 = arith.constant 0 : index
    %4 = vector.load %arg6[%c0_7, %c0_8] : memref<32x64xbf16, #tpu.memory_space<vmem>>, vector<32x64xbf16>
    %c0_9 = arith.constant 0 : index
    %c0_10 = arith.constant 0 : index
    %5 = vector.load %arg7[%c0_9, %c0_10] : memref<64x64xbf16, #tpu.memory_space<vmem>>, vector<64x64xbf16>
    %c0_11 = arith.constant 0 : index
    %c0_12 = arith.constant 0 : index
    %6 = vector.load %arg8[%c0_11, %c0_12] : memref<64x64xbf16, #tpu.memory_space<vmem>>, vector<64x64xbf16>
    %c0_13 = arith.constant 0 : index
    %c0_14 = arith.constant 0 : index
    %7 = vector.load %arg9[%c0_13, %c0_14] : memref<64x64xbf16, #tpu.memory_space<vmem>>, vector<64x64xbf16>
    %c0_15 = arith.constant 0 : index
    %c0_16 = arith.constant 0 : index
    %8 = vector.load %arg10[%c0_15, %c0_16] : memref<64x128xbf16, #tpu.memory_space<vmem>>, vector<64x128xbf16>
    %c0_17 = arith.constant 0 : index
    %c0_18 = arith.constant 0 : index
    %9 = vector.load %arg11[%c0_17, %c0_18] : memref<32x64xbf16, #tpu.memory_space<vmem>>, vector<32x64xbf16>
    %c0_19 = arith.constant 0 : index
    %c0_20 = arith.constant 0 : index
    %10 = vector.load %arg12[%c0_19, %c0_20] : memref<64x32xbf16, #tpu.memory_space<vmem>>, vector<64x32xbf16>
    %c0_21 = arith.constant 0 : index
    %c0_22 = arith.constant 0 : index
    %11 = vector.load %arg13[%c0_21, %c0_22] : memref<64x96xbf16, #tpu.memory_space<vmem>>, vector<64x96xbf16>
    %c0_23 = arith.constant 0 : index
    %c0_24 = arith.constant 0 : index
    %12 = vector.load %arg14[%c0_23, %c0_24] : memref<96x96xbf16, #tpu.memory_space<vmem>>, vector<96x96xbf16>
    %c0_25 = arith.constant 0 : index
    %c0_26 = arith.constant 0 : index
    %13 = vector.load %arg15[%c0_25, %c0_26] : memref<64x96xbf16, #tpu.memory_space<vmem>>, vector<64x96xbf16>
    %c0_27 = arith.constant 0 : index
    %c0_28 = arith.constant 0 : index
    %14 = vector.load %arg16[%c0_27, %c0_28] : memref<96x96xbf16, #tpu.memory_space<vmem>>, vector<96x96xbf16>
    %c0_29 = arith.constant 0 : index
    %c0_30 = arith.constant 0 : index
    %15 = vector.load %arg17[%c0_29, %c0_30] : memref<96x96xbf16, #tpu.memory_space<vmem>>, vector<96x96xbf16>
    %c0_31 = arith.constant 0 : index
    %c0_32 = arith.constant 0 : index
    %16 = vector.load %arg18[%c0_31, %c0_32] : memref<64x96xbf16, #tpu.memory_space<vmem>>, vector<64x96xbf16>
    %c0_33 = arith.constant 0 : index
    %c0_34 = arith.constant 0 : index
    %17 = vector.load %arg0[%c0_33, %c0_34] : memref<64x4xf32, #tpu.memory_space<vmem>>, vector<64x4xf32>
    %c0_35 = arith.constant 0 : index
    %c0_36 = arith.constant 0 : index
    %18 = vector.load %arg1[%c0_35, %c0_36] : memref<64x4xf32, #tpu.memory_space<vmem>>, vector<64x4xf32>
    %19 = arith.truncf %17 : vector<64x4xf32> to vector<64x4xbf16>
    %cst = arith.constant dense<0.000000e+00> : vector<64x32xf32>
    %20 = tpu.matmul %19, %0, %cst {dimension_numbers = #tpu.dot_dimension_numbers<[1], [0], [0], [1], [0, 0, 1, 1], [], []>} : vector<64x4xbf16>, vector<4x32xbf16>, vector<64x32xf32> -> vector<64x32xf32>
    %cst_37 = arith.constant dense<0.000000e+00> : vector<32xf32>
    %21 = vector.multi_reduction <add>, %20, %cst_37 [0] : vector<64x32xf32> to vector<32xf32>
    %22 = vector.shape_cast %21 : vector<32xf32> to vector<1x32xf32>
    %cst_38 = arith.constant 6.400000e+01 : f32
    %23 = vector.broadcast %cst_38 : f32 to vector<1x32xf32>
    %24 = arith.divf %22, %23 : vector<1x32xf32>
    %25 = vector.broadcast %24 : vector<1x32xf32> to vector<64x32xf32>
    %26 = arith.subf %20, %25 : vector<64x32xf32>
    %27 = arith.mulf %26, %26 : vector<64x32xf32>
    %cst_39 = arith.constant dense<0.000000e+00> : vector<32xf32>
    %28 = vector.multi_reduction <add>, %27, %cst_39 [0] : vector<64x32xf32> to vector<32xf32>
    %29 = vector.shape_cast %28 : vector<32xf32> to vector<1x32xf32>
    %cst_40 = arith.constant 6.400000e+01 : f32
    %30 = vector.broadcast %cst_40 : f32 to vector<1x32xf32>
    %31 = arith.divf %29, %30 : vector<1x32xf32>
    %32 = vector.broadcast %24 : vector<1x32xf32> to vector<64x32xf32>
    %33 = arith.subf %20, %32 : vector<64x32xf32>
    %cst_41 = arith.constant 9.99999974E-6 : f32
    %34 = vector.broadcast %cst_41 : f32 to vector<1x32xf32>
    %35 = arith.addf %31, %34 : vector<1x32xf32>
    %36 = math.rsqrt %35 : vector<1x32xf32>
    %37 = vector.broadcast %36 : vector<1x32xf32> to vector<64x32xf32>
    %38 = arith.mulf %33, %37 : vector<64x32xf32>
    %cst_42 = arith.constant 0.000000e+00 : f32
    %39 = vector.broadcast %cst_42 : f32 to vector<64x32xf32>
    %40 = arith.maximumf %38, %39 : vector<64x32xf32>
    %41 = arith.truncf %18 : vector<64x4xf32> to vector<64x4xbf16>
    %cst_43 = arith.constant dense<0.000000e+00> : vector<64x32xf32>
    %42 = tpu.matmul %41, %0, %cst_43 {dimension_numbers = #tpu.dot_dimension_numbers<[1], [0], [0], [1], [0, 0, 1, 1], [], []>} : vector<64x4xbf16>, vector<4x32xbf16>, vector<64x32xf32> -> vector<64x32xf32>
    %cst_44 = arith.constant dense<0.000000e+00> : vector<32xf32>
    %43 = vector.multi_reduction <add>, %42, %cst_44 [0] : vector<64x32xf32> to vector<32xf32>
    %44 = vector.shape_cast %43 : vector<32xf32> to vector<1x32xf32>
    %cst_45 = arith.constant 6.400000e+01 : f32
    %45 = vector.broadcast %cst_45 : f32 to vector<1x32xf32>
    %46 = arith.divf %44, %45 : vector<1x32xf32>
    %47 = vector.broadcast %46 : vector<1x32xf32> to vector<64x32xf32>
    %48 = arith.subf %42, %47 : vector<64x32xf32>
    %49 = arith.mulf %48, %48 : vector<64x32xf32>
    %cst_46 = arith.constant dense<0.000000e+00> : vector<32xf32>
    %50 = vector.multi_reduction <add>, %49, %cst_46 [0] : vector<64x32xf32> to vector<32xf32>
    %51 = vector.shape_cast %50 : vector<32xf32> to vector<1x32xf32>
    %cst_47 = arith.constant 6.400000e+01 : f32
    %52 = vector.broadcast %cst_47 : f32 to vector<1x32xf32>
    %53 = arith.divf %51, %52 : vector<1x32xf32>
    %54 = vector.broadcast %46 : vector<1x32xf32> to vector<64x32xf32>
    %55 = arith.subf %42, %54 : vector<64x32xf32>
    %cst_48 = arith.constant 9.99999974E-6 : f32
    %56 = vector.broadcast %cst_48 : f32 to vector<1x32xf32>
    %57 = arith.addf %53, %56 : vector<1x32xf32>
    %58 = math.rsqrt %57 : vector<1x32xf32>
    %59 = vector.broadcast %58 : vector<1x32xf32> to vector<64x32xf32>
    %60 = arith.mulf %55, %59 : vector<64x32xf32>
    %cst_49 = arith.constant 0.000000e+00 : f32
    %61 = vector.broadcast %cst_49 : f32 to vector<64x32xf32>
    %62 = arith.maximumf %60, %61 : vector<64x32xf32>
    %63 = arith.truncf %40 : vector<64x32xf32> to vector<64x32xbf16>
    %cst_50 = arith.constant dense<0.000000e+00> : vector<64x32xf32>
    %64 = tpu.matmul %63, %1, %cst_50 {dimension_numbers = #tpu.dot_dimension_numbers<[1], [0], [0], [1], [0, 0, 1, 1], [], []>} : vector<64x32xbf16>, vector<32x32xbf16>, vector<64x32xf32> -> vector<64x32xf32>
    %cst_51 = arith.constant dense<0.000000e+00> : vector<32xf32>
    %65 = vector.multi_reduction <add>, %64, %cst_51 [0] : vector<64x32xf32> to vector<32xf32>
    %66 = vector.shape_cast %65 : vector<32xf32> to vector<1x32xf32>
    %cst_52 = arith.constant 6.400000e+01 : f32
    %67 = vector.broadcast %cst_52 : f32 to vector<1x32xf32>
    %68 = arith.divf %66, %67 : vector<1x32xf32>
    %69 = vector.broadcast %68 : vector<1x32xf32> to vector<64x32xf32>
    %70 = arith.subf %64, %69 : vector<64x32xf32>
    %71 = arith.mulf %70, %70 : vector<64x32xf32>
    %cst_53 = arith.constant dense<0.000000e+00> : vector<32xf32>
    %72 = vector.multi_reduction <add>, %71, %cst_53 [0] : vector<64x32xf32> to vector<32xf32>
    %73 = vector.shape_cast %72 : vector<32xf32> to vector<1x32xf32>
    %cst_54 = arith.constant 6.400000e+01 : f32
    %74 = vector.broadcast %cst_54 : f32 to vector<1x32xf32>
    %75 = arith.divf %73, %74 : vector<1x32xf32>
    %76 = vector.broadcast %68 : vector<1x32xf32> to vector<64x32xf32>
    %77 = arith.subf %64, %76 : vector<64x32xf32>
    %cst_55 = arith.constant 9.99999974E-6 : f32
    %78 = vector.broadcast %cst_55 : f32 to vector<1x32xf32>
    %79 = arith.addf %75, %78 : vector<1x32xf32>
    %80 = math.rsqrt %79 : vector<1x32xf32>
    %81 = vector.broadcast %80 : vector<1x32xf32> to vector<64x32xf32>
    %82 = arith.mulf %77, %81 : vector<64x32xf32>
    %cst_56 = arith.constant 0.000000e+00 : f32
    %83 = vector.broadcast %cst_56 : f32 to vector<64x32xf32>
    %84 = arith.maximumf %82, %83 : vector<64x32xf32>
    %85 = arith.truncf %84 : vector<64x32xf32> to vector<64x32xbf16>
    %cst_57 = arith.constant dense<0.000000e+00> : vector<64x64xf32>
    %86 = tpu.matmul %85, %2, %cst_57 {dimension_numbers = #tpu.dot_dimension_numbers<[1], [0], [0], [1], [0, 0, 1, 1], [], []>} : vector<64x32xbf16>, vector<32x64xbf16>, vector<64x64xf32> -> vector<64x64xf32>
    %cst_58 = arith.constant dense<0.000000e+00> : vector<64xf32>
    %87 = vector.multi_reduction <add>, %86, %cst_58 [0] : vector<64x64xf32> to vector<64xf32>
    %88 = vector.shape_cast %87 : vector<64xf32> to vector<1x64xf32>
    %cst_59 = arith.constant 6.400000e+01 : f32
    %89 = vector.broadcast %cst_59 : f32 to vector<1x64xf32>
    %90 = arith.divf %88, %89 : vector<1x64xf32>
    %91 = vector.broadcast %90 : vector<1x64xf32> to vector<64x64xf32>
    %92 = arith.subf %86, %91 : vector<64x64xf32>
    %93 = arith.mulf %92, %92 : vector<64x64xf32>
    %cst_60 = arith.constant dense<0.000000e+00> : vector<64xf32>
    %94 = vector.multi_reduction <add>, %93, %cst_60 [0] : vector<64x64xf32> to vector<64xf32>
    %95 = vector.shape_cast %94 : vector<64xf32> to vector<1x64xf32>
    %cst_61 = arith.constant 6.400000e+01 : f32
    %96 = vector.broadcast %cst_61 : f32 to vector<1x64xf32>
    %97 = arith.divf %95, %96 : vector<1x64xf32>
    %98 = vector.broadcast %90 : vector<1x64xf32> to vector<64x64xf32>
    %99 = arith.subf %86, %98 : vector<64x64xf32>
    %cst_62 = arith.constant 9.99999974E-6 : f32
    %100 = vector.broadcast %cst_62 : f32 to vector<1x64xf32>
    %101 = arith.addf %97, %100 : vector<1x64xf32>
    %102 = math.rsqrt %101 : vector<1x64xf32>
    %103 = vector.broadcast %102 : vector<1x64xf32> to vector<64x64xf32>
    %104 = arith.mulf %99, %103 : vector<64x64xf32>
    %cst_63 = arith.constant 0.000000e+00 : f32
    %105 = vector.broadcast %cst_63 : f32 to vector<64x64xf32>
    %106 = arith.maximumf %104, %105 : vector<64x64xf32>
    %107 = arith.truncf %106 : vector<64x64xf32> to vector<64x64xbf16>
    %cst_64 = arith.constant dense<0.000000e+00> : vector<64x64xf32>
    %108 = tpu.matmul %107, %3, %cst_64 {dimension_numbers = #tpu.dot_dimension_numbers<[1], [0], [0], [1], [0, 0, 1, 1], [], []>} : vector<64x64xbf16>, vector<64x64xbf16>, vector<64x64xf32> -> vector<64x64xf32>
    %cst_65 = arith.constant dense<0.000000e+00> : vector<64xf32>
    %109 = vector.multi_reduction <add>, %108, %cst_65 [0] : vector<64x64xf32> to vector<64xf32>
    %110 = vector.shape_cast %109 : vector<64xf32> to vector<1x64xf32>
    %cst_66 = arith.constant 6.400000e+01 : f32
    %111 = vector.broadcast %cst_66 : f32 to vector<1x64xf32>
    %112 = arith.divf %110, %111 : vector<1x64xf32>
    %113 = vector.broadcast %112 : vector<1x64xf32> to vector<64x64xf32>
    %114 = arith.subf %108, %113 : vector<64x64xf32>
    %115 = arith.mulf %114, %114 : vector<64x64xf32>
    %cst_67 = arith.constant dense<0.000000e+00> : vector<64xf32>
    %116 = vector.multi_reduction <add>, %115, %cst_67 [0] : vector<64x64xf32> to vector<64xf32>
    %117 = vector.shape_cast %116 : vector<64xf32> to vector<1x64xf32>
    %cst_68 = arith.constant 6.400000e+01 : f32
    %118 = vector.broadcast %cst_68 : f32 to vector<1x64xf32>
    %119 = arith.divf %117, %118 : vector<1x64xf32>
    %120 = vector.broadcast %112 : vector<1x64xf32> to vector<64x64xf32>
    %121 = arith.subf %108, %120 : vector<64x64xf32>
    %cst_69 = arith.constant 9.99999974E-6 : f32
    %122 = vector.broadcast %cst_69 : f32 to vector<1x64xf32>
    %123 = arith.addf %119, %122 : vector<1x64xf32>
    %124 = math.rsqrt %123 : vector<1x64xf32>
    %125 = vector.broadcast %124 : vector<1x64xf32> to vector<64x64xf32>
    %126 = arith.mulf %121, %125 : vector<64x64xf32>
    %127 = arith.truncf %84 : vector<64x32xf32> to vector<64x32xbf16>
    %cst_70 = arith.constant dense<0.000000e+00> : vector<64x64xf32>
    %128 = tpu.matmul %127, %4, %cst_70 {dimension_numbers = #tpu.dot_dimension_numbers<[1], [0], [0], [1], [0, 0, 1, 1], [], []>} : vector<64x32xbf16>, vector<32x64xbf16>, vector<64x64xf32> -> vector<64x64xf32>
    %cst_71 = arith.constant dense<0.000000e+00> : vector<64xf32>
    %129 = vector.multi_reduction <add>, %128, %cst_71 [0] : vector<64x64xf32> to vector<64xf32>
    %130 = vector.shape_cast %129 : vector<64xf32> to vector<1x64xf32>
    %cst_72 = arith.constant 6.400000e+01 : f32
    %131 = vector.broadcast %cst_72 : f32 to vector<1x64xf32>
    %132 = arith.divf %130, %131 : vector<1x64xf32>
    %133 = vector.broadcast %132 : vector<1x64xf32> to vector<64x64xf32>
    %134 = arith.subf %128, %133 : vector<64x64xf32>
    %135 = arith.mulf %134, %134 : vector<64x64xf32>
    %cst_73 = arith.constant dense<0.000000e+00> : vector<64xf32>
    %136 = vector.multi_reduction <add>, %135, %cst_73 [0] : vector<64x64xf32> to vector<64xf32>
    %137 = vector.shape_cast %136 : vector<64xf32> to vector<1x64xf32>
    %cst_74 = arith.constant 6.400000e+01 : f32
    %138 = vector.broadcast %cst_74 : f32 to vector<1x64xf32>
    %139 = arith.divf %137, %138 : vector<1x64xf32>
    %140 = vector.broadcast %132 : vector<1x64xf32> to vector<64x64xf32>
    %141 = arith.subf %128, %140 : vector<64x64xf32>
    %cst_75 = arith.constant 9.99999974E-6 : f32
    %142 = vector.broadcast %cst_75 : f32 to vector<1x64xf32>
    %143 = arith.addf %139, %142 : vector<1x64xf32>
    %144 = math.rsqrt %143 : vector<1x64xf32>
    %145 = vector.broadcast %144 : vector<1x64xf32> to vector<64x64xf32>
    %146 = arith.mulf %141, %145 : vector<64x64xf32>
    %147 = arith.addf %126, %146 : vector<64x64xf32>
    %cst_76 = arith.constant 0.000000e+00 : f32
    %148 = vector.broadcast %cst_76 : f32 to vector<64x64xf32>
    %149 = arith.maximumf %147, %148 : vector<64x64xf32>
    %150 = arith.truncf %149 : vector<64x64xf32> to vector<64x64xbf16>
    %cst_77 = arith.constant dense<0.000000e+00> : vector<64x64xf32>
    %151 = tpu.matmul %150, %5, %cst_77 {dimension_numbers = #tpu.dot_dimension_numbers<[1], [0], [0], [1], [0, 0, 1, 1], [], []>} : vector<64x64xbf16>, vector<64x64xbf16>, vector<64x64xf32> -> vector<64x64xf32>
    %cst_78 = arith.constant dense<0.000000e+00> : vector<64xf32>
    %152 = vector.multi_reduction <add>, %151, %cst_78 [0] : vector<64x64xf32> to vector<64xf32>
    %153 = vector.shape_cast %152 : vector<64xf32> to vector<1x64xf32>
    %cst_79 = arith.constant 6.400000e+01 : f32
    %154 = vector.broadcast %cst_79 : f32 to vector<1x64xf32>
    %155 = arith.divf %153, %154 : vector<1x64xf32>
    %156 = vector.broadcast %155 : vector<1x64xf32> to vector<64x64xf32>
    %157 = arith.subf %151, %156 : vector<64x64xf32>
    %158 = arith.mulf %157, %157 : vector<64x64xf32>
    %cst_80 = arith.constant dense<0.000000e+00> : vector<64xf32>
    %159 = vector.multi_reduction <add>, %158, %cst_80 [0] : vector<64x64xf32> to vector<64xf32>
    %160 = vector.shape_cast %159 : vector<64xf32> to vector<1x64xf32>
    %cst_81 = arith.constant 6.400000e+01 : f32
    %161 = vector.broadcast %cst_81 : f32 to vector<1x64xf32>
    %162 = arith.divf %160, %161 : vector<1x64xf32>
    %163 = vector.broadcast %155 : vector<1x64xf32> to vector<64x64xf32>
    %164 = arith.subf %151, %163 : vector<64x64xf32>
    %cst_82 = arith.constant 9.99999974E-6 : f32
    %165 = vector.broadcast %cst_82 : f32 to vector<1x64xf32>
    %166 = arith.addf %162, %165 : vector<1x64xf32>
    %167 = math.rsqrt %166 : vector<1x64xf32>
    %168 = vector.broadcast %167 : vector<1x64xf32> to vector<64x64xf32>
    %169 = arith.mulf %164, %168 : vector<64x64xf32>
    %cst_83 = arith.constant 0.000000e+00 : f32
    %170 = vector.broadcast %cst_83 : f32 to vector<64x64xf32>
    %171 = arith.maximumf %169, %170 : vector<64x64xf32>
    %172 = arith.truncf %171 : vector<64x64xf32> to vector<64x64xbf16>
    %cst_84 = arith.constant dense<0.000000e+00> : vector<64x64xf32>
    %173 = tpu.matmul %172, %6, %cst_84 {dimension_numbers = #tpu.dot_dimension_numbers<[1], [0], [0], [1], [0, 0, 1, 1], [], []>} : vector<64x64xbf16>, vector<64x64xbf16>, vector<64x64xf32> -> vector<64x64xf32>
    %cst_85 = arith.constant dense<0.000000e+00> : vector<64xf32>
    %174 = vector.multi_reduction <add>, %173, %cst_85 [0] : vector<64x64xf32> to vector<64xf32>
    %175 = vector.shape_cast %174 : vector<64xf32> to vector<1x64xf32>
    %cst_86 = arith.constant 6.400000e+01 : f32
    %176 = vector.broadcast %cst_86 : f32 to vector<1x64xf32>
    %177 = arith.divf %175, %176 : vector<1x64xf32>
    %178 = vector.broadcast %177 : vector<1x64xf32> to vector<64x64xf32>
    %179 = arith.subf %173, %178 : vector<64x64xf32>
    %180 = arith.mulf %179, %179 : vector<64x64xf32>
    %cst_87 = arith.constant dense<0.000000e+00> : vector<64xf32>
    %181 = vector.multi_reduction <add>, %180, %cst_87 [0] : vector<64x64xf32> to vector<64xf32>
    %182 = vector.shape_cast %181 : vector<64xf32> to vector<1x64xf32>
    %cst_88 = arith.constant 6.400000e+01 : f32
    %183 = vector.broadcast %cst_88 : f32 to vector<1x64xf32>
    %184 = arith.divf %182, %183 : vector<1x64xf32>
    %185 = vector.broadcast %177 : vector<1x64xf32> to vector<64x64xf32>
    %186 = arith.subf %173, %185 : vector<64x64xf32>
    %cst_89 = arith.constant 9.99999974E-6 : f32
    %187 = vector.broadcast %cst_89 : f32 to vector<1x64xf32>
    %188 = arith.addf %184, %187 : vector<1x64xf32>
    %189 = math.rsqrt %188 : vector<1x64xf32>
    %190 = vector.broadcast %189 : vector<1x64xf32> to vector<64x64xf32>
    %191 = arith.mulf %186, %190 : vector<64x64xf32>
    %192 = arith.addf %191, %149 : vector<64x64xf32>
    %cst_90 = arith.constant 0.000000e+00 : f32
    %193 = vector.broadcast %cst_90 : f32 to vector<64x64xf32>
    %194 = arith.maximumf %192, %193 : vector<64x64xf32>
    %195 = arith.truncf %62 : vector<64x32xf32> to vector<64x32xbf16>
    %cst_91 = arith.constant dense<0.000000e+00> : vector<64x32xf32>
    %196 = tpu.matmul %195, %1, %cst_91 {dimension_numbers = #tpu.dot_dimension_numbers<[1], [0], [0], [1], [0, 0, 1, 1], [], []>} : vector<64x32xbf16>, vector<32x32xbf16>, vector<64x32xf32> -> vector<64x32xf32>
    %cst_92 = arith.constant dense<0.000000e+00> : vector<32xf32>
    %197 = vector.multi_reduction <add>, %196, %cst_92 [0] : vector<64x32xf32> to vector<32xf32>
    %198 = vector.shape_cast %197 : vector<32xf32> to vector<1x32xf32>
    %cst_93 = arith.constant 6.400000e+01 : f32
    %199 = vector.broadcast %cst_93 : f32 to vector<1x32xf32>
    %200 = arith.divf %198, %199 : vector<1x32xf32>
    %201 = vector.broadcast %200 : vector<1x32xf32> to vector<64x32xf32>
    %202 = arith.subf %196, %201 : vector<64x32xf32>
    %203 = arith.mulf %202, %202 : vector<64x32xf32>
    %cst_94 = arith.constant dense<0.000000e+00> : vector<32xf32>
    %204 = vector.multi_reduction <add>, %203, %cst_94 [0] : vector<64x32xf32> to vector<32xf32>
    %205 = vector.shape_cast %204 : vector<32xf32> to vector<1x32xf32>
    %cst_95 = arith.constant 6.400000e+01 : f32
    %206 = vector.broadcast %cst_95 : f32 to vector<1x32xf32>
    %207 = arith.divf %205, %206 : vector<1x32xf32>
    %208 = vector.broadcast %200 : vector<1x32xf32> to vector<64x32xf32>
    %209 = arith.subf %196, %208 : vector<64x32xf32>
    %cst_96 = arith.constant 9.99999974E-6 : f32
    %210 = vector.broadcast %cst_96 : f32 to vector<1x32xf32>
    %211 = arith.addf %207, %210 : vector<1x32xf32>
    %212 = math.rsqrt %211 : vector<1x32xf32>
    %213 = vector.broadcast %212 : vector<1x32xf32> to vector<64x32xf32>
    %214 = arith.mulf %209, %213 : vector<64x32xf32>
    %cst_97 = arith.constant 0.000000e+00 : f32
    %215 = vector.broadcast %cst_97 : f32 to vector<64x32xf32>
    %216 = arith.maximumf %214, %215 : vector<64x32xf32>
    %217 = arith.truncf %216 : vector<64x32xf32> to vector<64x32xbf16>
    %cst_98 = arith.constant dense<0.000000e+00> : vector<64x64xf32>
    %218 = tpu.matmul %217, %2, %cst_98 {dimension_numbers = #tpu.dot_dimension_numbers<[1], [0], [0], [1], [0, 0, 1, 1], [], []>} : vector<64x32xbf16>, vector<32x64xbf16>, vector<64x64xf32> -> vector<64x64xf32>
    %cst_99 = arith.constant dense<0.000000e+00> : vector<64xf32>
    %219 = vector.multi_reduction <add>, %218, %cst_99 [0] : vector<64x64xf32> to vector<64xf32>
    %220 = vector.shape_cast %219 : vector<64xf32> to vector<1x64xf32>
    %cst_100 = arith.constant 6.400000e+01 : f32
    %221 = vector.broadcast %cst_100 : f32 to vector<1x64xf32>
    %222 = arith.divf %220, %221 : vector<1x64xf32>
    %223 = vector.broadcast %222 : vector<1x64xf32> to vector<64x64xf32>
    %224 = arith.subf %218, %223 : vector<64x64xf32>
    %225 = arith.mulf %224, %224 : vector<64x64xf32>
    %cst_101 = arith.constant dense<0.000000e+00> : vector<64xf32>
    %226 = vector.multi_reduction <add>, %225, %cst_101 [0] : vector<64x64xf32> to vector<64xf32>
    %227 = vector.shape_cast %226 : vector<64xf32> to vector<1x64xf32>
    %cst_102 = arith.constant 6.400000e+01 : f32
    %228 = vector.broadcast %cst_102 : f32 to vector<1x64xf32>
    %229 = arith.divf %227, %228 : vector<1x64xf32>
    %230 = vector.broadcast %222 : vector<1x64xf32> to vector<64x64xf32>
    %231 = arith.subf %218, %230 : vector<64x64xf32>
    %cst_103 = arith.constant 9.99999974E-6 : f32
    %232 = vector.broadcast %cst_103 : f32 to vector<1x64xf32>
    %233 = arith.addf %229, %232 : vector<1x64xf32>
    %234 = math.rsqrt %233 : vector<1x64xf32>
    %235 = vector.broadcast %234 : vector<1x64xf32> to vector<64x64xf32>
    %236 = arith.mulf %231, %235 : vector<64x64xf32>
    %cst_104 = arith.constant 0.000000e+00 : f32
    %237 = vector.broadcast %cst_104 : f32 to vector<64x64xf32>
    %238 = arith.maximumf %236, %237 : vector<64x64xf32>
    %239 = arith.truncf %238 : vector<64x64xf32> to vector<64x64xbf16>
    %cst_105 = arith.constant dense<0.000000e+00> : vector<64x64xf32>
    %240 = tpu.matmul %239, %3, %cst_105 {dimension_numbers = #tpu.dot_dimension_numbers<[1], [0], [0], [1], [0, 0, 1, 1], [], []>} : vector<64x64xbf16>, vector<64x64xbf16>, vector<64x64xf32> -> vector<64x64xf32>
    %cst_106 = arith.constant dense<0.000000e+00> : vector<64xf32>
    %241 = vector.multi_reduction <add>, %240, %cst_106 [0] : vector<64x64xf32> to vector<64xf32>
    %242 = vector.shape_cast %241 : vector<64xf32> to vector<1x64xf32>
    %cst_107 = arith.constant 6.400000e+01 : f32
    %243 = vector.broadcast %cst_107 : f32 to vector<1x64xf32>
    %244 = arith.divf %242, %243 : vector<1x64xf32>
    %245 = vector.broadcast %244 : vector<1x64xf32> to vector<64x64xf32>
    %246 = arith.subf %240, %245 : vector<64x64xf32>
    %247 = arith.mulf %246, %246 : vector<64x64xf32>
    %cst_108 = arith.constant dense<0.000000e+00> : vector<64xf32>
    %248 = vector.multi_reduction <add>, %247, %cst_108 [0] : vector<64x64xf32> to vector<64xf32>
    %249 = vector.shape_cast %248 : vector<64xf32> to vector<1x64xf32>
    %cst_109 = arith.constant 6.400000e+01 : f32
    %250 = vector.broadcast %cst_109 : f32 to vector<1x64xf32>
    %251 = arith.divf %249, %250 : vector<1x64xf32>
    %252 = vector.broadcast %244 : vector<1x64xf32> to vector<64x64xf32>
    %253 = arith.subf %240, %252 : vector<64x64xf32>
    %cst_110 = arith.constant 9.99999974E-6 : f32
    %254 = vector.broadcast %cst_110 : f32 to vector<1x64xf32>
    %255 = arith.addf %251, %254 : vector<1x64xf32>
    %256 = math.rsqrt %255 : vector<1x64xf32>
    %257 = vector.broadcast %256 : vector<1x64xf32> to vector<64x64xf32>
    %258 = arith.mulf %253, %257 : vector<64x64xf32>
    %259 = arith.truncf %216 : vector<64x32xf32> to vector<64x32xbf16>
    %cst_111 = arith.constant dense<0.000000e+00> : vector<64x64xf32>
    %260 = tpu.matmul %259, %4, %cst_111 {dimension_numbers = #tpu.dot_dimension_numbers<[1], [0], [0], [1], [0, 0, 1, 1], [], []>} : vector<64x32xbf16>, vector<32x64xbf16>, vector<64x64xf32> -> vector<64x64xf32>
    %cst_112 = arith.constant dense<0.000000e+00> : vector<64xf32>
    %261 = vector.multi_reduction <add>, %260, %cst_112 [0] : vector<64x64xf32> to vector<64xf32>
    %262 = vector.shape_cast %261 : vector<64xf32> to vector<1x64xf32>
    %cst_113 = arith.constant 6.400000e+01 : f32
    %263 = vector.broadcast %cst_113 : f32 to vector<1x64xf32>
    %264 = arith.divf %262, %263 : vector<1x64xf32>
    %265 = vector.broadcast %264 : vector<1x64xf32> to vector<64x64xf32>
    %266 = arith.subf %260, %265 : vector<64x64xf32>
    %267 = arith.mulf %266, %266 : vector<64x64xf32>
    %cst_114 = arith.constant dense<0.000000e+00> : vector<64xf32>
    %268 = vector.multi_reduction <add>, %267, %cst_114 [0] : vector<64x64xf32> to vector<64xf32>
    %269 = vector.shape_cast %268 : vector<64xf32> to vector<1x64xf32>
    %cst_115 = arith.constant 6.400000e+01 : f32
    %270 = vector.broadcast %cst_115 : f32 to vector<1x64xf32>
    %271 = arith.divf %269, %270 : vector<1x64xf32>
    %272 = vector.broadcast %264 : vector<1x64xf32> to vector<64x64xf32>
    %273 = arith.subf %260, %272 : vector<64x64xf32>
    %cst_116 = arith.constant 9.99999974E-6 : f32
    %274 = vector.broadcast %cst_116 : f32 to vector<1x64xf32>
    %275 = arith.addf %271, %274 : vector<1x64xf32>
    %276 = math.rsqrt %275 : vector<1x64xf32>
    %277 = vector.broadcast %276 : vector<1x64xf32> to vector<64x64xf32>
    %278 = arith.mulf %273, %277 : vector<64x64xf32>
    %279 = arith.addf %258, %278 : vector<64x64xf32>
    %cst_117 = arith.constant 0.000000e+00 : f32
    %280 = vector.broadcast %cst_117 : f32 to vector<64x64xf32>
    %281 = arith.maximumf %279, %280 : vector<64x64xf32>
    %282 = arith.truncf %281 : vector<64x64xf32> to vector<64x64xbf16>
    %cst_118 = arith.constant dense<0.000000e+00> : vector<64x64xf32>
    %283 = tpu.matmul %282, %5, %cst_118 {dimension_numbers = #tpu.dot_dimension_numbers<[1], [0], [0], [1], [0, 0, 1, 1], [], []>} : vector<64x64xbf16>, vector<64x64xbf16>, vector<64x64xf32> -> vector<64x64xf32>
    %cst_119 = arith.constant dense<0.000000e+00> : vector<64xf32>
    %284 = vector.multi_reduction <add>, %283, %cst_119 [0] : vector<64x64xf32> to vector<64xf32>
    %285 = vector.shape_cast %284 : vector<64xf32> to vector<1x64xf32>
    %cst_120 = arith.constant 6.400000e+01 : f32
    %286 = vector.broadcast %cst_120 : f32 to vector<1x64xf32>
    %287 = arith.divf %285, %286 : vector<1x64xf32>
    %288 = vector.broadcast %287 : vector<1x64xf32> to vector<64x64xf32>
    %289 = arith.subf %283, %288 : vector<64x64xf32>
    %290 = arith.mulf %289, %289 : vector<64x64xf32>
    %cst_121 = arith.constant dense<0.000000e+00> : vector<64xf32>
    %291 = vector.multi_reduction <add>, %290, %cst_121 [0] : vector<64x64xf32> to vector<64xf32>
    %292 = vector.shape_cast %291 : vector<64xf32> to vector<1x64xf32>
    %cst_122 = arith.constant 6.400000e+01 : f32
    %293 = vector.broadcast %cst_122 : f32 to vector<1x64xf32>
    %294 = arith.divf %292, %293 : vector<1x64xf32>
    %295 = vector.broadcast %287 : vector<1x64xf32> to vector<64x64xf32>
    %296 = arith.subf %283, %295 : vector<64x64xf32>
    %cst_123 = arith.constant 9.99999974E-6 : f32
    %297 = vector.broadcast %cst_123 : f32 to vector<1x64xf32>
    %298 = arith.addf %294, %297 : vector<1x64xf32>
    %299 = math.rsqrt %298 : vector<1x64xf32>
    %300 = vector.broadcast %299 : vector<1x64xf32> to vector<64x64xf32>
    %301 = arith.mulf %296, %300 : vector<64x64xf32>
    %cst_124 = arith.constant 0.000000e+00 : f32
    %302 = vector.broadcast %cst_124 : f32 to vector<64x64xf32>
    %303 = arith.maximumf %301, %302 : vector<64x64xf32>
    %304 = arith.truncf %303 : vector<64x64xf32> to vector<64x64xbf16>
    %cst_125 = arith.constant dense<0.000000e+00> : vector<64x64xf32>
    %305 = tpu.matmul %304, %6, %cst_125 {dimension_numbers = #tpu.dot_dimension_numbers<[1], [0], [0], [1], [0, 0, 1, 1], [], []>} : vector<64x64xbf16>, vector<64x64xbf16>, vector<64x64xf32> -> vector<64x64xf32>
    %cst_126 = arith.constant dense<0.000000e+00> : vector<64xf32>
    %306 = vector.multi_reduction <add>, %305, %cst_126 [0] : vector<64x64xf32> to vector<64xf32>
    %307 = vector.shape_cast %306 : vector<64xf32> to vector<1x64xf32>
    %cst_127 = arith.constant 6.400000e+01 : f32
    %308 = vector.broadcast %cst_127 : f32 to vector<1x64xf32>
    %309 = arith.divf %307, %308 : vector<1x64xf32>
    %310 = vector.broadcast %309 : vector<1x64xf32> to vector<64x64xf32>
    %311 = arith.subf %305, %310 : vector<64x64xf32>
    %312 = arith.mulf %311, %311 : vector<64x64xf32>
    %cst_128 = arith.constant dense<0.000000e+00> : vector<64xf32>
    %313 = vector.multi_reduction <add>, %312, %cst_128 [0] : vector<64x64xf32> to vector<64xf32>
    %314 = vector.shape_cast %313 : vector<64xf32> to vector<1x64xf32>
    %cst_129 = arith.constant 6.400000e+01 : f32
    %315 = vector.broadcast %cst_129 : f32 to vector<1x64xf32>
    %316 = arith.divf %314, %315 : vector<1x64xf32>
    %317 = vector.broadcast %309 : vector<1x64xf32> to vector<64x64xf32>
    %318 = arith.subf %305, %317 : vector<64x64xf32>
    %cst_130 = arith.constant 9.99999974E-6 : f32
    %319 = vector.broadcast %cst_130 : f32 to vector<1x64xf32>
    %320 = arith.addf %316, %319 : vector<1x64xf32>
    %321 = math.rsqrt %320 : vector<1x64xf32>
    %322 = vector.broadcast %321 : vector<1x64xf32> to vector<64x64xf32>
    %323 = arith.mulf %318, %322 : vector<64x64xf32>
    %324 = arith.addf %323, %281 : vector<64x64xf32>
    %cst_131 = arith.constant 0.000000e+00 : f32
    %325 = vector.broadcast %cst_131 : f32 to vector<64x64xf32>
    %326 = arith.maximumf %324, %325 : vector<64x64xf32>
    %327 = arith.truncf %326 : vector<64x64xf32> to vector<64x64xbf16>
    %cst_132 = arith.constant dense<0.000000e+00> : vector<64x64xf32>
    %328 = tpu.matmul %327, %7, %cst_132 {dimension_numbers = #tpu.dot_dimension_numbers<[1], [0], [0], [1], [0, 0, 1, 1], [], []>} : vector<64x64xbf16>, vector<64x64xbf16>, vector<64x64xf32> -> vector<64x64xf32>
    %329 = arith.truncf %194 : vector<64x64xf32> to vector<64x64xbf16>
    %cst_133 = arith.constant dense<0.000000e+00> : vector<64x128xf32>
    %330 = tpu.matmul %329, %8, %cst_133 {dimension_numbers = #tpu.dot_dimension_numbers<[1], [0], [0], [1], [0, 0, 1, 1], [], []>} : vector<64x64xbf16>, vector<64x128xbf16>, vector<64x128xf32> -> vector<64x128xf32>
    %331 = vector.extract_strided_slice %330 {offsets = [0, 0], sizes = [64, 64], strides = [1, 1]} : vector<64x128xf32> to vector<64x64xf32>
    %332 = vector.extract_strided_slice %330 {offsets = [0, 64], sizes = [64, 64], strides = [1, 1]} : vector<64x128xf32> to vector<64x64xf32>
    %333 = arith.truncf %328 : vector<64x64xf32> to vector<64x64xbf16>
    %334 = arith.truncf %331 : vector<64x64xf32> to vector<64x64xbf16>
    %cst_134 = arith.constant dense<0.000000e+00> : vector<64x64xf32>
    %335 = tpu.matmul %333, %334, %cst_134 {dimension_numbers = #tpu.dot_dimension_numbers<[1], [1], [0], [0], [0, 0, 1, 0], [], []>} : vector<64x64xbf16>, vector<64x64xbf16>, vector<64x64xf32> -> vector<64x64xf32>
    %cst_135 = arith.constant dense<0xFF800000> : vector<64xf32>
    %336 = vector.multi_reduction <maximumf>, %335, %cst_135 [1] : vector<64x64xf32> to vector<64xf32>
    %337 = vector.shape_cast %336 : vector<64xf32> to vector<64x1xf32>
    %338 = vector.broadcast %337 : vector<64x1xf32> to vector<64x64xf32>
    %339 = arith.subf %335, %338 : vector<64x64xf32>
    %340 = math.exp %339 : vector<64x64xf32>
    %cst_136 = arith.constant dense<0.000000e+00> : vector<64xf32>
    %341 = vector.multi_reduction <add>, %340, %cst_136 [1] : vector<64x64xf32> to vector<64xf32>
    %342 = vector.shape_cast %341 : vector<64xf32> to vector<64x1xf32>
    %343 = arith.truncf %340 : vector<64x64xf32> to vector<64x64xbf16>
    %344 = arith.truncf %332 : vector<64x64xf32> to vector<64x64xbf16>
    %cst_137 = arith.constant dense<0.000000e+00> : vector<64x64xf32>
    %345 = tpu.matmul %343, %344, %cst_137 {dimension_numbers = #tpu.dot_dimension_numbers<[1], [0], [0], [1], [0, 0, 1, 1], [], []>} : vector<64x64xbf16>, vector<64x64xbf16>, vector<64x64xf32> -> vector<64x64xf32>
    %346 = tpu.reciprocal %342 {approx = true} : vector<64x1xf32> -> vector<64x1xf32>
    %347 = vector.broadcast %346 : vector<64x1xf32> to vector<64x64xf32>
    %348 = arith.mulf %345, %347 : vector<64x64xf32>
    %349 = arith.truncf %62 : vector<64x32xf32> to vector<64x32xbf16>
    %cst_138 = arith.constant dense<0.000000e+00> : vector<64x64xf32>
    %350 = tpu.matmul %349, %9, %cst_138 {dimension_numbers = #tpu.dot_dimension_numbers<[1], [0], [0], [1], [0, 0, 1, 1], [], []>} : vector<64x32xbf16>, vector<32x64xbf16>, vector<64x64xf32> -> vector<64x64xf32>
    %cst_139 = arith.constant dense<0.000000e+00> : vector<64xf32>
    %351 = vector.multi_reduction <add>, %350, %cst_139 [0] : vector<64x64xf32> to vector<64xf32>
    %352 = vector.shape_cast %351 : vector<64xf32> to vector<1x64xf32>
    %cst_140 = arith.constant 6.400000e+01 : f32
    %353 = vector.broadcast %cst_140 : f32 to vector<1x64xf32>
    %354 = arith.divf %352, %353 : vector<1x64xf32>
    %355 = vector.broadcast %354 : vector<1x64xf32> to vector<64x64xf32>
    %356 = arith.subf %350, %355 : vector<64x64xf32>
    %357 = arith.mulf %356, %356 : vector<64x64xf32>
    %cst_141 = arith.constant dense<0.000000e+00> : vector<64xf32>
    %358 = vector.multi_reduction <add>, %357, %cst_141 [0] : vector<64x64xf32> to vector<64xf32>
    %359 = vector.shape_cast %358 : vector<64xf32> to vector<1x64xf32>
    %cst_142 = arith.constant 6.400000e+01 : f32
    %360 = vector.broadcast %cst_142 : f32 to vector<1x64xf32>
    %361 = arith.divf %359, %360 : vector<1x64xf32>
    %362 = vector.broadcast %354 : vector<1x64xf32> to vector<64x64xf32>
    %363 = arith.subf %350, %362 : vector<64x64xf32>
    %cst_143 = arith.constant 9.99999974E-6 : f32
    %364 = vector.broadcast %cst_143 : f32 to vector<1x64xf32>
    %365 = arith.addf %361, %364 : vector<1x64xf32>
    %366 = math.rsqrt %365 : vector<1x64xf32>
    %367 = vector.broadcast %366 : vector<1x64xf32> to vector<64x64xf32>
    %368 = arith.mulf %363, %367 : vector<64x64xf32>
    %cst_144 = arith.constant 0.000000e+00 : f32
    %369 = vector.broadcast %cst_144 : f32 to vector<64x64xf32>
    %370 = arith.maximumf %368, %369 : vector<64x64xf32>
    %371 = arith.addf %348, %370 : vector<64x64xf32>
    %372 = arith.truncf %371 : vector<64x64xf32> to vector<64x64xbf16>
    %cst_145 = arith.constant dense<0.000000e+00> : vector<64x32xf32>
    %373 = tpu.matmul %372, %10, %cst_145 {dimension_numbers = #tpu.dot_dimension_numbers<[1], [0], [0], [1], [0, 0, 1, 1], [], []>} : vector<64x64xbf16>, vector<64x32xbf16>, vector<64x32xf32> -> vector<64x32xf32>
    %cst_146 = arith.constant dense<0.000000e+00> : vector<32xf32>
    %374 = vector.multi_reduction <add>, %373, %cst_146 [0] : vector<64x32xf32> to vector<32xf32>
    %375 = vector.shape_cast %374 : vector<32xf32> to vector<1x32xf32>
    %cst_147 = arith.constant 6.400000e+01 : f32
    %376 = vector.broadcast %cst_147 : f32 to vector<1x32xf32>
    %377 = arith.divf %375, %376 : vector<1x32xf32>
    %378 = vector.broadcast %377 : vector<1x32xf32> to vector<64x32xf32>
    %379 = arith.subf %373, %378 : vector<64x32xf32>
    %380 = arith.mulf %379, %379 : vector<64x32xf32>
    %cst_148 = arith.constant dense<0.000000e+00> : vector<32xf32>
    %381 = vector.multi_reduction <add>, %380, %cst_148 [0] : vector<64x32xf32> to vector<32xf32>
    %382 = vector.shape_cast %381 : vector<32xf32> to vector<1x32xf32>
    %cst_149 = arith.constant 6.400000e+01 : f32
    %383 = vector.broadcast %cst_149 : f32 to vector<1x32xf32>
    %384 = arith.divf %382, %383 : vector<1x32xf32>
    %385 = vector.broadcast %377 : vector<1x32xf32> to vector<64x32xf32>
    %386 = arith.subf %373, %385 : vector<64x32xf32>
    %cst_150 = arith.constant 9.99999974E-6 : f32
    %387 = vector.broadcast %cst_150 : f32 to vector<1x32xf32>
    %388 = arith.addf %384, %387 : vector<1x32xf32>
    %389 = math.rsqrt %388 : vector<1x32xf32>
    %390 = vector.broadcast %389 : vector<1x32xf32> to vector<64x32xf32>
    %391 = arith.mulf %386, %390 : vector<64x32xf32>
    %cst_151 = arith.constant 0.000000e+00 : f32
    %392 = vector.broadcast %cst_151 : f32 to vector<64x32xf32>
    %393 = arith.maximumf %391, %392 : vector<64x32xf32>
    %394 = arith.truncf %393 : vector<64x32xf32> to vector<64x32xbf16>
    %395 = vector.extract_strided_slice %11 {offsets = [0, 0], sizes = [32, 96], strides = [1, 1]} : vector<64x96xbf16> to vector<32x96xbf16>
    %cst_152 = arith.constant dense<0.000000e+00> : vector<64x96xf32>
    %396 = tpu.matmul %394, %395, %cst_152 {dimension_numbers = #tpu.dot_dimension_numbers<[1], [0], [0], [1], [0, 0, 1, 1], [], []>} : vector<64x32xbf16>, vector<32x96xbf16>, vector<64x96xf32> -> vector<64x96xf32>
    %397 = arith.truncf %62 : vector<64x32xf32> to vector<64x32xbf16>
    %398 = vector.extract_strided_slice %11 {offsets = [32, 0], sizes = [32, 96], strides = [1, 1]} : vector<64x96xbf16> to vector<32x96xbf16>
    %cst_153 = arith.constant dense<0.000000e+00> : vector<64x96xf32>
    %399 = tpu.matmul %397, %398, %cst_153 {dimension_numbers = #tpu.dot_dimension_numbers<[1], [0], [0], [1], [0, 0, 1, 1], [], []>} : vector<64x32xbf16>, vector<32x96xbf16>, vector<64x96xf32> -> vector<64x96xf32>
    %400 = arith.addf %396, %399 : vector<64x96xf32>
    %cst_154 = arith.constant dense<0.000000e+00> : vector<96xf32>
    %401 = vector.multi_reduction <add>, %400, %cst_154 [0] : vector<64x96xf32> to vector<96xf32>
    %402 = vector.shape_cast %401 : vector<96xf32> to vector<1x96xf32>
    %cst_155 = arith.constant 6.400000e+01 : f32
    %403 = vector.broadcast %cst_155 : f32 to vector<1x96xf32>
    %404 = arith.divf %402, %403 : vector<1x96xf32>
    %405 = vector.broadcast %404 : vector<1x96xf32> to vector<64x96xf32>
    %406 = arith.subf %400, %405 : vector<64x96xf32>
    %407 = arith.mulf %406, %406 : vector<64x96xf32>
    %cst_156 = arith.constant dense<0.000000e+00> : vector<96xf32>
    %408 = vector.multi_reduction <add>, %407, %cst_156 [0] : vector<64x96xf32> to vector<96xf32>
    %409 = vector.shape_cast %408 : vector<96xf32> to vector<1x96xf32>
    %cst_157 = arith.constant 6.400000e+01 : f32
    %410 = vector.broadcast %cst_157 : f32 to vector<1x96xf32>
    %411 = arith.divf %409, %410 : vector<1x96xf32>
    %412 = vector.broadcast %404 : vector<1x96xf32> to vector<64x96xf32>
    %413 = arith.subf %400, %412 : vector<64x96xf32>
    %cst_158 = arith.constant 9.99999974E-6 : f32
    %414 = vector.broadcast %cst_158 : f32 to vector<1x96xf32>
    %415 = arith.addf %411, %414 : vector<1x96xf32>
    %416 = math.rsqrt %415 : vector<1x96xf32>
    %417 = vector.broadcast %416 : vector<1x96xf32> to vector<64x96xf32>
    %418 = arith.mulf %413, %417 : vector<64x96xf32>
    %cst_159 = arith.constant 0.000000e+00 : f32
    %419 = vector.broadcast %cst_159 : f32 to vector<64x96xf32>
    %420 = arith.maximumf %418, %419 : vector<64x96xf32>
    %421 = arith.truncf %420 : vector<64x96xf32> to vector<64x96xbf16>
    %cst_160 = arith.constant dense<0.000000e+00> : vector<64x96xf32>
    %422 = tpu.matmul %421, %12, %cst_160 {dimension_numbers = #tpu.dot_dimension_numbers<[1], [0], [0], [1], [0, 0, 1, 1], [], []>} : vector<64x96xbf16>, vector<96x96xbf16>, vector<64x96xf32> -> vector<64x96xf32>
    %cst_161 = arith.constant dense<0.000000e+00> : vector<96xf32>
    %423 = vector.multi_reduction <add>, %422, %cst_161 [0] : vector<64x96xf32> to vector<96xf32>
    %424 = vector.shape_cast %423 : vector<96xf32> to vector<1x96xf32>
    %cst_162 = arith.constant 6.400000e+01 : f32
    %425 = vector.broadcast %cst_162 : f32 to vector<1x96xf32>
    %426 = arith.divf %424, %425 : vector<1x96xf32>
    %427 = vector.broadcast %426 : vector<1x96xf32> to vector<64x96xf32>
    %428 = arith.subf %422, %427 : vector<64x96xf32>
    %429 = arith.mulf %428, %428 : vector<64x96xf32>
    %cst_163 = arith.constant dense<0.000000e+00> : vector<96xf32>
    %430 = vector.multi_reduction <add>, %429, %cst_163 [0] : vector<64x96xf32> to vector<96xf32>
    %431 = vector.shape_cast %430 : vector<96xf32> to vector<1x96xf32>
    %cst_164 = arith.constant 6.400000e+01 : f32
    %432 = vector.broadcast %cst_164 : f32 to vector<1x96xf32>
    %433 = arith.divf %431, %432 : vector<1x96xf32>
    %434 = vector.broadcast %426 : vector<1x96xf32> to vector<64x96xf32>
    %435 = arith.subf %422, %434 : vector<64x96xf32>
    %cst_165 = arith.constant 9.99999974E-6 : f32
    %436 = vector.broadcast %cst_165 : f32 to vector<1x96xf32>
    %437 = arith.addf %433, %436 : vector<1x96xf32>
    %438 = math.rsqrt %437 : vector<1x96xf32>
    %439 = vector.broadcast %438 : vector<1x96xf32> to vector<64x96xf32>
    %440 = arith.mulf %435, %439 : vector<64x96xf32>
    %441 = arith.truncf %393 : vector<64x32xf32> to vector<64x32xbf16>
    %442 = vector.extract_strided_slice %13 {offsets = [0, 0], sizes = [32, 96], strides = [1, 1]} : vector<64x96xbf16> to vector<32x96xbf16>
    %cst_166 = arith.constant dense<0.000000e+00> : vector<64x96xf32>
    %443 = tpu.matmul %441, %442, %cst_166 {dimension_numbers = #tpu.dot_dimension_numbers<[1], [0], [0], [1], [0, 0, 1, 1], [], []>} : vector<64x32xbf16>, vector<32x96xbf16>, vector<64x96xf32> -> vector<64x96xf32>
    %444 = arith.truncf %62 : vector<64x32xf32> to vector<64x32xbf16>
    %445 = vector.extract_strided_slice %13 {offsets = [32, 0], sizes = [32, 96], strides = [1, 1]} : vector<64x96xbf16> to vector<32x96xbf16>
    %cst_167 = arith.constant dense<0.000000e+00> : vector<64x96xf32>
    %446 = tpu.matmul %444, %445, %cst_167 {dimension_numbers = #tpu.dot_dimension_numbers<[1], [0], [0], [1], [0, 0, 1, 1], [], []>} : vector<64x32xbf16>, vector<32x96xbf16>, vector<64x96xf32> -> vector<64x96xf32>
    %447 = arith.addf %443, %446 : vector<64x96xf32>
    %cst_168 = arith.constant dense<0.000000e+00> : vector<96xf32>
    %448 = vector.multi_reduction <add>, %447, %cst_168 [0] : vector<64x96xf32> to vector<96xf32>
    %449 = vector.shape_cast %448 : vector<96xf32> to vector<1x96xf32>
    %cst_169 = arith.constant 6.400000e+01 : f32
    %450 = vector.broadcast %cst_169 : f32 to vector<1x96xf32>
    %451 = arith.divf %449, %450 : vector<1x96xf32>
    %452 = vector.broadcast %451 : vector<1x96xf32> to vector<64x96xf32>
    %453 = arith.subf %447, %452 : vector<64x96xf32>
    %454 = arith.mulf %453, %453 : vector<64x96xf32>
    %cst_170 = arith.constant dense<0.000000e+00> : vector<96xf32>
    %455 = vector.multi_reduction <add>, %454, %cst_170 [0] : vector<64x96xf32> to vector<96xf32>
    %456 = vector.shape_cast %455 : vector<96xf32> to vector<1x96xf32>
    %cst_171 = arith.constant 6.400000e+01 : f32
    %457 = vector.broadcast %cst_171 : f32 to vector<1x96xf32>
    %458 = arith.divf %456, %457 : vector<1x96xf32>
    %459 = vector.broadcast %451 : vector<1x96xf32> to vector<64x96xf32>
    %460 = arith.subf %447, %459 : vector<64x96xf32>
    %cst_172 = arith.constant 9.99999974E-6 : f32
    %461 = vector.broadcast %cst_172 : f32 to vector<1x96xf32>
    %462 = arith.addf %458, %461 : vector<1x96xf32>
    %463 = math.rsqrt %462 : vector<1x96xf32>
    %464 = vector.broadcast %463 : vector<1x96xf32> to vector<64x96xf32>
    %465 = arith.mulf %460, %464 : vector<64x96xf32>
    %466 = arith.addf %440, %465 : vector<64x96xf32>
    %cst_173 = arith.constant 0.000000e+00 : f32
    %467 = vector.broadcast %cst_173 : f32 to vector<64x96xf32>
    %468 = arith.maximumf %466, %467 : vector<64x96xf32>
    %469 = arith.truncf %468 : vector<64x96xf32> to vector<64x96xbf16>
    %cst_174 = arith.constant dense<0.000000e+00> : vector<64x96xf32>
    %470 = tpu.matmul %469, %14, %cst_174 {dimension_numbers = #tpu.dot_dimension_numbers<[1], [0], [0], [1], [0, 0, 1, 1], [], []>} : vector<64x96xbf16>, vector<96x96xbf16>, vector<64x96xf32> -> vector<64x96xf32>
    %cst_175 = arith.constant dense<0.000000e+00> : vector<96xf32>
    %471 = vector.multi_reduction <add>, %470, %cst_175 [0] : vector<64x96xf32> to vector<96xf32>
    %472 = vector.shape_cast %471 : vector<96xf32> to vector<1x96xf32>
    %cst_176 = arith.constant 6.400000e+01 : f32
    %473 = vector.broadcast %cst_176 : f32 to vector<1x96xf32>
    %474 = arith.divf %472, %473 : vector<1x96xf32>
    %475 = vector.broadcast %474 : vector<1x96xf32> to vector<64x96xf32>
    %476 = arith.subf %470, %475 : vector<64x96xf32>
    %477 = arith.mulf %476, %476 : vector<64x96xf32>
    %cst_177 = arith.constant dense<0.000000e+00> : vector<96xf32>
    %478 = vector.multi_reduction <add>, %477, %cst_177 [0] : vector<64x96xf32> to vector<96xf32>
    %479 = vector.shape_cast %478 : vector<96xf32> to vector<1x96xf32>
    %cst_178 = arith.constant 6.400000e+01 : f32
    %480 = vector.broadcast %cst_178 : f32 to vector<1x96xf32>
    %481 = arith.divf %479, %480 : vector<1x96xf32>
    %482 = vector.broadcast %474 : vector<1x96xf32> to vector<64x96xf32>
    %483 = arith.subf %470, %482 : vector<64x96xf32>
    %cst_179 = arith.constant 9.99999974E-6 : f32
    %484 = vector.broadcast %cst_179 : f32 to vector<1x96xf32>
    %485 = arith.addf %481, %484 : vector<1x96xf32>
    %486 = math.rsqrt %485 : vector<1x96xf32>
    %487 = vector.broadcast %486 : vector<1x96xf32> to vector<64x96xf32>
    %488 = arith.mulf %483, %487 : vector<64x96xf32>
    %cst_180 = arith.constant 0.000000e+00 : f32
    %489 = vector.broadcast %cst_180 : f32 to vector<64x96xf32>
    %490 = arith.maximumf %488, %489 : vector<64x96xf32>
    %491 = arith.truncf %490 : vector<64x96xf32> to vector<64x96xbf16>
    %cst_181 = arith.constant dense<0.000000e+00> : vector<64x96xf32>
    %492 = tpu.matmul %491, %15, %cst_181 {dimension_numbers = #tpu.dot_dimension_numbers<[1], [0], [0], [1], [0, 0, 1, 1], [], []>} : vector<64x96xbf16>, vector<96x96xbf16>, vector<64x96xf32> -> vector<64x96xf32>
    %cst_182 = arith.constant dense<0.000000e+00> : vector<96xf32>
    %493 = vector.multi_reduction <add>, %492, %cst_182 [0] : vector<64x96xf32> to vector<96xf32>
    %494 = vector.shape_cast %493 : vector<96xf32> to vector<1x96xf32>
    %cst_183 = arith.constant 6.400000e+01 : f32
    %495 = vector.broadcast %cst_183 : f32 to vector<1x96xf32>
    %496 = arith.divf %494, %495 : vector<1x96xf32>
    %497 = vector.broadcast %496 : vector<1x96xf32> to vector<64x96xf32>
    %498 = arith.subf %492, %497 : vector<64x96xf32>
    %499 = arith.mulf %498, %498 : vector<64x96xf32>
    %cst_184 = arith.constant dense<0.000000e+00> : vector<96xf32>
    %500 = vector.multi_reduction <add>, %499, %cst_184 [0] : vector<64x96xf32> to vector<96xf32>
    %501 = vector.shape_cast %500 : vector<96xf32> to vector<1x96xf32>
    %cst_185 = arith.constant 6.400000e+01 : f32
    %502 = vector.broadcast %cst_185 : f32 to vector<1x96xf32>
    %503 = arith.divf %501, %502 : vector<1x96xf32>
    %504 = vector.broadcast %496 : vector<1x96xf32> to vector<64x96xf32>
    %505 = arith.subf %492, %504 : vector<64x96xf32>
    %cst_186 = arith.constant 9.99999974E-6 : f32
    %506 = vector.broadcast %cst_186 : f32 to vector<1x96xf32>
    %507 = arith.addf %503, %506 : vector<1x96xf32>
    %508 = math.rsqrt %507 : vector<1x96xf32>
    %509 = vector.broadcast %508 : vector<1x96xf32> to vector<64x96xf32>
    %510 = arith.mulf %505, %509 : vector<64x96xf32>
    %511 = arith.addf %510, %468 : vector<64x96xf32>
    %cst_187 = arith.constant 0.000000e+00 : f32
    %512 = vector.broadcast %cst_187 : f32 to vector<64x96xf32>
    %513 = arith.maximumf %511, %512 : vector<64x96xf32>
    %514 = arith.truncf %371 : vector<64x64xf32> to vector<64x64xbf16>
    %cst_188 = arith.constant dense<0.000000e+00> : vector<64x96xf32>
    %515 = tpu.matmul %514, %16, %cst_188 {dimension_numbers = #tpu.dot_dimension_numbers<[1], [0], [0], [1], [0, 0, 1, 1], [], []>} : vector<64x64xbf16>, vector<64x96xbf16>, vector<64x96xf32> -> vector<64x96xf32>
    %cst_189 = arith.constant dense<0.000000e+00> : vector<96xf32>
    %516 = vector.multi_reduction <add>, %515, %cst_189 [0] : vector<64x96xf32> to vector<96xf32>
    %517 = vector.shape_cast %516 : vector<96xf32> to vector<1x96xf32>
    %cst_190 = arith.constant 6.400000e+01 : f32
    %518 = vector.broadcast %cst_190 : f32 to vector<1x96xf32>
    %519 = arith.divf %517, %518 : vector<1x96xf32>
    %520 = vector.broadcast %519 : vector<1x96xf32> to vector<64x96xf32>
    %521 = arith.subf %515, %520 : vector<64x96xf32>
    %522 = arith.mulf %521, %521 : vector<64x96xf32>
    %cst_191 = arith.constant dense<0.000000e+00> : vector<96xf32>
    %523 = vector.multi_reduction <add>, %522, %cst_191 [0] : vector<64x96xf32> to vector<96xf32>
    %524 = vector.shape_cast %523 : vector<96xf32> to vector<1x96xf32>
    %cst_192 = arith.constant 6.400000e+01 : f32
    %525 = vector.broadcast %cst_192 : f32 to vector<1x96xf32>
    %526 = arith.divf %524, %525 : vector<1x96xf32>
    %527 = vector.broadcast %519 : vector<1x96xf32> to vector<64x96xf32>
    %528 = arith.subf %515, %527 : vector<64x96xf32>
    %cst_193 = arith.constant 9.99999974E-6 : f32
    %529 = vector.broadcast %cst_193 : f32 to vector<1x96xf32>
    %530 = arith.addf %526, %529 : vector<1x96xf32>
    %531 = math.rsqrt %530 : vector<1x96xf32>
    %532 = vector.broadcast %531 : vector<1x96xf32> to vector<64x96xf32>
    %533 = arith.mulf %528, %532 : vector<64x96xf32>
    %cst_194 = arith.constant 0.000000e+00 : f32
    %534 = vector.broadcast %cst_194 : f32 to vector<64x96xf32>
    %535 = arith.maximumf %533, %534 : vector<64x96xf32>
    %536 = arith.addf %513, %535 : vector<64x96xf32>
    %c0_195 = arith.constant 0 : index
    %c0_196 = arith.constant 0 : index
    %537 = vector.load %arg19[%c0_195, %c0_196] : memref<64x96xf32, #tpu.memory_space<vmem>>, vector<64x96xf32>
    tpu.vector_store %arg19[%c0_195, %c0_196], %536 {strides = array<i32>} : memref<64x96xf32, #tpu.memory_space<vmem>>, vector<64x96xf32>,
    return
  }
}

</mosaic_0001>

<llo_original>
// kernel: attention_block0_forward.1
$region0: #{attention_block0_forward.1}
  #allocation0 [shape = 'u32[]', space=smem, size = 0x4, offset = 0x4, fixed_abs, tag = 'smem constant byte address 0x4 - core index']
  #allocation1 [shape = 'u32[72,128]{1,0:T(1,128)}', space=vmem, size = 0x9000, scoped, tag = 'internal scratch']
  %s0 = inlined_call_operand.vmem [shape: f32[64,4], index: 0, kind: input, shape index: {}]
  %s1 = inlined_call_operand.vmem [shape: f32[64,4], index: 1, kind: input, shape index: {}]
  %s2 = inlined_call_operand.hbm [shape: bf16[4,32], index: 2, kind: input, shape index: {}]
  %s3 = inlined_call_operand.hbm [shape: bf16[32,32], index: 3, kind: input, shape index: {}]
  %s4 = inlined_call_operand.hbm [shape: bf16[32,64], index: 4, kind: input, shape index: {}]
  %s5 = inlined_call_operand.vmem [shape: bf16[64,64], index: 5, kind: input, shape index: {}]
  %s6 = inlined_call_operand.hbm [shape: bf16[32,64], index: 6, kind: input, shape index: {}]
  %s7 = inlined_call_operand.hbm [shape: bf16[64,64], index: 7, kind: input, shape index: {}]
  %s8 = inlined_call_operand.hbm [shape: bf16[64,64], index: 8, kind: input, shape index: {}]
  %s9 = inlined_call_operand.hbm [shape: bf16[64,64], index: 9, kind: input, shape index: {}]
  %s10 = inlined_call_operand.hbm [shape: bf16[64,128], index: 10, kind: input, shape index: {}]
  %s11 = inlined_call_operand.hbm [shape: bf16[32,64], index: 11, kind: input, shape index: {}]
  %s12 = inlined_call_operand.vmem [shape: bf16[64,32], index: 12, kind: input, shape index: {}]
  %s13 = inlined_call_operand.hbm [shape: bf16[64,96], index: 13, kind: input, shape index: {}]
  %s14 = inlined_call_operand.vmem [shape: bf16[96,96], index: 14, kind: input, shape index: {}]
  %s15 = inlined_call_operand.hbm [shape: bf16[64,96], index: 15, kind: input, shape index: {}]
  %s16 = inlined_call_operand.vmem [shape: bf16[96,96], index: 16, kind: input, shape index: {}]
  %s17 = inlined_call_operand.vmem [shape: bf16[96,96], index: 17, kind: input, shape index: {}]
  %s18 = inlined_call_operand.hbm [shape: bf16[64,96], index: 18, kind: input, shape index: {}]
  %s19 = inlined_call_operand.hbm [shape: f32[64,96], index: 19, kind: output, shape index: {}]
  %s20 = sld [smem:[#allocation0]]
  $region134: #{attention_block0_forward.1} parent=0
    _
  %s22 = ssub.s32 1, %s20
  %s23 = scalar_select 0, %s22, %s20
  $region1: #{attention_block0_forward.1} parent=0
    #allocation2 [shape = 'u8[1024]{0}', space=vmem, size = 0x400, scoped, tag = 'input window, operand 2, single buffered']
    #allocation3 [shape = 's32[1]{0}', space=sflag, size = 0x4, scoped, tag = 'scoped memory for attention_block0_forward.1']
    #allocation4 [shape = 's32[1]{0}', space=sflag, size = 0x4, scoped, tag = 'scoped memory for attention_block0_forward.1']
    #allocation5 [shape = 'u8[8192]{0}', space=vmem, size = 0x2000, scoped, tag = 'input window, operand 3, single buffered']
    #allocation6 [shape = 's32[1]{0}', space=sflag, size = 0x4, scoped, tag = 'scoped memory for attention_block0_forward.1']
    #allocation7 [shape = 'u8[8192]{0}', space=vmem, size = 0x2000, scoped, tag = 'input window, operand 4, single buffered']
    #allocation8 [shape = 'u8[8192]{0}', space=vmem, size = 0x2000, scoped, tag = 'input window, operand 6, single buffered']
    #allocation9 [shape = 's32[1]{0}', space=sflag, size = 0x4, scoped, tag = 'scoped memory for attention_block0_forward.1']
    #allocation10 [shape = 'u8[16384]{0}', space=vmem, size = 0x4000, scoped, tag = 'input window, operand 7, single buffered']
    #allocation11 [shape = 'u8[16384]{0}', space=vmem, size = 0x4000, scoped, tag = 'input window, operand 8, single buffered']
    #allocation12 [shape = 's32[1]{0}', space=sflag, size = 0x4, scoped, tag = 'scoped memory for attention_block0_forward.1']
    #allocation13 [shape = 'u8[16384]{0}', space=vmem, size = 0x4000, scoped, tag = 'input window, operand 9, single buffered']
    #allocation14 [shape = 'u8[16384]{0}', space=vmem, size = 0x4000, scoped, tag = 'input window, operand 10, single buffered']
    #allocation15 [shape = 's32[1]{0}', space=sflag, size = 0x4, scoped, tag = 'scoped memory for attention_block0_forward.1']
    #allocation16 [shape = 'u8[8192]{0}', space=vmem, size = 0x2000, scoped, tag = 'input window, operand 11, single buffered']
    #allocation17 [shape = 'u8[16384]{0}', space=vmem, size = 0x4000, scoped, tag = 'input window, operand 13, single buffered']
    #allocation18 [shape = 's32[1]{0}', space=sflag, size = 0x4, scoped, tag = 'scoped memory for attention_block0_forward.1']
    #allocation19 [shape = 'u8[16384]{0}', space=vmem, size = 0x4000, scoped, tag = 'input window, operand 15, single buffered']
    #allocation20 [shape = 'u8[16384]{0}', space=vmem, size = 0x4000, scoped, tag = 'input window, operand 18, single buffered']
    #allocation21 [shape = 's32[1]{0}', space=sflag, size = 0x4, scoped, tag = 'scoped memory for attention_block0_forward.1']
    #allocation22 [shape = 'u8[32768]{0}', space=vmem, size = 0x8000, scoped, tag = 'output window, operand 0, single buffered']
    %24 = vsyncpa [#allocation3], 0
    %25 = vsyncpa [#allocation6], 0
    %26 = vsyncpa [#allocation9], 0
    %27 = vsyncpa [#allocation12], 0
    %28 = vsyncpa [#allocation15], 0
    %29 = vsyncpa [#allocation18], 0
    %30 = vsyncpa [#allocation21], 0
    %31 = vsyncpa [#allocation4], 0
    // Predicated region
    $region2: #{attention_block0_forward.1} parent=1 // pred_check
      _
    $region3: #{attention_block0_forward.1} parent=1 // pred_check_branch
      %33 = sbr.rel (0) target = $region5
    $region4: #{attention_block0_forward.1} parent=1 // pred_region
      _
    $region5: #{attention_block0_forward.1} parent=1 // pred_fallthru
      _
    // Predicated region
    $region6: #{attention_block0_forward.1} parent=1 // pred_check
      _
    $region7: #{attention_block0_forward.1} parent=1 // pred_check_branch
      %35 = sbr.rel (0) target = $region9
    $region8: #{attention_block0_forward.1} parent=1 // pred_region
      _
    $region9: #{attention_block0_forward.1} parent=1 // pred_fallthru
      _
    // Predicated region
    $region10: #{attention_block0_forward.1} parent=1 // pred_check
      _
    $region11: #{attention_block0_forward.1} parent=1 // pred_check_branch
      %37 = sbr.rel (0) target = $region13
    $region12: #{attention_block0_forward.1} parent=1 // pred_region
      %39 = vsyncadd [#allocation3], 0
      %s41 = sshll.u32 %s2, 4
      %s42 = int_to_ptr.hbm [resolvable:$true] %s41
      %s43 = sshll.u32 [#allocation2], 4
      %s44 = int_to_ptr.vmem [resolvable:$true] %s43
      %46 = dma.hbm_to_vmem [thread:$0]  %s42, 32, %s44, [#allocation3]
    $region13: #{attention_block0_forward.1} parent=1 // pred_fallthru
      _
    // Predicated region
    $region14: #{attention_block0_forward.1} parent=1 // pred_check
      _
    $region15: #{attention_block0_forward.1} parent=1 // pred_check_branch
      %48 = sbr.rel (0) target = $region17
    $region16: #{attention_block0_forward.1} parent=1 // pred_region
      %50 = vsyncadd [#allocation6], 0
      %s51 = sshll.u32 %s3, 4
      %s52 = int_to_ptr.hbm [resolvable:$true] %s51
      %s53 = sshll.u32 [#allocation5], 4
      %s54 = int_to_ptr.vmem [resolvable:$true] %s53
      %59 = dma.hbm_to_vmem [thread:$0]  %s52, 256, %s54, [#allocation6], 64, 64, 4
    $region17: #{attention_block0_forward.1} parent=1 // pred_fallthru
      _
    // Predicated region
    $region18: #{attention_block0_forward.1} parent=1 // pred_check
      _
    $region19: #{attention_block0_forward.1} parent=1 // pred_check_branch
      %61 = sbr.rel (0) target = $region21
    $region20: #{attention_block0_forward.1} parent=1 // pred_region
      %63 = vsyncadd [#allocation6], 0
      %s64 = sshll.u32 %s4, 4
      %s65 = int_to_ptr.hbm [resolvable:$true] %s64
      %s66 = sshll.u32 [#allocation7], 4
      %s67 = int_to_ptr.vmem [resolvable:$true] %s66
      %72 = dma.hbm_to_vmem [thread:$0]  %s65, 256, %s67, [#allocation6], 64, 64, 4
    $region21: #{attention_block0_forward.1} parent=1 // pred_fallthru
      _
    // Predicated region
    $region22: #{attention_block0_forward.1} parent=1 // pred_check
      _
    $region23: #{attention_block0_forward.1} parent=1 // pred_check_branch
      %74 = sbr.rel (0) target = $region25
    $region24: #{attention_block0_forward.1} parent=1 // pred_region
      _
    $region25: #{attention_block0_forward.1} parent=1 // pred_fallthru
      _
    // Predicated region
    $region26: #{attention_block0_forward.1} parent=1 // pred_check
      _
    $region27: #{attention_block0_forward.1} parent=1 // pred_check_branch
      %76 = sbr.rel (0) target = $region29
    $region28: #{attention_block0_forward.1} parent=1 // pred_region
      %78 = vsyncadd [#allocation9], 0
      %s79 = sshll.u32 %s6, 4
      %s80 = int_to_ptr.hbm [resolvable:$true] %s79
      %s81 = sshll.u32 [#allocation8], 4
      %s82 = int_to_ptr.vmem [resolvable:$true] %s81
      %87 = dma.hbm_to_vmem [thread:$0]  %s80, 256, %s82, [#allocation9], 64, 64, 4
    $region29: #{attention_block0_forward.1} parent=1 // pred_fallthru
      _
    // Predicated region
    $region30: #{attention_block0_forward.1} parent=1 // pred_check
      _
    $region31: #{attention_block0_forward.1} parent=1 // pred_check_branch
      %89 = sbr.rel (0) target = $region33
    $region32: #{attention_block0_forward.1} parent=1 // pred_region
      %91 = vsyncadd [#allocation9], 0
      %s92 = sshll.u32 %s7, 4
      %s93 = int_to_ptr.hbm [resolvable:$true] %s92
      %s94 = sshll.u32 [#allocation10], 4
      %s95 = int_to_ptr.vmem [resolvable:$true] %s94
      %100 = dma.hbm_to_vmem [thread:$0]  %s93, 512, %s95, [#allocation9], 64, 64, 4
    $region33: #{attention_block0_forward.1} parent=1 // pred_fallthru
      _
    // Predicated region
    $region34: #{attention_block0_forward.1} parent=1 // pred_check
      _
    $region35: #{attention_block0_forward.1} parent=1 // pred_check_branch
      %102 = sbr.rel (0) target = $region37
    $region36: #{attention_block0_forward.1} parent=1 // pred_region
      %104 = vsyncadd [#allocation12], 0
      %s105 = sshll.u32 %s8, 4
      %s106 = int_to_ptr.hbm [resolvable:$true] %s105
      %s107 = sshll.u32 [#allocation11], 4
      %s108 = int_to_ptr.vmem [resolvable:$true] %s107
      %113 = dma.hbm_to_vmem [thread:$0]  %s106, 512, %s108, [#allocation12], 64, 64, 4
    $region37: #{attention_block0_forward.1} parent=1 // pred_fallthru
      _
    // Predicated region
    $region38: #{attention_block0_forward.1} parent=1 // pred_check
      _
    $region39: #{attention_block0_forward.1} parent=1 // pred_check_branch
      %115 = sbr.rel (0) target = $region41
    $region40: #{attention_block0_forward.1} parent=1 // pred_region
      %117 = vsyncadd [#allocation12], 0
      %s118 = sshll.u32 %s9, 4
      %s119 = int_to_ptr.hbm [resolvable:$true] %s118
      %s120 = sshll.u32 [#allocation13], 4
      %s121 = int_to_ptr.vmem [resolvable:$true] %s120
      %126 = dma.hbm_to_vmem [thread:$0]  %s119, 512, %s121, [#allocation12], 64, 64, 4
    $region41: #{attention_block0_forward.1} parent=1 // pred_fallthru
      _
    // Predicated region
    $region42: #{attention_block0_forward.1} parent=1 // pred_check
      _
    $region43: #{attention_block0_forward.1} parent=1 // pred_check_branch
      %128 = sbr.rel (0) target = $region45
    $region44: #{attention_block0_forward.1} parent=1 // pred_region
      %130 = vsyncadd [#allocation15], 0
      %s131 = sshll.u32 %s10, 4
      %s132 = int_to_ptr.hbm [resolvable:$true] %s131
      %s133 = sshll.u32 [#allocation14], 4
      %s134 = int_to_ptr.vmem [resolvable:$true] %s133
      %139 = dma.hbm_to_vmem [thread:$0]  %s132, 512, %s134, [#allocation15], 64, 64, 4
    $region45: #{attention_block0_forward.1} parent=1 // pred_fallthru
      _
    // Predicated region
    $region46: #{attention_block0_forward.1} parent=1 // pred_check
      _
    $region47: #{attention_block0_forward.1} parent=1 // pred_check_branch
      %141 = sbr.rel (0) target = $region49
    $region48: #{attention_block0_forward.1} parent=1 // pred_region
      %143 = vsyncadd [#allocation15], 0
      %s144 = sshll.u32 %s11, 4
      %s145 = int_to_ptr.hbm [resolvable:$true] %s144
      %s146 = sshll.u32 [#allocation16], 4
      %s147 = int_to_ptr.vmem [resolvable:$true] %s146
      %152 = dma.hbm_to_vmem [thread:$0]  %s145, 256, %s147, [#allocation15], 64, 64, 4
    $region49: #{attention_block0_forward.1} parent=1 // pred_fallthru
      _
    // Predicated region
    $region50: #{attention_block0_forward.1} parent=1 // pred_check
      _
    $region51: #{attention_block0_forward.1} parent=1 // pred_check_branch
      %154 = sbr.rel (0) target = $region53
    $region52: #{attention_block0_forward.1} parent=1 // pred_region
      _
    $region53: #{attention_block0_forward.1} parent=1 // pred_fallthru
      _
    // Predicated region
    $region54: #{attention_block0_forward.1} parent=1 // pred_check
      _
    $region55: #{attention_block0_forward.1} parent=1 // pred_check_branch
      %156 = sbr.rel (0) target = $region57
    $region56: #{attention_block0_forward.1} parent=1 // pred_region
      %158 = vsyncadd [#allocation18], 0
      %s159 = sshll.u32 %s13, 4
      %s160 = int_to_ptr.hbm [resolvable:$true] %s159
      %s161 = sshll.u32 [#allocation17], 4
      %s162 = int_to_ptr.vmem [resolvable:$true] %s161
      %167 = dma.hbm_to_vmem [thread:$0]  %s160, 512, %s162, [#allocation18], 64, 64, 4
    $region57: #{attention_block0_forward.1} parent=1 // pred_fallthru
      _
    // Predicated region
    $region58: #{attention_block0_forward.1} parent=1 // pred_check
      _
    $region59: #{attention_block0_forward.1} parent=1 // pred_check_branch
      %169 = sbr.rel (0) target = $region61
    $region60: #{attention_block0_forward.1} parent=1 // pred_region
      _
    $region61: #{attention_block0_forward.1} parent=1 // pred_fallthru
      _
    // Predicated region
    $region62: #{attention_block0_forward.1} parent=1 // pred_check
      _
    $region63: #{attention_block0_forward.1} parent=1 // pred_check_branch
      %171 = sbr.rel (0) target = $region65
    $region64: #{attention_block0_forward.1} parent=1 // pred_region
      %173 = vsyncadd [#allocation18], 0
      %s174 = sshll.u32 %s15, 4
      %s175 = int_to_ptr.hbm [resolvable:$true] %s174
      %s176 = sshll.u32 [#allocation19], 4
      %s177 = int_to_ptr.vmem [resolvable:$true] %s176
      %182 = dma.hbm_to_vmem [thread:$0]  %s175, 512, %s177, [#allocation18], 64, 64, 4
    $region65: #{attention_block0_forward.1} parent=1 // pred_fallthru
      _
    // Predicated region
    $region66: #{attention_block0_forward.1} parent=1 // pred_check
      _
    $region67: #{attention_block0_forward.1} parent=1 // pred_check_branch
      %184 = sbr.rel (0) target = $region69
    $region68: #{attention_block0_forward.1} parent=1 // pred_region
      _
    $region69: #{attention_block0_forward.1} parent=1 // pred_fallthru
      _
    // Predicated region
    $region70: #{attention_block0_forward.1} parent=1 // pred_check
      _
    $region71: #{attention_block0_forward.1} parent=1 // pred_check_branch
      %186 = sbr.rel (0) target = $region73
    $region72: #{attention_block0_forward.1} parent=1 // pred_region
      _
    $region73: #{attention_block0_forward.1} parent=1 // pred_fallthru
      _
    // Predicated region
    $region74: #{attention_block0_forward.1} parent=1 // pred_check
      _
    $region75: #{attention_block0_forward.1} parent=1 // pred_check_branch
      %188 = sbr.rel (0) target = $region77
    $region76: #{attention_block0_forward.1} parent=1 // pred_region
      %190 = vsyncadd [#allocation21], 0
      %s191 = sshll.u32 %s18, 4
      %s192 = int_to_ptr.hbm [resolvable:$true] %s191
      %s193 = sshll.u32 [#allocation20], 4
      %s194 = int_to_ptr.vmem [resolvable:$true] %s193
      %199 = dma.hbm_to_vmem [thread:$0]  %s192, 512, %s194, [#allocation21], 64, 64, 4
    $region77: #{attention_block0_forward.1} parent=1 // pred_fallthru
      _
    // Predicated region
    $region78: #{attention_block0_forward.1} parent=1 // pred_check
      _
    $region79: #{attention_block0_forward.1} parent=1 // pred_check_branch
      %201 = sbr.rel (0) target = $region81
    $region80: #{attention_block0_forward.1} parent=1 // pred_region
      %203 = dma.done [#allocation3], 32
    $region81: #{attention_block0_forward.1} parent=1 // pred_fallthru
      _
    // Predicated region
    $region82: #{attention_block0_forward.1} parent=1 // pred_check
      _
    $region83: #{attention_block0_forward.1} parent=1 // pred_check_branch
      %205 = sbr.rel (0) target = $region85
    $region84: #{attention_block0_forward.1} parent=1 // pred_region
      %207 = dma.done [#allocation6], 256
    $region85: #{attention_block0_forward.1} parent=1 // pred_fallthru
      _
    // Predicated region
    $region86: #{attention_block0_forward.1} parent=1 // pred_check
      _
    $region87: #{attention_block0_forward.1} parent=1 // pred_check_branch
      %209 = sbr.rel (0) target = $region89
    $region88: #{attention_block0_forward.1} parent=1 // pred_region
      %211 = dma.done [#allocation6], 256
    $region89: #{attention_block0_forward.1} parent=1 // pred_fallthru
      _
    // Predicated region
    $region90: #{attention_block0_forward.1} parent=1 // pred_check
      _
    $region91: #{attention_block0_forward.1} parent=1 // pred_check_branch
      %213 = sbr.rel (0) target = $region93
    $region92: #{attention_block0_forward.1} parent=1 // pred_region
      %215 = dma.done [#allocation9], 256
    $region93: #{attention_block0_forward.1} parent=1 // pred_fallthru
      _
    // Predicated region
    $region94: #{attention_block0_forward.1} parent=1 // pred_check
      _
    $region95: #{attention_block0_forward.1} parent=1 // pred_check_branch
      %217 = sbr.rel (0) target = $region97
    $region96: #{attention_block0_forward.1} parent=1 // pred_region
      %219 = dma.done [#allocation9], 512
    $region97: #{attention_block0_forward.1} parent=1 // pred_fallthru
      _
    // Predicated region
    $region98: #{attention_block0_forward.1} parent=1 // pred_check
      _
    $region99: #{attention_block0_forward.1} parent=1 // pred_check_branch
      %221 = sbr.rel (0) target = $region101
    $region100: #{attention_block0_forward.1} parent=1 // pred_region
      %223 = dma.done [#allocation12], 512
    $region101: #{attention_block0_forward.1} parent=1 // pred_fallthru
      _
    // Predicated region
    $region102: #{attention_block0_forward.1} parent=1 // pred_check
      _
    $region103: #{attention_block0_forward.1} parent=1 // pred_check_branch
      %225 = sbr.rel (0) target = $region105
    $region104: #{attention_block0_forward.1} parent=1 // pred_region
      %227 = dma.done [#allocation12], 512
    $region105: #{attention_block0_forward.1} parent=1 // pred_fallthru
      _
    // Predicated region
    $region106: #{attention_block0_forward.1} parent=1 // pred_check
      _
    $region107: #{attention_block0_forward.1} parent=1 // pred_check_branch
      %229 = sbr.rel (0) target = $region109
    $region108: #{attention_block0_forward.1} parent=1 // pred_region
      %231 = dma.done [#allocation15], 512
    $region109: #{attention_block0_forward.1} parent=1 // pred_fallthru
      _
    // Predicated region
    $region110: #{attention_block0_forward.1} parent=1 // pred_check
      _
    $region111: #{attention_block0_forward.1} parent=1 // pred_check_branch
      %233 = sbr.rel (0) target = $region113
    $region112: #{attention_block0_forward.1} parent=1 // pred_region
      %235 = dma.done [#allocation15], 256
    $region113: #{attention_block0_forward.1} parent=1 // pred_fallthru
      _
    // Predicated region
    $region114: #{attention_block0_forward.1} parent=1 // pred_check
      _
    $region115: #{attention_block0_forward.1} parent=1 // pred_check_branch
      %237 = sbr.rel (0) target = $region117
    $region116: #{attention_block0_forward.1} parent=1 // pred_region
      %239 = dma.done [#allocation18], 512
    $region117: #{attention_block0_forward.1} parent=1 // pred_fallthru
      _
    // Predicated region
    $region118: #{attention_block0_forward.1} parent=1 // pred_check
      _
    $region119: #{attention_block0_forward.1} parent=1 // pred_check_branch
      %241 = sbr.rel (0) target = $region121
    $region120: #{attention_block0_forward.1} parent=1 // pred_region
      %243 = dma.done [#allocation18], 512
    $region121: #{attention_block0_forward.1} parent=1 // pred_fallthru
      _
    // Predicated region
    $region122: #{attention_block0_forward.1} parent=1 // pred_check
      _
    $region123: #{attention_block0_forward.1} parent=1 // pred_check_branch
      %245 = sbr.rel (0) target = $region125
    $region124: #{attention_block0_forward.1} parent=1 // pred_region
      %247 = dma.done [#allocation21], 512
    $region125: #{attention_block0_forward.1} parent=1 // pred_fallthru
      _
    %v249 = vld [vmem:[#allocation2] sm:$0x3]
    %v250 = vld [vmem:[#allocation5] sm:$0xf]
    %v251 = vld [vmem:[#allocation5 + $0x4] sm:$0xf]
    %v252 = vld [vmem:[#allocation5 + $0x8] sm:$0xf]
    %v253 = vld [vmem:[#allocation5 + $0xc] sm:$0xf]
    %v254 = vld [vmem:[#allocation7] sm:$0xf]
    %v255 = vld [vmem:[#allocation7 + $0x4] sm:$0xf]
    %v256 = vld [vmem:[#allocation7 + $0x8] sm:$0xf]
    %v257 = vld [vmem:[#allocation7 + $0xc] sm:$0xf]
    %v258 = vld [vmem:[%s5] sm:$0xf]
    %v259 = vld [vmem:[%s5 + $0x4] sm:$0xf]
    %v260 = vld [vmem:[%s5 + $0x8] sm:$0xf]
    %v261 = vld [vmem:[%s5 + $0xc] sm:$0xf]
    %v262 = vld [vmem:[%s5 + $0x10] sm:$0xf]
    %v263 = vld [vmem:[%s5 + $0x14] sm:$0xf]
    %v264 = vld [vmem:[%s5 + $0x18] sm:$0xf]
    %v265 = vld [vmem:[%s5 + $0x1c] sm:$0xf]
    %v266 = vld [vmem:[#allocation8] sm:$0xf]
    %v267 = vld [vmem:[#allocation8 + $0x4] sm:$0xf]
    %v268 = vld [vmem:[#allocation8 + $0x8] sm:$0xf]
    %v269 = vld [vmem:[#allocation8 + $0xc] sm:$0xf]
    %v270 = vld [vmem:[#allocation10] sm:$0xf]
    %v271 = vld [vmem:[#allocation10 + $0x4] sm:$0xf]
    %v272 = vld [vmem:[#allocation10 + $0x8] sm:$0xf]
    %v273 = vld [vmem:[#allocation10 + $0xc] sm:$0xf]
    %v274 = vld [vmem:[#allocation10 + $0x10] sm:$0xf]
    %v275 = vld [vmem:[#allocation10 + $0x14] sm:$0xf]
    %v276 = vld [vmem:[#allocation10 + $0x18] sm:$0xf]
    %v277 = vld [vmem:[#allocation10 + $0x1c] sm:$0xf]
    %v278 = vld [vmem:[#allocation11] sm:$0xf]
    %v279 = vld [vmem:[#allocation11 + $0x4] sm:$0xf]
    %v280 = vld [vmem:[#allocation11 + $0x8] sm:$0xf]
    %v281 = vld [vmem:[#allocation11 + $0xc] sm:$0xf]
    %v282 = vld [vmem:[#allocation11 + $0x10] sm:$0xf]
    %v283 = vld [vmem:[#allocation11 + $0x14] sm:$0xf]
    %v284 = vld [vmem:[#allocation11 + $0x18] sm:$0xf]
    %v285 = vld [vmem:[#allocation11 + $0x1c] sm:$0xf]
    %v286 = vld [vmem:[#allocation13] sm:$0xf]
    %v287 = vld [vmem:[#allocation13 + $0x4] sm:$0xf]
    %v288 = vld [vmem:[#allocation13 + $0x8] sm:$0xf]
    %v289 = vld [vmem:[#allocation13 + $0xc] sm:$0xf]
    %v290 = vld [vmem:[#allocation13 + $0x10] sm:$0xf]
    %v291 = vld [vmem:[#allocation13 + $0x14] sm:$0xf]
    %v292 = vld [vmem:[#allocation13 + $0x18] sm:$0xf]
    %v293 = vld [vmem:[#allocation13 + $0x1c] sm:$0xf]
    %v294 = vld [vmem:[#allocation14] sm:$0xf]
    %v295 = vld [vmem:[#allocation14 + $0x4] sm:$0xf]
    %v296 = vld [vmem:[#allocation14 + $0x8] sm:$0xf]
    %v297 = vld [vmem:[#allocation14 + $0xc] sm:$0xf]
    %v298 = vld [vmem:[#allocation14 + $0x10] sm:$0xf]
    %v299 = vld [vmem:[#allocation14 + $0x14] sm:$0xf]
    %v300 = vld [vmem:[#allocation14 + $0x18] sm:$0xf]
    %v301 = vld [vmem:[#allocation14 + $0x1c] sm:$0xf]
    %v302 = vld [vmem:[#allocation16] sm:$0xf]
    %v303 = vld [vmem:[#allocation16 + $0x4] sm:$0xf]
    %v304 = vld [vmem:[#allocation16 + $0x8] sm:$0xf]
    %v305 = vld [vmem:[#allocation16 + $0xc] sm:$0xf]
    %v306 = vld [vmem:[%s12] sm:$0xf]
    %v307 = vld [vmem:[%s12 + $0x4] sm:$0xf]
    %v308 = vld [vmem:[%s12 + $0x8] sm:$0xf]
    %v309 = vld [vmem:[%s12 + $0xc] sm:$0xf]
    %v310 = vld [vmem:[%s12 + $0x10] sm:$0xf]
    %v311 = vld [vmem:[%s12 + $0x14] sm:$0xf]
    %v312 = vld [vmem:[%s12 + $0x18] sm:$0xf]
    %v313 = vld [vmem:[%s12 + $0x1c] sm:$0xf]
    %v314 = vld [vmem:[#allocation17] sm:$0xf]
    %v315 = vld [vmem:[#allocation17 + $0x4] sm:$0xf]
    %v316 = vld [vmem:[#allocation17 + $0x8] sm:$0xf]
    %v317 = vld [vmem:[#allocation17 + $0xc] sm:$0xf]
    %v318 = vld [vmem:[#allocation17 + $0x10] sm:$0xf]
    %v319 = vld [vmem:[#allocation17 + $0x14] sm:$0xf]
    %v320 = vld [vmem:[#allocation17 + $0x18] sm:$0xf]
    %v321 = vld [vmem:[#allocation17 + $0x1c] sm:$0xf]
    %v322 = vld [vmem:[%s14] sm:$0xf]
    %v323 = vld [vmem:[%s14 + $0x4] sm:$0xf]
    %v324 = vld [vmem:[%s14 + $0x8] sm:$0xf]
    %v325 = vld [vmem:[%s14 + $0xc] sm:$0xf]
    %v326 = vld [vmem:[%s14 + $0x10] sm:$0xf]
    %v327 = vld [vmem:[%s14 + $0x14] sm:$0xf]
    %v328 = vld [vmem:[%s14 + $0x18] sm:$0xf]
    %v329 = vld [vmem:[%s14 + $0x1c] sm:$0xf]
    %v330 = vld [vmem:[%s14 + $0x20] sm:$0xf]
    %v331 = vld [vmem:[%s14 + $0x24] sm:$0xf]
    %v332 = vld [vmem:[%s14 + $0x28] sm:$0xf]
    %v333 = vld [vmem:[%s14 + $0x2c] sm:$0xf]
    %v334 = vld [vmem:[#allocation19] sm:$0xf]
    %v335 = vld [vmem:[#allocation19 + $0x4] sm:$0xf]
    %v336 = vld [vmem:[#allocation19 + $0x8] sm:$0xf]
    %v337 = vld [vmem:[#allocation19 + $0xc] sm:$0xf]
    %v338 = vld [vmem:[#allocation19 + $0x10] sm:$0xf]
    %v339 = vld [vmem:[#allocation19 + $0x14] sm:$0xf]
    %v340 = vld [vmem:[#allocation19 + $0x18] sm:$0xf]
    %v341 = vld [vmem:[#allocation19 + $0x1c] sm:$0xf]
    %v342 = vld [vmem:[%s16] sm:$0xf]
    %v343 = vld [vmem:[%s16 + $0x4] sm:$0xf]
    %v344 = vld [vmem:[%s16 + $0x8] sm:$0xf]
    %v345 = vld [vmem:[%s16 + $0xc] sm:$0xf]
    %v346 = vld [vmem:[%s16 + $0x10] sm:$0xf]
    %v347 = vld [vmem:[%s16 + $0x14] sm:$0xf]
    %v348 = vld [vmem:[%s16 + $0x18] sm:$0xf]
    %v349 = vld [vmem:[%s16 + $0x1c] sm:$0xf]
    %v350 = vld [vmem:[%s16 + $0x20] sm:$0xf]
    %v351 = vld [vmem:[%s16 + $0x24] sm:$0xf]
    %v352 = vld [vmem:[%s16 + $0x28] sm:$0xf]
    %v353 = vld [vmem:[%s16 + $0x2c] sm:$0xf]
    %v354 = vld [vmem:[%s17] sm:$0xf]
    %v355 = vld [vmem:[%s17 + $0x4] sm:$0xf]
    %v356 = vld [vmem:[%s17 + $0x8] sm:$0xf]
    %v357 = vld [vmem:[%s17 + $0xc] sm:$0xf]
    %v358 = vld [vmem:[%s17 + $0x10] sm:$0xf]
    %v359 = vld [vmem:[%s17 + $0x14] sm:$0xf]
    %v360 = vld [vmem:[%s17 + $0x18] sm:$0xf]
    %v361 = vld [vmem:[%s17 + $0x1c] sm:$0xf]
    %v362 = vld [vmem:[%s17 + $0x20] sm:$0xf]
    %v363 = vld [vmem:[%s17 + $0x24] sm:$0xf]
    %v364 = vld [vmem:[%s17 + $0x28] sm:$0xf]
    %v365 = vld [vmem:[%s17 + $0x2c] sm:$0xf]
    %v366 = vld [vmem:[#allocation20] sm:$0xf]
    %v367 = vld [vmem:[#allocation20 + $0x4] sm:$0xf]
    %v368 = vld [vmem:[#allocation20 + $0x8] sm:$0xf]
    %v369 = vld [vmem:[#allocation20 + $0xc] sm:$0xf]
    %v370 = vld [vmem:[#allocation20 + $0x10] sm:$0xf]
    %v371 = vld [vmem:[#allocation20 + $0x14] sm:$0xf]
    %v372 = vld [vmem:[#allocation20 + $0x18] sm:$0xf]
    %v373 = vld [vmem:[#allocation20 + $0x1c] sm:$0xf]
    %v374 = vld [vmem:[%s0] sm:$0xff]
    %v375 = vld [vmem:[%s0 + $0x8] sm:$0xff]
    %v376 = vld [vmem:[%s0 + $0x10] sm:$0xff]
    %v377 = vld [vmem:[%s0 + $0x18] sm:$0xff]
    %v378 = vld [vmem:[%s0 + $0x20] sm:$0xff]
    %v379 = vld [vmem:[%s0 + $0x28] sm:$0xff]
    %v380 = vld [vmem:[%s0 + $0x30] sm:$0xff]
    %v381 = vld [vmem:[%s0 + $0x38] sm:$0xff]
    %v382 = vld [vmem:[%s1] sm:$0xff]
    %v383 = vld [vmem:[%s1 + $0x8] sm:$0xff]
    %v384 = vld [vmem:[%s1 + $0x10] sm:$0xff]
    %v385 = vld [vmem:[%s1 + $0x18] sm:$0xff]
    %v386 = vld [vmem:[%s1 + $0x20] sm:$0xff]
    %v387 = vld [vmem:[%s1 + $0x28] sm:$0xff]
    %v388 = vld [vmem:[%s1 + $0x30] sm:$0xff]
    %v389 = vld [vmem:[%s1 + $0x38] sm:$0xff]
    %v390 = vpack.c.bf16 %v375, %v374
    %v391 = vpack.c.bf16 %v377, %v376
    %v392 = vpack.c.bf16 %v379, %v378
    %v393 = vpack.c.bf16 %v381, %v380
    %vm394 = vcmask 31744
    %v396 = vsel %vm394, %v390, 0
    %v399 = vsel %vm394, %v391, 0
    %v402 = vsel %vm394, %v392, 0
    %v405 = vsel %vm394, %v393, 0
    %vm407 = vcmask 1041408
    %v409 = vsel %vm407, %v249, 0
    %411 = vmatpush.bf16.msra.mxu0 0
    %412 = vmatpush.bf16.msra.mxu0 0
    %413 = vmatpush.bf16.msra.mxu0 0
    %414 = vmatpush.bf16.msra.mxu0 0
    %415 = vmatpush.bf16.msra.mxu0 0
    %416 = vmatpush.bf16.msra.mxu0 0
    %417 = vmatpush.bf16.msra.mxu0 0
    %418 = vmatpush.bf16.msra.mxu0 %v409
    %419 = vmatmul.bf16.gmra.mxu0 %v396
    %v420 = vpop.f32.mrf.mxu0
    %v421 = vadd.f32 0.0, %v420
    %v422 = vpop.f32.mrf.mxu0
    %v423 = vadd.f32 0.0, %v422
    %424 = vmatmul.bf16.gmra.mxu0 %v399
    %v425 = vpop.f32.mrf.mxu0
    %v426 = vadd.f32 0.0, %v425
    %v427 = vpop.f32.mrf.mxu0
    %v428 = vadd.f32 0.0, %v427
    %429 = vmatmul.bf16.gmra.mxu0 %v402
    %v430 = vpop.f32.mrf.mxu0
    %v431 = vadd.f32 0.0, %v430
    %v432 = vpop.f32.mrf.mxu0
    %v433 = vadd.f32 0.0, %v432
    %434 = vmatmul.bf16.gmra.mxu0 %v405
    %v435 = vpop.f32.mrf.mxu0
    %v436 = vadd.f32 0.0, %v435
    %v437 = vpop.f32.mrf.mxu0
    %v438 = vadd.f32 0.0, %v437
    %439 = vdwg.mxu0
    %vm440 = vcmask 261120
    %v441 = vsel %vm440, %v421, 0.0
    %v442 = vsel %vm440, %v423, 0.0
    %v443 = vadd.f32 %v441, %v442
    %v444 = vsel %vm440, %v426, 0.0
    %v445 = vadd.f32 %v443, %v444
    %v446 = vsel %vm440, %v428, 0.0
    %v447 = vadd.f32 %v445, %v446
    %v448 = vsel %vm440, %v431, 0.0
    %v449 = vadd.f32 %v447, %v448
    %v450 = vsel %vm440, %v433, 0.0
    %v451 = vadd.f32 %v449, %v450
    %v452 = vsel %vm440, %v436, 0.0
    %v453 = vadd.f32 %v451, %v452
    %v454 = vsel %vm440, %v438, 0.0
    %v455 = vadd.f32 %v453, %v454
    %v456 = vrot.slane %v455, 4
    %v457 = vadd.f32 %v455, %v456
    %v458 = vrot.slane %v457, 2
    %v459 = vadd.f32 %v457, %v458
    %v460 = vrot.slane %v459, 1
    %v461 = vadd.f32 %v459, %v460
    %v462 = vrcp.pop 64.0
    %v463 = vmul.f32 64.0, %v462
    %v464 = vsub.f32 1.0, %v463
    %v465 = vmul.f32 %v462, %v464
    %v466 = vadd.f32 %v462, %v465
    %vm467 = vweird.f32 %v462
    %v468 = vsel %vm467, %v462, %v466
    %v469 = vmul.f32 %v461, %v468
    %v470 = vsub.f32 %v421, %v469
    %v471 = vsub.f32 %v423, %v469
    %v472 = vsub.f32 %v426, %v469
    %v473 = vsub.f32 %v428, %v469
    %v474 = vsub.f32 %v431, %v469
    %v475 = vsub.f32 %v433, %v469
    %v476 = vsub.f32 %v436, %v469
    %v477 = vsub.f32 %v438, %v469
    %v478 = vmul.f32 %v470, %v470
    %v479 = vmul.f32 %v471, %v471
    %v480 = vmul.f32 %v472, %v472
    %v481 = vmul.f32 %v473, %v473
    %v482 = vmul.f32 %v474, %v474
    %v483 = vmul.f32 %v475, %v475
    %v484 = vmul.f32 %v476, %v476
    %v485 = vmul.f32 %v477, %v477
    %v486 = vsel %vm440, %v478, 0.0
    %v487 = vsel %vm440, %v479, 0.0
    %v488 = vadd.f32 %v486, %v487
    %v489 = vsel %vm440, %v480, 0.0
    %v490 = vadd.f32 %v488, %v489
    %v491 = vsel %vm440, %v481, 0.0
    %v492 = vadd.f32 %v490, %v491
    %v493 = vsel %vm440, %v482, 0.0
    %v494 = vadd.f32 %v492, %v493
    %v495 = vsel %vm440, %v483, 0.0
    %v496 = vadd.f32 %v494, %v495
    %v497 = vsel %vm440, %v484, 0.0
    %v498 = vadd.f32 %v496, %v497
    %v499 = vsel %vm440, %v485, 0.0
    %v500 = vadd.f32 %v498, %v499
    %v501 = vrot.slane %v500, 4
    %v502 = vadd.f32 %v500, %v501
    %v503 = vrot.slane %v502, 2
    %v504 = vadd.f32 %v502, %v503
    %v505 = vrot.slane %v504, 1
    %v506 = vadd.f32 %v504, %v505
    %v507 = vmul.f32 %v506, %v468
    %v508 = vadd.f32 %v507, 1e-05
    %v509 = vrsqrt.pop %v508
    %v510 = vmul.f32 %v509, %v508
    %v511 = vmul.f32 %v510, %v509
    %v512 = vmul.f32 0.5, %v511
    %v513 = vsub.f32 1.5, %v512
    %v514 = vmul.f32 %v509, %v513
    %vm515 = vweird.f32 %v508
    %vm516 = vweird.f32 %v509
    %vm517 = vmor %vm515, %vm516
    %v518 = vsel %vm517, %v509, %v514
    %v519 = vmul.f32 %v470, %v518
    %v520 = vmul.f32 %v471, %v518
    %v521 = vmul.f32 %v472, %v518
    %v522 = vmul.f32 %v473, %v518
    %v523 = vmul.f32 %v474, %v518
    %v524 = vmul.f32 %v475, %v518
    %v525 = vmul.f32 %v476, %v518
    %v526 = vmul.f32 %v477, %v518
    %v527 = vmax.f32 %v519, 0.0
    %v528 = vmax.f32 %v520, 0.0
    %v529 = vmax.f32 %v521, 0.0
    %v530 = vmax.f32 %v522, 0.0
    %v531 = vmax.f32 %v523, 0.0
    %v532 = vmax.f32 %v524, 0.0
    %v533 = vmax.f32 %v525, 0.0
    %v534 = vmax.f32 %v526, 0.0
    %v535 = vpack.c.bf16 %v383, %v382
    %v536 = vpack.c.bf16 %v385, %v384
    %v537 = vpack.c.bf16 %v387, %v386
    %v538 = vpack.c.bf16 %v389, %v388
    %v540 = vsel %vm394, %v535, 0
    %v543 = vsel %vm394, %v536, 0
    %v546 = vsel %vm394, %v537, 0
    %v549 = vsel %vm394, %v538, 0
    %551 = vmatpush.bf16.msra.mxu0 0
    %552 = vmatpush.bf16.msra.mxu0 0
    %553 = vmatpush.bf16.msra.mxu0 0
    %554 = vmatpush.bf16.msra.mxu0 0
    %555 = vmatpush.bf16.msra.mxu0 0
    %556 = vmatpush.bf16.msra.mxu0 0
    %557 = vmatpush.bf16.msra.mxu0 0
    %558 = vmatpush.bf16.msra.mxu0 %v409
    %559 = vmatmul.bf16.gmra.mxu0 %v540
    %v560 = vpop.f32.mrf.mxu0
    %v561 = vadd.f32 0.0, %v560
    %v562 = vpop.f32.mrf.mxu0
    %v563 = vadd.f32 0.0, %v562
    %564 = vmatmul.bf16.gmra.mxu0 %v543
    %v565 = vpop.f32.mrf.mxu0
    %v566 = vadd.f32 0.0, %v565
    %v567 = vpop.f32.mrf.mxu0
    %v568 = vadd.f32 0.0, %v567
    %569 = vmatmul.bf16.gmra.mxu0 %v546
    %v570 = vpop.f32.mrf.mxu0
    %v571 = vadd.f32 0.0, %v570
    %v572 = vpop.f32.mrf.mxu0
    %v573 = vadd.f32 0.0, %v572
    %574 = vmatmul.bf16.gmra.mxu0 %v549
    %v575 = vpop.f32.mrf.mxu0
    %v576 = vadd.f32 0.0, %v575
    %v577 = vpop.f32.mrf.mxu0
    %v578 = vadd.f32 0.0, %v577
    %579 = vdwg.mxu0
    %v580 = vsel %vm440, %v561, 0.0
    %v581 = vsel %vm440, %v563, 0.0
    %v582 = vadd.f32 %v580, %v581
    %v583 = vsel %vm440, %v566, 0.0
    %v584 = vadd.f32 %v582, %v583
    %v585 = vsel %vm440, %v568, 0.0
    %v586 = vadd.f32 %v584, %v585
    %v587 = vsel %vm440, %v571, 0.0
    %v588 = vadd.f32 %v586, %v587
    %v589 = vsel %vm440, %v573, 0.0
    %v590 = vadd.f32 %v588, %v589
    %v591 = vsel %vm440, %v576, 0.0
    %v592 = vadd.f32 %v590, %v591
    %v593 = vsel %vm440, %v578, 0.0
    %v594 = vadd.f32 %v592, %v593
    %v595 = vrot.slane %v594, 4
    %v596 = vadd.f32 %v594, %v595
    %v597 = vrot.slane %v596, 2
    %v598 = vadd.f32 %v596, %v597
    %v599 = vrot.slane %v598, 1
    %v600 = vadd.f32 %v598, %v599
    %v601 = vmul.f32 %v600, %v468
    %v602 = vsub.f32 %v561, %v601
    %v603 = vsub.f32 %v563, %v601
    %v604 = vsub.f32 %v566, %v601
    %v605 = vsub.f32 %v568, %v601
    %v606 = vsub.f32 %v571, %v601
    %v607 = vsub.f32 %v573, %v601
    %v608 = vsub.f32 %v576, %v601
    %v609 = vsub.f32 %v578, %v601
    %v610 = vmul.f32 %v602, %v602
    %v611 = vmul.f32 %v603, %v603
    %v612 = vmul.f32 %v604, %v604
    %v613 = vmul.f32 %v605, %v605
    %v614 = vmul.f32 %v606, %v606
    %v615 = vmul.f32 %v607, %v607
    %v616 = vmul.f32 %v608, %v608
    %v617 = vmul.f32 %v609, %v609
    %v618 = vsel %vm440, %v610, 0.0
    %v619 = vsel %vm440, %v611, 0.0
    %v620 = vadd.f32 %v618, %v619
    %v621 = vsel %vm440, %v612, 0.0
    %v622 = vadd.f32 %v620, %v621
    %v623 = vsel %vm440, %v613, 0.0
    %v624 = vadd.f32 %v622, %v623
    %v625 = vsel %vm440, %v614, 0.0
    %v626 = vadd.f32 %v624, %v625
    %v627 = vsel %vm440, %v615, 0.0
    %v628 = vadd.f32 %v626, %v627
    %v629 = vsel %vm440, %v616, 0.0
    %v630 = vadd.f32 %v628, %v629
    %v631 = vsel %vm440, %v617, 0.0
    %v632 = vadd.f32 %v630, %v631
    %v633 = vrot.slane %v632, 4
    %v634 = vadd.f32 %v632, %v633
    %v635 = vrot.slane %v634, 2
    %v636 = vadd.f32 %v634, %v635
    %v637 = vrot.slane %v636, 1
    %v638 = vadd.f32 %v636, %v637
    %v639 = vmul.f32 %v638, %v468
    %v640 = vadd.f32 %v639, 1e-05
    %v641 = vrsqrt.pop %v640
    %v642 = vmul.f32 %v641, %v640
    %v643 = vmul.f32 %v642, %v641
    %v644 = vmul.f32 0.5, %v643
    %v645 = vsub.f32 1.5, %v644
    %v646 = vmul.f32 %v641, %v645
    %vm647 = vweird.f32 %v640
    %vm648 = vweird.f32 %v641
    %vm649 = vmor %vm647, %vm648
    %v650 = vsel %vm649, %v641, %v646
    %v651 = vmul.f32 %v602, %v650
    %v652 = vmul.f32 %v603, %v650
    %v653 = vmul.f32 %v604, %v650
    %v654 = vmul.f32 %v605, %v650
    %v655 = vmul.f32 %v606, %v650
    %v656 = vmul.f32 %v607, %v650
    %v657 = vmul.f32 %v608, %v650
    %v658 = vmul.f32 %v609, %v650
    %v659 = vmax.f32 %v651, 0.0
    %v660 = vmax.f32 %v652, 0.0
    %v661 = vmax.f32 %v653, 0.0
    %v662 = vmax.f32 %v654, 0.0
    %v663 = vmax.f32 %v655, 0.0
    %v664 = vmax.f32 %v656, 0.0
    %v665 = vmax.f32 %v657, 0.0
    %v666 = vmax.f32 %v658, 0.0
    %v667 = vpack.c.bf16 %v528, %v527
    %v668 = vpack.c.bf16 %v530, %v529
    %v669 = vpack.c.bf16 %v532, %v531
    %v670 = vpack.c.bf16 %v534, %v533
    %v675 = vunpack.c.l.b16 %v250
    %v676 = vunpack.c.l.b16 %v251
    %v677 = vunpack.c.l.b16 %v252
    %v678 = vunpack.c.l.b16 %v253
    %v679 = vpack.c.b16 %v676, %v675
    %v680 = vpack.c.b16 %v678, %v677
    %v684 = vsel %vm440, %v667, 0
    %v687 = vsel %vm440, %v668, 0
    %v690 = vsel %vm440, %v669, 0
    %v693 = vsel %vm440, %v670, 0
    %695 = vmatpush.bf16.msra.mxu0 0
    %696 = vmatpush.bf16.msra.mxu0 0
    %697 = vmatpush.bf16.msra.mxu0 0
    %698 = vmatpush.bf16.msra.mxu0 0
    %699 = vmatpush.bf16.msra.mxu0 0
    %700 = vmatpush.bf16.msra.mxu0 0
    %701 = vmatpush.bf16.msra.mxu0 %v680
    %702 = vmatpush.bf16.msra.mxu0 %v679
    %703 = vmatmul.bf16.gmra.mxu0 %v684
    %v704 = vpop.f32.mrf.mxu0
    %v705 = vadd.f32 0.0, %v704
    %v706 = vpop.f32.mrf.mxu0
    %v707 = vadd.f32 0.0, %v706
    %708 = vmatmul.bf16.gmra.mxu0 %v687
    %v709 = vpop.f32.mrf.mxu0
    %v710 = vadd.f32 0.0, %v709
    %v711 = vpop.f32.mrf.mxu0
    %v712 = vadd.f32 0.0, %v711
    %713 = vmatmul.bf16.gmra.mxu0 %v690
    %v714 = vpop.f32.mrf.mxu0
    %v715 = vadd.f32 0.0, %v714
    %v716 = vpop.f32.mrf.mxu0
    %v717 = vadd.f32 0.0, %v716
    %718 = vmatmul.bf16.gmra.mxu0 %v693
    %v719 = vpop.f32.mrf.mxu0
    %v720 = vadd.f32 0.0, %v719
    %v721 = vpop.f32.mrf.mxu0
    %v722 = vadd.f32 0.0, %v721
    %723 = vdwg.mxu0
    %v724 = vsel %vm440, %v705, 0.0
    %v725 = vsel %vm440, %v707, 0.0
    %v726 = vadd.f32 %v724, %v725
    %v727 = vsel %vm440, %v710, 0.0
    %v728 = vadd.f32 %v726, %v727
    %v729 = vsel %vm440, %v712, 0.0
    %v730 = vadd.f32 %v728, %v729
    %v731 = vsel %vm440, %v715, 0.0
    %v732 = vadd.f32 %v730, %v731
    %v733 = vsel %vm440, %v717, 0.0
    %v734 = vadd.f32 %v732, %v733
    %v735 = vsel %vm440, %v720, 0.0
    %v736 = vadd.f32 %v734, %v735
    %v737 = vsel %vm440, %v722, 0.0
    %v738 = vadd.f32 %v736, %v737
    %v739 = vrot.slane %v738, 4
    %v740 = vadd.f32 %v738, %v739
    %v741 = vrot.slane %v740, 2
    %v742 = vadd.f32 %v740, %v741
    %v743 = vrot.slane %v742, 1
    %v744 = vadd.f32 %v742, %v743
    %v745 = vmul.f32 %v744, %v468
    %v746 = vsub.f32 %v705, %v745
    %v747 = vsub.f32 %v707, %v745
    %v748 = vsub.f32 %v710, %v745
    %v749 = vsub.f32 %v712, %v745
    %v750 = vsub.f32 %v715, %v745
    %v751 = vsub.f32 %v717, %v745
    %v752 = vsub.f32 %v720, %v745
    %v753 = vsub.f32 %v722, %v745
    %v754 = vmul.f32 %v746, %v746
    %v755 = vmul.f32 %v747, %v747
    %v756 = vmul.f32 %v748, %v748
    %v757 = vmul.f32 %v749, %v749
    %v758 = vmul.f32 %v750, %v750
    %v759 = vmul.f32 %v751, %v751
    %v760 = vmul.f32 %v752, %v752
    %v761 = vmul.f32 %v753, %v753
    %v762 = vsel %vm440, %v754, 0.0
    %v763 = vsel %vm440, %v755, 0.0
    %v764 = vadd.f32 %v762, %v763
    %v765 = vsel %vm440, %v756, 0.0
    %v766 = vadd.f32 %v764, %v765
    %v767 = vsel %vm440, %v757, 0.0
    %v768 = vadd.f32 %v766, %v767
    %v769 = vsel %vm440, %v758, 0.0
    %v770 = vadd.f32 %v768, %v769
    %v771 = vsel %vm440, %v759, 0.0
    %v772 = vadd.f32 %v770, %v771
    %v773 = vsel %vm440, %v760, 0.0
    %v774 = vadd.f32 %v772, %v773
    %v775 = vsel %vm440, %v761, 0.0
    %v776 = vadd.f32 %v774, %v775
    %v777 = vrot.slane %v776, 4
    %v778 = vadd.f32 %v776, %v777
    %v779 = vrot.slane %v778, 2
    %v780 = vadd.f32 %v778, %v779
    %v781 = vrot.slane %v780, 1
    %v782 = vadd.f32 %v780, %v781
    %v783 = vmul.f32 %v782, %v468
    %v784 = vadd.f32 %v783, 1e-05
    %v785 = vrsqrt.pop %v784
    %v786 = vmul.f32 %v785, %v784
    %v787 = vmul.f32 %v786, %v785
    %v788 = vmul.f32 0.5, %v787
    %v789 = vsub.f32 1.5, %v788
    %v790 = vmul.f32 %v785, %v789
    %vm791 = vweird.f32 %v784
    %vm792 = vweird.f32 %v785
    %vm793 = vmor %vm791, %vm792
    %v794 = vsel %vm793, %v785, %v790
    %v795 = vmul.f32 %v746, %v794
    %v796 = vmul.f32 %v747, %v794
    %v797 = vmul.f32 %v748, %v794
    %v798 = vmul.f32 %v749, %v794
    %v799 = vmul.f32 %v750, %v794
    %v800 = vmul.f32 %v751, %v794
    %v801 = vmul.f32 %v752, %v794
    %v802 = vmul.f32 %v753, %v794
    %v803 = vmax.f32 %v795, 0.0
    %v804 = vmax.f32 %v796, 0.0
    %v805 = vmax.f32 %v797, 0.0
    %v806 = vmax.f32 %v798, 0.0
    %v807 = vmax.f32 %v799, 0.0
    %v808 = vmax.f32 %v800, 0.0
    %v809 = vmax.f32 %v801, 0.0
    %v810 = vmax.f32 %v802, 0.0
    %v811 = vpack.c.bf16 %v804, %v803
    %v812 = vpack.c.bf16 %v806, %v805
    %v813 = vpack.c.bf16 %v808, %v807
    %v814 = vpack.c.bf16 %v810, %v809
    %v819 = vunpack.c.l.b16 %v254
    %v820 = vunpack.c.l.b16 %v255
    %v821 = vunpack.c.l.b16 %v256
    %v822 = vunpack.c.l.b16 %v257
    %v823 = vpack.c.b16 %v820, %v819
    %v824 = vpack.c.b16 %v822, %v821
    %v828 = vsel %vm440, %v811, 0
    %v831 = vsel %vm440, %v812, 0
    %v834 = vsel %vm440, %v813, 0
    %v837 = vsel %vm440, %v814, 0
    %839 = vmatpush.bf16.msra.mxu0 0
    %840 = vmatpush.bf16.msra.mxu0 0
    %841 = vmatpush.bf16.msra.mxu0 0
    %842 = vmatpush.bf16.msra.mxu0 0
    %843 = vmatpush.bf16.msra.mxu0 0
    %844 = vmatpush.bf16.msra.mxu0 0
    %845 = vmatpush.bf16.msra.mxu0 %v824
    %846 = vmatpush.bf16.msra.mxu0 %v823
    %847 = vmatmul.bf16.gmra.mxu0 %v828
    %v848 = vpop.f32.mrf.mxu0
    %v849 = vadd.f32 0.0, %v848
    %v850 = vpop.f32.mrf.mxu0
    %v851 = vadd.f32 0.0, %v850
    %852 = vmatmul.bf16.gmra.mxu0 %v831
    %v853 = vpop.f32.mrf.mxu0
    %v854 = vadd.f32 0.0, %v853
    %v855 = vpop.f32.mrf.mxu0
    %v856 = vadd.f32 0.0, %v855
    %857 = vmatmul.bf16.gmra.mxu0 %v834
    %v858 = vpop.f32.mrf.mxu0
    %v859 = vadd.f32 0.0, %v858
    %v860 = vpop.f32.mrf.mxu0
    %v861 = vadd.f32 0.0, %v860
    %862 = vmatmul.bf16.gmra.mxu0 %v837
    %v863 = vpop.f32.mrf.mxu0
    %v864 = vadd.f32 0.0, %v863
    %v865 = vpop.f32.mrf.mxu0
    %v866 = vadd.f32 0.0, %v865
    %867 = vdwg.mxu0
    %vm868 = vcmask 523264
    %v869 = vsel %vm868, %v849, 0.0
    %v870 = vsel %vm868, %v851, 0.0
    %v871 = vadd.f32 %v869, %v870
    %v872 = vsel %vm868, %v854, 0.0
    %v873 = vadd.f32 %v871, %v872
    %v874 = vsel %vm868, %v856, 0.0
    %v875 = vadd.f32 %v873, %v874
    %v876 = vsel %vm868, %v859, 0.0
    %v877 = vadd.f32 %v875, %v876
    %v878 = vsel %vm868, %v861, 0.0
    %v879 = vadd.f32 %v877, %v878
    %v880 = vsel %vm868, %v864, 0.0
    %v881 = vadd.f32 %v879, %v880
    %v882 = vsel %vm868, %v866, 0.0
    %v883 = vadd.f32 %v881, %v882
    %v884 = vrot.slane %v883, 4
    %v885 = vadd.f32 %v883, %v884
    %v886 = vrot.slane %v885, 2
    %v887 = vadd.f32 %v885, %v886
    %v888 = vrot.slane %v887, 1
    %v889 = vadd.f32 %v887, %v888
    %v890 = vmul.f32 %v889, %v468
    %v891 = vsub.f32 %v849, %v890
    %v892 = vsub.f32 %v851, %v890
    %v893 = vsub.f32 %v854, %v890
    %v894 = vsub.f32 %v856, %v890
    %v895 = vsub.f32 %v859, %v890
    %v896 = vsub.f32 %v861, %v890
    %v897 = vsub.f32 %v864, %v890
    %v898 = vsub.f32 %v866, %v890
    %v899 = vmul.f32 %v891, %v891
    %v900 = vmul.f32 %v892, %v892
    %v901 = vmul.f32 %v893, %v893
    %v902 = vmul.f32 %v894, %v894
    %v903 = vmul.f32 %v895, %v895
    %v904 = vmul.f32 %v896, %v896
    %v905 = vmul.f32 %v897, %v897
    %v906 = vmul.f32 %v898, %v898
    %v907 = vsel %vm868, %v899, 0.0
    %v908 = vsel %vm868, %v900, 0.0
    %v909 = vadd.f32 %v907, %v908
    %v910 = vsel %vm868, %v901, 0.0
    %v911 = vadd.f32 %v909, %v910
    %v912 = vsel %vm868, %v902, 0.0
    %v913 = vadd.f32 %v911, %v912
    %v914 = vsel %vm868, %v903, 0.0
    %v915 = vadd.f32 %v913, %v914
    %v916 = vsel %vm868, %v904, 0.0
    %v917 = vadd.f32 %v915, %v916
    %v918 = vsel %vm868, %v905, 0.0
    %v919 = vadd.f32 %v917, %v918
    %v920 = vsel %vm868, %v906, 0.0
    %v921 = vadd.f32 %v919, %v920
    %v922 = vrot.slane %v921, 4
    %v923 = vadd.f32 %v921, %v922
    %v924 = vrot.slane %v923, 2
    %v925 = vadd.f32 %v923, %v924
    %v926 = vrot.slane %v925, 1
    %v927 = vadd.f32 %v925, %v926
    %v928 = vmul.f32 %v927, %v468
    %v929 = vadd.f32 %v928, 1e-05
    %v930 = vrsqrt.pop %v929
    %v931 = vmul.f32 %v930, %v929
    %v932 = vmul.f32 %v931, %v930
    %v933 = vmul.f32 0.5, %v932
    %v934 = vsub.f32 1.5, %v933
    %v935 = vmul.f32 %v930, %v934
    %vm936 = vweird.f32 %v929
    %vm937 = vweird.f32 %v930
    %vm938 = vmor %vm936, %vm937
    %v939 = vsel %vm938, %v930, %v935
    %v940 = vmul.f32 %v891, %v939
    %v941 = vmul.f32 %v892, %v939
    %v942 = vmul.f32 %v893, %v939
    %v943 = vmul.f32 %v894, %v939
    %v944 = vmul.f32 %v895, %v939
    %v945 = vmul.f32 %v896, %v939
    %v946 = vmul.f32 %v897, %v939
    %v947 = vmul.f32 %v898, %v939
    %v948 = vmax.f32 %v940, 0.0
    %v949 = vmax.f32 %v941, 0.0
    %v950 = vmax.f32 %v942, 0.0
    %v951 = vmax.f32 %v943, 0.0
    %v952 = vmax.f32 %v944, 0.0
    %v953 = vmax.f32 %v945, 0.0
    %v954 = vmax.f32 %v946, 0.0
    %v955 = vmax.f32 %v947, 0.0
    %v956 = vpack.c.bf16 %v949, %v948
    %v957 = vpack.c.bf16 %v951, %v950
    %v958 = vpack.c.bf16 %v953, %v952
    %v959 = vpack.c.bf16 %v955, %v954
    %v968 = vunpack.c.l.b16 %v258
    %v969 = vunpack.c.l.b16 %v259
    %v970 = vunpack.c.l.b16 %v260
    %v971 = vunpack.c.l.b16 %v261
    %v972 = vunpack.c.l.b16 %v262
    %v973 = vunpack.c.l.b16 %v263
    %v974 = vunpack.c.l.b16 %v264
    %v975 = vunpack.c.l.b16 %v265
    %v976 = vpack.c.b16 %v969, %v968
    %v977 = vpack.c.b16 %v971, %v970
    %v978 = vpack.c.b16 %v973, %v972
    %v979 = vpack.c.b16 %v975, %v974
    %v985 = vsel %vm868, %v956, 0
    %v988 = vsel %vm868, %v957, 0
    %v991 = vsel %vm868, %v958, 0
    %v994 = vsel %vm868, %v959, 0
    %996 = vmatpush.bf16.msra.mxu0 0
    %997 = vmatpush.bf16.msra.mxu0 0
    %998 = vmatpush.bf16.msra.mxu0 0
    %999 = vmatpush.bf16.msra.mxu0 0
    %1000 = vmatpush.bf16.msra.mxu0 %v979
    %1001 = vmatpush.bf16.msra.mxu0 %v978
    %1002 = vmatpush.bf16.msra.mxu0 %v977
    %1003 = vmatpush.bf16.msra.mxu0 %v976
    %1004 = vmatmul.bf16.gmra.mxu0 %v985
    %v1005 = vpop.f32.mrf.mxu0
    %v1006 = vadd.f32 0.0, %v1005
    %v1007 = vpop.f32.mrf.mxu0
    %v1008 = vadd.f32 0.0, %v1007
    %1009 = vmatmul.bf16.gmra.mxu0 %v988
    %v1010 = vpop.f32.mrf.mxu0
    %v1011 = vadd.f32 0.0, %v1010
    %v1012 = vpop.f32.mrf.mxu0
    %v1013 = vadd.f32 0.0, %v1012
    %1014 = vmatmul.bf16.gmra.mxu0 %v991
    %v1015 = vpop.f32.mrf.mxu0
    %v1016 = vadd.f32 0.0, %v1015
    %v1017 = vpop.f32.mrf.mxu0
    %v1018 = vadd.f32 0.0, %v1017
    %1019 = vmatmul.bf16.gmra.mxu0 %v994
    %v1020 = vpop.f32.mrf.mxu0
    %v1021 = vadd.f32 0.0, %v1020
    %v1022 = vpop.f32.mrf.mxu0
    %v1023 = vadd.f32 0.0, %v1022
    %1024 = vdwg.mxu0
    %v1025 = vsel %vm868, %v1006, 0.0
    %v1026 = vsel %vm868, %v1008, 0.0
    %v1027 = vadd.f32 %v1025, %v1026
    %v1028 = vsel %vm868, %v1011, 0.0
    %v1029 = vadd.f32 %v1027, %v1028
    %v1030 = vsel %vm868, %v1013, 0.0
    %v1031 = vadd.f32 %v1029, %v1030
    %v1032 = vsel %vm868, %v1016, 0.0
    %v1033 = vadd.f32 %v1031, %v1032
    %v1034 = vsel %vm868, %v1018, 0.0
    %v1035 = vadd.f32 %v1033, %v1034
    %v1036 = vsel %vm868, %v1021, 0.0
    %v1037 = vadd.f32 %v1035, %v1036
    %v1038 = vsel %vm868, %v1023, 0.0
    %v1039 = vadd.f32 %v1037, %v1038
    %v1040 = vrot.slane %v1039, 4
    %v1041 = vadd.f32 %v1039, %v1040
    %v1042 = vrot.slane %v1041, 2
    %v1043 = vadd.f32 %v1041, %v1042
    %v1044 = vrot.slane %v1043, 1
    %v1045 = vadd.f32 %v1043, %v1044
    %v1046 = vmul.f32 %v1045, %v468
    %v1047 = vsub.f32 %v1006, %v1046
    %v1048 = vsub.f32 %v1008, %v1046
    %v1049 = vsub.f32 %v1011, %v1046
    %v1050 = vsub.f32 %v1013, %v1046
    %v1051 = vsub.f32 %v1016, %v1046
    %v1052 = vsub.f32 %v1018, %v1046
    %v1053 = vsub.f32 %v1021, %v1046
    %v1054 = vsub.f32 %v1023, %v1046
    %v1055 = vmul.f32 %v1047, %v1047
    %v1056 = vmul.f32 %v1048, %v1048
    %v1057 = vmul.f32 %v1049, %v1049
    %v1058 = vmul.f32 %v1050, %v1050
    %v1059 = vmul.f32 %v1051, %v1051
    %v1060 = vmul.f32 %v1052, %v1052
    %v1061 = vmul.f32 %v1053, %v1053
    %v1062 = vmul.f32 %v1054, %v1054
    %v1063 = vsel %vm868, %v1055, 0.0
    %v1064 = vsel %vm868, %v1056, 0.0
    %v1065 = vadd.f32 %v1063, %v1064
    %v1066 = vsel %vm868, %v1057, 0.0
    %v1067 = vadd.f32 %v1065, %v1066
    %v1068 = vsel %vm868, %v1058, 0.0
    %v1069 = vadd.f32 %v1067, %v1068
    %v1070 = vsel %vm868, %v1059, 0.0
    %v1071 = vadd.f32 %v1069, %v1070
    %v1072 = vsel %vm868, %v1060, 0.0
    %v1073 = vadd.f32 %v1071, %v1072
    %v1074 = vsel %vm868, %v1061, 0.0
    %v1075 = vadd.f32 %v1073, %v1074
    %v1076 = vsel %vm868, %v1062, 0.0
    %v1077 = vadd.f32 %v1075, %v1076
    %v1078 = vrot.slane %v1077, 4
    %v1079 = vadd.f32 %v1077, %v1078
    %v1080 = vrot.slane %v1079, 2
    %v1081 = vadd.f32 %v1079, %v1080
    %v1082 = vrot.slane %v1081, 1
    %v1083 = vadd.f32 %v1081, %v1082
    %v1084 = vmul.f32 %v1083, %v468
    %v1085 = vadd.f32 %v1084, 1e-05
    %v1086 = vrsqrt.pop %v1085
    %v1087 = vmul.f32 %v1086, %v1085
    %v1088 = vmul.f32 %v1087, %v1086
    %v1089 = vmul.f32 0.5, %v1088
    %v1090 = vsub.f32 1.5, %v1089
    %v1091 = vmul.f32 %v1086, %v1090
    %vm1092 = vweird.f32 %v1085
    %vm1093 = vweird.f32 %v1086
    %vm1094 = vmor %vm1092, %vm1093
    %v1095 = vsel %vm1094, %v1086, %v1091
    %v1096 = vmul.f32 %v1047, %v1095
    %v1097 = vmul.f32 %v1048, %v1095
    %v1098 = vmul.f32 %v1049, %v1095
    %v1099 = vmul.f32 %v1050, %v1095
    %v1100 = vmul.f32 %v1051, %v1095
    %v1101 = vmul.f32 %v1052, %v1095
    %v1102 = vmul.f32 %v1053, %v1095
    %v1103 = vmul.f32 %v1054, %v1095
    %v1108 = vunpack.c.l.b16 %v266
    %v1109 = vunpack.c.l.b16 %v267
    %v1110 = vunpack.c.l.b16 %v268
    %v1111 = vunpack.c.l.b16 %v269
    %v1112 = vpack.c.b16 %v1109, %v1108
    %v1113 = vpack.c.b16 %v1111, %v1110
    %1116 = vmatpush.bf16.msra.mxu0 0
    %1117 = vmatpush.bf16.msra.mxu0 0
    %1118 = vmatpush.bf16.msra.mxu0 0
    %1119 = vmatpush.bf16.msra.mxu0 0
    %1120 = vmatpush.bf16.msra.mxu0 0
    %1121 = vmatpush.bf16.msra.mxu0 0
    %1122 = vmatpush.bf16.msra.mxu0 %v1113
    %1123 = vmatpush.bf16.msra.mxu0 %v1112
    %1124 = vmatmul.bf16.gmra.mxu0 %v828
    %v1125 = vpop.f32.mrf.mxu0
    %v1126 = vadd.f32 0.0, %v1125
    %v1127 = vpop.f32.mrf.mxu0
    %v1128 = vadd.f32 0.0, %v1127
    %1129 = vmatmul.bf16.gmra.mxu0 %v831
    %v1130 = vpop.f32.mrf.mxu0
    %v1131 = vadd.f32 0.0, %v1130
    %v1132 = vpop.f32.mrf.mxu0
    %v1133 = vadd.f32 0.0, %v1132
    %1134 = vmatmul.bf16.gmra.mxu0 %v834
    %v1135 = vpop.f32.mrf.mxu0
    %v1136 = vadd.f32 0.0, %v1135
    %v1137 = vpop.f32.mrf.mxu0
    %v1138 = vadd.f32 0.0, %v1137
    %1139 = vmatmul.bf16.gmra.mxu0 %v837
    %v1140 = vpop.f32.mrf.mxu0
    %v1141 = vadd.f32 0.0, %v1140
    %v1142 = vpop.f32.mrf.mxu0
    %v1143 = vadd.f32 0.0, %v1142
    %1144 = vdwg.mxu0
    %v1145 = vsel %vm868, %v1126, 0.0
    %v1146 = vsel %vm868, %v1128, 0.0
    %v1147 = vadd.f32 %v1145, %v1146
    %v1148 = vsel %vm868, %v1131, 0.0
    %v1149 = vadd.f32 %v1147, %v1148
    %v1150 = vsel %vm868, %v1133, 0.0
    %v1151 = vadd.f32 %v1149, %v1150
    %v1152 = vsel %vm868, %v1136, 0.0
    %v1153 = vadd.f32 %v1151, %v1152
    %v1154 = vsel %vm868, %v1138, 0.0
    %v1155 = vadd.f32 %v1153, %v1154
    %v1156 = vsel %vm868, %v1141, 0.0
    %v1157 = vadd.f32 %v1155, %v1156
    %v1158 = vsel %vm868, %v1143, 0.0
    %v1159 = vadd.f32 %v1157, %v1158
    %v1160 = vrot.slane %v1159, 4
    %v1161 = vadd.f32 %v1159, %v1160
    %v1162 = vrot.slane %v1161, 2
    %v1163 = vadd.f32 %v1161, %v1162
    %v1164 = vrot.slane %v1163, 1
    %v1165 = vadd.f32 %v1163, %v1164
    %v1166 = vmul.f32 %v1165, %v468
    %v1167 = vsub.f32 %v1126, %v1166
    %v1168 = vsub.f32 %v1128, %v1166
    %v1169 = vsub.f32 %v1131, %v1166
    %v1170 = vsub.f32 %v1133, %v1166
    %v1171 = vsub.f32 %v1136, %v1166
    %v1172 = vsub.f32 %v1138, %v1166
    %v1173 = vsub.f32 %v1141, %v1166
    %v1174 = vsub.f32 %v1143, %v1166
    %v1175 = vmul.f32 %v1167, %v1167
    %v1176 = vmul.f32 %v1168, %v1168
    %v1177 = vmul.f32 %v1169, %v1169
    %v1178 = vmul.f32 %v1170, %v1170
    %v1179 = vmul.f32 %v1171, %v1171
    %v1180 = vmul.f32 %v1172, %v1172
    %v1181 = vmul.f32 %v1173, %v1173
    %v1182 = vmul.f32 %v1174, %v1174
    %v1183 = vsel %vm868, %v1175, 0.0
    %v1184 = vsel %vm868, %v1176, 0.0
    %v1185 = vadd.f32 %v1183, %v1184
    %v1186 = vsel %vm868, %v1177, 0.0
    %v1187 = vadd.f32 %v1185, %v1186
    %v1188 = vsel %vm868, %v1178, 0.0
    %v1189 = vadd.f32 %v1187, %v1188
    %v1190 = vsel %vm868, %v1179, 0.0
    %v1191 = vadd.f32 %v1189, %v1190
    %v1192 = vsel %vm868, %v1180, 0.0
    %v1193 = vadd.f32 %v1191, %v1192
    %v1194 = vsel %vm868, %v1181, 0.0
    %v1195 = vadd.f32 %v1193, %v1194
    %v1196 = vsel %vm868, %v1182, 0.0
    %v1197 = vadd.f32 %v1195, %v1196
    %v1198 = vrot.slane %v1197, 4
    %v1199 = vadd.f32 %v1197, %v1198
    %v1200 = vrot.slane %v1199, 2
    %v1201 = vadd.f32 %v1199, %v1200
    %v1202 = vrot.slane %v1201, 1
    %v1203 = vadd.f32 %v1201, %v1202
    %v1204 = vmul.f32 %v1203, %v468
    %v1205 = vadd.f32 %v1204, 1e-05
    %v1206 = vrsqrt.pop %v1205
    %v1207 = vmul.f32 %v1206, %v1205
    %v1208 = vmul.f32 %v1207, %v1206
    %v1209 = vmul.f32 0.5, %v1208
    %v1210 = vsub.f32 1.5, %v1209
    %v1211 = vmul.f32 %v1206, %v1210
    %vm1212 = vweird.f32 %v1205
    %vm1213 = vweird.f32 %v1206
    %vm1214 = vmor %vm1212, %vm1213
    %v1215 = vsel %vm1214, %v1206, %v1211
    %v1216 = vmul.f32 %v1167, %v1215
    %v1217 = vmul.f32 %v1168, %v1215
    %v1218 = vmul.f32 %v1169, %v1215
    %v1219 = vmul.f32 %v1170, %v1215
    %v1220 = vmul.f32 %v1171, %v1215
    %v1221 = vmul.f32 %v1172, %v1215
    %v1222 = vmul.f32 %v1173, %v1215
    %v1223 = vmul.f32 %v1174, %v1215
    %v1224 = vadd.f32 %v1096, %v1216
    %v1225 = vadd.f32 %v1097, %v1217
    %v1226 = vadd.f32 %v1098, %v1218
    %v1227 = vadd.f32 %v1099, %v1219
    %v1228 = vadd.f32 %v1100, %v1220
    %v1229 = vadd.f32 %v1101, %v1221
    %v1230 = vadd.f32 %v1102, %v1222
    %v1231 = vadd.f32 %v1103, %v1223
    %v1232 = vmax.f32 %v1224, 0.0
    %v1233 = vmax.f32 %v1225, 0.0
    %v1234 = vmax.f32 %v1226, 0.0
    %v1235 = vmax.f32 %v1227, 0.0
    %v1236 = vmax.f32 %v1228, 0.0
    %v1237 = vmax.f32 %v1229, 0.0
    %v1238 = vmax.f32 %v1230, 0.0
    %v1239 = vmax.f32 %v1231, 0.0
    %v1240 = vpack.c.bf16 %v1233, %v1232
    %v1241 = vpack.c.bf16 %v1235, %v1234
    %v1242 = vpack.c.bf16 %v1237, %v1236
    %v1243 = vpack.c.bf16 %v1239, %v1238
    %v1252 = vunpack.c.l.b16 %v270
    %v1253 = vunpack.c.l.b16 %v271
    %v1254 = vunpack.c.l.b16 %v272
    %v1255 = vunpack.c.l.b16 %v273
    %v1256 = vunpack.c.l.b16 %v274
    %v1257 = vunpack.c.l.b16 %v275
    %v1258 = vunpack.c.l.b16 %v276
    %v1259 = vunpack.c.l.b16 %v277
    %v1260 = vpack.c.b16 %v1253, %v1252
    %v1261 = vpack.c.b16 %v1255, %v1254
    %v1262 = vpack.c.b16 %v1257, %v1256
    %v1263 = vpack.c.b16 %v1259, %v1258
    %v1269 = vsel %vm868, %v1240, 0
    %v1272 = vsel %vm868, %v1241, 0
    %v1275 = vsel %vm868, %v1242, 0
    %v1278 = vsel %vm868, %v1243, 0
    %1280 = vmatpush.bf16.msra.mxu0 0
    %1281 = vmatpush.bf16.msra.mxu0 0
    %1282 = vmatpush.bf16.msra.mxu0 0
    %1283 = vmatpush.bf16.msra.mxu0 0
    %1284 = vmatpush.bf16.msra.mxu0 %v1263
    %1285 = vmatpush.bf16.msra.mxu0 %v1262
    %1286 = vmatpush.bf16.msra.mxu0 %v1261
    %1287 = vmatpush.bf16.msra.mxu0 %v1260
    %1288 = vmatmul.bf16.gmra.mxu0 %v1269
    %v1289 = vpop.f32.mrf.mxu0
    %v1290 = vadd.f32 0.0, %v1289
    %v1291 = vpop.f32.mrf.mxu0
    %v1292 = vadd.f32 0.0, %v1291
    %1293 = vmatmul.bf16.gmra.mxu0 %v1272
    %v1294 = vpop.f32.mrf.mxu0
    %v1295 = vadd.f32 0.0, %v1294
    %v1296 = vpop.f32.mrf.mxu0
    %v1297 = vadd.f32 0.0, %v1296
    %1298 = vmatmul.bf16.gmra.mxu0 %v1275
    %v1299 = vpop.f32.mrf.mxu0
    %v1300 = vadd.f32 0.0, %v1299
    %v1301 = vpop.f32.mrf.mxu0
    %v1302 = vadd.f32 0.0, %v1301
    %1303 = vmatmul.bf16.gmra.mxu0 %v1278
    %v1304 = vpop.f32.mrf.mxu0
    %v1305 = vadd.f32 0.0, %v1304
    %v1306 = vpop.f32.mrf.mxu0
    %v1307 = vadd.f32 0.0, %v1306
    %1308 = vdwg.mxu0
    %v1309 = vsel %vm868, %v1290, 0.0
    %v1310 = vsel %vm868, %v1292, 0.0
    %v1311 = vadd.f32 %v1309, %v1310
    %v1312 = vsel %vm868, %v1295, 0.0
    %v1313 = vadd.f32 %v1311, %v1312
    %v1314 = vsel %vm868, %v1297, 0.0
    %v1315 = vadd.f32 %v1313, %v1314
    %v1316 = vsel %vm868, %v1300, 0.0
    %v1317 = vadd.f32 %v1315, %v1316
    %v1318 = vsel %vm868, %v1302, 0.0
    %v1319 = vadd.f32 %v1317, %v1318
    %v1320 = vsel %vm868, %v1305, 0.0
    %v1321 = vadd.f32 %v1319, %v1320
    %v1322 = vsel %vm868, %v1307, 0.0
    %v1323 = vadd.f32 %v1321, %v1322
    %v1324 = vrot.slane %v1323, 4
    %v1325 = vadd.f32 %v1323, %v1324
    %v1326 = vrot.slane %v1325, 2
    %v1327 = vadd.f32 %v1325, %v1326
    %v1328 = vrot.slane %v1327, 1
    %v1329 = vadd.f32 %v1327, %v1328
    %v1330 = vmul.f32 %v1329, %v468
    %v1331 = vsub.f32 %v1290, %v1330
    %v1332 = vsub.f32 %v1292, %v1330
    %v1333 = vsub.f32 %v1295, %v1330
    %v1334 = vsub.f32 %v1297, %v1330
    %v1335 = vsub.f32 %v1300, %v1330
    %v1336 = vsub.f32 %v1302, %v1330
    %v1337 = vsub.f32 %v1305, %v1330
    %v1338 = vsub.f32 %v1307, %v1330
    %v1339 = vmul.f32 %v1331, %v1331
    %v1340 = vmul.f32 %v1332, %v1332
    %v1341 = vmul.f32 %v1333, %v1333
    %v1342 = vmul.f32 %v1334, %v1334
    %v1343 = vmul.f32 %v1335, %v1335
    %v1344 = vmul.f32 %v1336, %v1336
    %v1345 = vmul.f32 %v1337, %v1337
    %v1346 = vmul.f32 %v1338, %v1338
    %v1347 = vsel %vm868, %v1339, 0.0
    %v1348 = vsel %vm868, %v1340, 0.0
    %v1349 = vadd.f32 %v1347, %v1348
    %v1350 = vsel %vm868, %v1341, 0.0
    %v1351 = vadd.f32 %v1349, %v1350
    %v1352 = vsel %vm868, %v1342, 0.0
    %v1353 = vadd.f32 %v1351, %v1352
    %v1354 = vsel %vm868, %v1343, 0.0
    %v1355 = vadd.f32 %v1353, %v1354
    %v1356 = vsel %vm868, %v1344, 0.0
    %v1357 = vadd.f32 %v1355, %v1356
    %v1358 = vsel %vm868, %v1345, 0.0
    %v1359 = vadd.f32 %v1357, %v1358
    %v1360 = vsel %vm868, %v1346, 0.0
    %v1361 = vadd.f32 %v1359, %v1360
    %v1362 = vrot.slane %v1361, 4
    %v1363 = vadd.f32 %v1361, %v1362
    %v1364 = vrot.slane %v1363, 2
    %v1365 = vadd.f32 %v1363, %v1364
    %v1366 = vrot.slane %v1365, 1
    %v1367 = vadd.f32 %v1365, %v1366
    %v1368 = vmul.f32 %v1367, %v468
    %v1369 = vadd.f32 %v1368, 1e-05
    %v1370 = vrsqrt.pop %v1369
    %v1371 = vmul.f32 %v1370, %v1369
    %v1372 = vmul.f32 %v1371, %v1370
    %v1373 = vmul.f32 0.5, %v1372
    %v1374 = vsub.f32 1.5, %v1373
    %v1375 = vmul.f32 %v1370, %v1374
    %vm1376 = vweird.f32 %v1369
    %vm1377 = vweird.f32 %v1370
    %vm1378 = vmor %vm1376, %vm1377
    %v1379 = vsel %vm1378, %v1370, %v1375
    %v1380 = vmul.f32 %v1331, %v1379
    %v1381 = vmul.f32 %v1332, %v1379
    %v1382 = vmul.f32 %v1333, %v1379
    %v1383 = vmul.f32 %v1334, %v1379
    %v1384 = vmul.f32 %v1335, %v1379
    %v1385 = vmul.f32 %v1336, %v1379
    %v1386 = vmul.f32 %v1337, %v1379
    %v1387 = vmul.f32 %v1338, %v1379
    %v1388 = vmax.f32 %v1380, 0.0
    %v1389 = vmax.f32 %v1381, 0.0
    %v1390 = vmax.f32 %v1382, 0.0
    %v1391 = vmax.f32 %v1383, 0.0
    %v1392 = vmax.f32 %v1384, 0.0
    %v1393 = vmax.f32 %v1385, 0.0
    %v1394 = vmax.f32 %v1386, 0.0
    %v1395 = vmax.f32 %v1387, 0.0
    %v1396 = vpack.c.bf16 %v1389, %v1388
    %v1397 = vpack.c.bf16 %v1391, %v1390
    %v1398 = vpack.c.bf16 %v1393, %v1392
    %v1399 = vpack.c.bf16 %v1395, %v1394
    %v1408 = vunpack.c.l.b16 %v278
    %v1409 = vunpack.c.l.b16 %v279
    %v1410 = vunpack.c.l.b16 %v280
    %v1411 = vunpack.c.l.b16 %v281
    %v1412 = vunpack.c.l.b16 %v282
    %v1413 = vunpack.c.l.b16 %v283
    %v1414 = vunpack.c.l.b16 %v284
    %v1415 = vunpack.c.l.b16 %v285
    %v1416 = vpack.c.b16 %v1409, %v1408
    %v1417 = vpack.c.b16 %v1411, %v1410
    %v1418 = vpack.c.b16 %v1413, %v1412
    %v1419 = vpack.c.b16 %v1415, %v1414
    %v1425 = vsel %vm868, %v1396, 0
    %v1428 = vsel %vm868, %v1397, 0
    %v1431 = vsel %vm868, %v1398, 0
    %v1434 = vsel %vm868, %v1399, 0
    %1436 = vmatpush.bf16.msra.mxu0 0
    %1437 = vmatpush.bf16.msra.mxu0 0
    %1438 = vmatpush.bf16.msra.mxu0 0
    %1439 = vmatpush.bf16.msra.mxu0 0
    %1440 = vmatpush.bf16.msra.mxu0 %v1419
    %1441 = vmatpush.bf16.msra.mxu0 %v1418
    %1442 = vmatpush.bf16.msra.mxu0 %v1417
    %1443 = vmatpush.bf16.msra.mxu0 %v1416
    %1444 = vmatmul.bf16.gmra.mxu0 %v1425
    %v1445 = vpop.f32.mrf.mxu0
    %v1446 = vadd.f32 0.0, %v1445
    %v1447 = vpop.f32.mrf.mxu0
    %v1448 = vadd.f32 0.0, %v1447
    %1449 = vmatmul.bf16.gmra.mxu0 %v1428
    %v1450 = vpop.f32.mrf.mxu0
    %v1451 = vadd.f32 0.0, %v1450
    %v1452 = vpop.f32.mrf.mxu0
    %v1453 = vadd.f32 0.0, %v1452
    %1454 = vmatmul.bf16.gmra.mxu0 %v1431
    %v1455 = vpop.f32.mrf.mxu0
    %v1456 = vadd.f32 0.0, %v1455
    %v1457 = vpop.f32.mrf.mxu0
    %v1458 = vadd.f32 0.0, %v1457
    %1459 = vmatmul.bf16.gmra.mxu0 %v1434
    %v1460 = vpop.f32.mrf.mxu0
    %v1461 = vadd.f32 0.0, %v1460
    %v1462 = vpop.f32.mrf.mxu0
    %v1463 = vadd.f32 0.0, %v1462
    %1464 = vdwg.mxu0
    %v1465 = vsel %vm868, %v1446, 0.0
    %v1466 = vsel %vm868, %v1448, 0.0
    %v1467 = vadd.f32 %v1465, %v1466
    %v1468 = vsel %vm868, %v1451, 0.0
    %v1469 = vadd.f32 %v1467, %v1468
    %v1470 = vsel %vm868, %v1453, 0.0
    %v1471 = vadd.f32 %v1469, %v1470
    %v1472 = vsel %vm868, %v1456, 0.0
    %v1473 = vadd.f32 %v1471, %v1472
    %v1474 = vsel %vm868, %v1458, 0.0
    %v1475 = vadd.f32 %v1473, %v1474
    %v1476 = vsel %vm868, %v1461, 0.0
    %v1477 = vadd.f32 %v1475, %v1476
    %v1478 = vsel %vm868, %v1463, 0.0
    %v1479 = vadd.f32 %v1477, %v1478
    %v1480 = vrot.slane %v1479, 4
    %v1481 = vadd.f32 %v1479, %v1480
    %v1482 = vrot.slane %v1481, 2
    %v1483 = vadd.f32 %v1481, %v1482
    %v1484 = vrot.slane %v1483, 1
    %v1485 = vadd.f32 %v1483, %v1484
    %v1486 = vmul.f32 %v1485, %v468
    %v1487 = vsub.f32 %v1446, %v1486
    %v1488 = vsub.f32 %v1448, %v1486
    %v1489 = vsub.f32 %v1451, %v1486
    %v1490 = vsub.f32 %v1453, %v1486
    %v1491 = vsub.f32 %v1456, %v1486
    %v1492 = vsub.f32 %v1458, %v1486
    %v1493 = vsub.f32 %v1461, %v1486
    %v1494 = vsub.f32 %v1463, %v1486
    %v1495 = vmul.f32 %v1487, %v1487
    %v1496 = vmul.f32 %v1488, %v1488
    %v1497 = vmul.f32 %v1489, %v1489
    %v1498 = vmul.f32 %v1490, %v1490
    %v1499 = vmul.f32 %v1491, %v1491
    %v1500 = vmul.f32 %v1492, %v1492
    %v1501 = vmul.f32 %v1493, %v1493
    %v1502 = vmul.f32 %v1494, %v1494
    %v1503 = vsel %vm868, %v1495, 0.0
    %v1504 = vsel %vm868, %v1496, 0.0
    %v1505 = vadd.f32 %v1503, %v1504
    %v1506 = vsel %vm868, %v1497, 0.0
    %v1507 = vadd.f32 %v1505, %v1506
    %v1508 = vsel %vm868, %v1498, 0.0
    %v1509 = vadd.f32 %v1507, %v1508
    %v1510 = vsel %vm868, %v1499, 0.0
    %v1511 = vadd.f32 %v1509, %v1510
    %v1512 = vsel %vm868, %v1500, 0.0
    %v1513 = vadd.f32 %v1511, %v1512
    %v1514 = vsel %vm868, %v1501, 0.0
    %v1515 = vadd.f32 %v1513, %v1514
    %v1516 = vsel %vm868, %v1502, 0.0
    %v1517 = vadd.f32 %v1515, %v1516
    %v1518 = vrot.slane %v1517, 4
    %v1519 = vadd.f32 %v1517, %v1518
    %v1520 = vrot.slane %v1519, 2
    %v1521 = vadd.f32 %v1519, %v1520
    %v1522 = vrot.slane %v1521, 1
    %v1523 = vadd.f32 %v1521, %v1522
    %v1524 = vmul.f32 %v1523, %v468
    %v1525 = vadd.f32 %v1524, 1e-05
    %v1526 = vrsqrt.pop %v1525
    %v1527 = vmul.f32 %v1526, %v1525
    %v1528 = vmul.f32 %v1527, %v1526
    %v1529 = vmul.f32 0.5, %v1528
    %v1530 = vsub.f32 1.5, %v1529
    %v1531 = vmul.f32 %v1526, %v1530
    %vm1532 = vweird.f32 %v1525
    %vm1533 = vweird.f32 %v1526
    %vm1534 = vmor %vm1532, %vm1533
    %v1535 = vsel %vm1534, %v1526, %v1531
    %v1536 = vmul.f32 %v1487, %v1535
    %v1537 = vmul.f32 %v1488, %v1535
    %v1538 = vmul.f32 %v1489, %v1535
    %v1539 = vmul.f32 %v1490, %v1535
    %v1540 = vmul.f32 %v1491, %v1535
    %v1541 = vmul.f32 %v1492, %v1535
    %v1542 = vmul.f32 %v1493, %v1535
    %v1543 = vmul.f32 %v1494, %v1535
    %v1544 = vadd.f32 %v1536, %v1232
    %v1545 = vadd.f32 %v1537, %v1233
    %v1546 = vadd.f32 %v1538, %v1234
    %v1547 = vadd.f32 %v1539, %v1235
    %v1548 = vadd.f32 %v1540, %v1236
    %v1549 = vadd.f32 %v1541, %v1237
    %v1550 = vadd.f32 %v1542, %v1238
    %v1551 = vadd.f32 %v1543, %v1239
    %v1552 = vmax.f32 %v1544, 0.0
    %v1553 = vmax.f32 %v1545, 0.0
    %v1554 = vmax.f32 %v1546, 0.0
    %v1555 = vmax.f32 %v1547, 0.0
    %v1556 = vmax.f32 %v1548, 0.0
    %v1557 = vmax.f32 %v1549, 0.0
    %v1558 = vmax.f32 %v1550, 0.0
    %v1559 = vmax.f32 %v1551, 0.0
    %v1560 = vpack.c.bf16 %v660, %v659
    %v1561 = vpack.c.bf16 %v662, %v661
    %v1562 = vpack.c.bf16 %v664, %v663
    %v1563 = vpack.c.bf16 %v666, %v665
    %v1565 = vsel %vm440, %v1560, 0
    %v1568 = vsel %vm440, %v1561, 0
    %v1571 = vsel %vm440, %v1562, 0
    %v1574 = vsel %vm440, %v1563, 0
    %1576 = vmatpush.bf16.msra.mxu0 0
    %1577 = vmatpush.bf16.msra.mxu0 0
    %1578 = vmatpush.bf16.msra.mxu0 0
    %1579 = vmatpush.bf16.msra.mxu0 0
    %1580 = vmatpush.bf16.msra.mxu0 0
    %1581 = vmatpush.bf16.msra.mxu0 0
    %1582 = vmatpush.bf16.msra.mxu0 %v680
    %1583 = vmatpush.bf16.msra.mxu0 %v679
    %1584 = vmatmul.bf16.gmra.mxu0 %v1565
    %v1585 = vpop.f32.mrf.mxu0
    %v1586 = vadd.f32 0.0, %v1585
    %v1587 = vpop.f32.mrf.mxu0
    %v1588 = vadd.f32 0.0, %v1587
    %1589 = vmatmul.bf16.gmra.mxu0 %v1568
    %v1590 = vpop.f32.mrf.mxu0
    %v1591 = vadd.f32 0.0, %v1590
    %v1592 = vpop.f32.mrf.mxu0
    %v1593 = vadd.f32 0.0, %v1592
    %1594 = vmatmul.bf16.gmra.mxu0 %v1571
    %v1595 = vpop.f32.mrf.mxu0
    %v1596 = vadd.f32 0.0, %v1595
    %v1597 = vpop.f32.mrf.mxu0
    %v1598 = vadd.f32 0.0, %v1597
    %1599 = vmatmul.bf16.gmra.mxu0 %v1574
    %v1600 = vpop.f32.mrf.mxu0
    %v1601 = vadd.f32 0.0, %v1600
    %v1602 = vpop.f32.mrf.mxu0
    %v1603 = vadd.f32 0.0, %v1602
    %1604 = vdwg.mxu0
    %v1605 = vsel %vm440, %v1586, 0.0
    %v1606 = vsel %vm440, %v1588, 0.0
    %v1607 = vadd.f32 %v1605, %v1606
    %v1608 = vsel %vm440, %v1591, 0.0
    %v1609 = vadd.f32 %v1607, %v1608
    %v1610 = vsel %vm440, %v1593, 0.0
    %v1611 = vadd.f32 %v1609, %v1610
    %v1612 = vsel %vm440, %v1596, 0.0
    %v1613 = vadd.f32 %v1611, %v1612
    %v1614 = vsel %vm440, %v1598, 0.0
    %v1615 = vadd.f32 %v1613, %v1614
    %v1616 = vsel %vm440, %v1601, 0.0
    %v1617 = vadd.f32 %v1615, %v1616
    %v1618 = vsel %vm440, %v1603, 0.0
    %v1619 = vadd.f32 %v1617, %v1618
    %v1620 = vrot.slane %v1619, 4
    %v1621 = vadd.f32 %v1619, %v1620
    %v1622 = vrot.slane %v1621, 2
    %v1623 = vadd.f32 %v1621, %v1622
    %v1624 = vrot.slane %v1623, 1
    %v1625 = vadd.f32 %v1623, %v1624
    %v1626 = vmul.f32 %v1625, %v468
    %v1627 = vsub.f32 %v1586, %v1626
    %v1628 = vsub.f32 %v1588, %v1626
    %v1629 = vsub.f32 %v1591, %v1626
    %v1630 = vsub.f32 %v1593, %v1626
    %v1631 = vsub.f32 %v1596, %v1626
    %v1632 = vsub.f32 %v1598, %v1626
    %v1633 = vsub.f32 %v1601, %v1626
    %v1634 = vsub.f32 %v1603, %v1626
    %v1635 = vmul.f32 %v1627, %v1627
    %v1636 = vmul.f32 %v1628, %v1628
    %v1637 = vmul.f32 %v1629, %v1629
    %v1638 = vmul.f32 %v1630, %v1630
    %v1639 = vmul.f32 %v1631, %v1631
    %v1640 = vmul.f32 %v1632, %v1632
    %v1641 = vmul.f32 %v1633, %v1633
    %v1642 = vmul.f32 %v1634, %v1634
    %v1643 = vsel %vm440, %v1635, 0.0
    %v1644 = vsel %vm440, %v1636, 0.0
    %v1645 = vadd.f32 %v1643, %v1644
    %v1646 = vsel %vm440, %v1637, 0.0
    %v1647 = vadd.f32 %v1645, %v1646
    %v1648 = vsel %vm440, %v1638, 0.0
    %v1649 = vadd.f32 %v1647, %v1648
    %v1650 = vsel %vm440, %v1639, 0.0
    %v1651 = vadd.f32 %v1649, %v1650
    %v1652 = vsel %vm440, %v1640, 0.0
    %v1653 = vadd.f32 %v1651, %v1652
    %v1654 = vsel %vm440, %v1641, 0.0
    %v1655 = vadd.f32 %v1653, %v1654
    %v1656 = vsel %vm440, %v1642, 0.0
    %v1657 = vadd.f32 %v1655, %v1656
    %v1658 = vrot.slane %v1657, 4
    %v1659 = vadd.f32 %v1657, %v1658
    %v1660 = vrot.slane %v1659, 2
    %v1661 = vadd.f32 %v1659, %v1660
    %v1662 = vrot.slane %v1661, 1
    %v1663 = vadd.f32 %v1661, %v1662
    %v1664 = vmul.f32 %v1663, %v468
    %v1665 = vadd.f32 %v1664, 1e-05
    %v1666 = vrsqrt.pop %v1665
    %v1667 = vmul.f32 %v1666, %v1665
    %v1668 = vmul.f32 %v1667, %v1666
    %v1669 = vmul.f32 0.5, %v1668
    %v1670 = vsub.f32 1.5, %v1669
    %v1671 = vmul.f32 %v1666, %v1670
    %vm1672 = vweird.f32 %v1665
    %vm1673 = vweird.f32 %v1666
    %vm1674 = vmor %vm1672, %vm1673
    %v1675 = vsel %vm1674, %v1666, %v1671
    %v1676 = vmul.f32 %v1627, %v1675
    %v1677 = vmul.f32 %v1628, %v1675
    %v1678 = vmul.f32 %v1629, %v1675
    %v1679 = vmul.f32 %v1630, %v1675
    %v1680 = vmul.f32 %v1631, %v1675
    %v1681 = vmul.f32 %v1632, %v1675
    %v1682 = vmul.f32 %v1633, %v1675
    %v1683 = vmul.f32 %v1634, %v1675
    %v1684 = vmax.f32 %v1676, 0.0
    %v1685 = vmax.f32 %v1677, 0.0
    %v1686 = vmax.f32 %v1678, 0.0
    %v1687 = vmax.f32 %v1679, 0.0
    %v1688 = vmax.f32 %v1680, 0.0
    %v1689 = vmax.f32 %v1681, 0.0
    %v1690 = vmax.f32 %v1682, 0.0
    %v1691 = vmax.f32 %v1683, 0.0
    %v1692 = vpack.c.bf16 %v1685, %v1684
    %v1693 = vpack.c.bf16 %v1687, %v1686
    %v1694 = vpack.c.bf16 %v1689, %v1688
    %v1695 = vpack.c.bf16 %v1691, %v1690
    %v1697 = vsel %vm440, %v1692, 0
    %v1700 = vsel %vm440, %v1693, 0
    %v1703 = vsel %vm440, %v1694, 0
    %v1706 = vsel %vm440, %v1695, 0
    %1708 = vmatpush.bf16.msra.mxu0 0
    %1709 = vmatpush.bf16.msra.mxu0 0
    %1710 = vmatpush.bf16.msra.mxu0 0
    %1711 = vmatpush.bf16.msra.mxu0 0
    %1712 = vmatpush.bf16.msra.mxu0 0
    %1713 = vmatpush.bf16.msra.mxu0 0
    %1714 = vmatpush.bf16.msra.mxu0 %v824
    %1715 = vmatpush.bf16.msra.mxu0 %v823
    %1716 = vmatmul.bf16.gmra.mxu0 %v1697
    %v1717 = vpop.f32.mrf.mxu0
    %v1718 = vadd.f32 0.0, %v1717
    %v1719 = vpop.f32.mrf.mxu0
    %v1720 = vadd.f32 0.0, %v1719
    %1721 = vmatmul.bf16.gmra.mxu0 %v1700
    %v1722 = vpop.f32.mrf.mxu0
    %v1723 = vadd.f32 0.0, %v1722
    %v1724 = vpop.f32.mrf.mxu0
    %v1725 = vadd.f32 0.0, %v1724
    %1726 = vmatmul.bf16.gmra.mxu0 %v1703
    %v1727 = vpop.f32.mrf.mxu0
    %v1728 = vadd.f32 0.0, %v1727
    %v1729 = vpop.f32.mrf.mxu0
    %v1730 = vadd.f32 0.0, %v1729
    %1731 = vmatmul.bf16.gmra.mxu0 %v1706
    %v1732 = vpop.f32.mrf.mxu0
    %v1733 = vadd.f32 0.0, %v1732
    %v1734 = vpop.f32.mrf.mxu0
    %v1735 = vadd.f32 0.0, %v1734
    %1736 = vdwg.mxu0
    %v1737 = vsel %vm868, %v1718, 0.0
    %v1738 = vsel %vm868, %v1720, 0.0
    %v1739 = vadd.f32 %v1737, %v1738
    %v1740 = vsel %vm868, %v1723, 0.0
    %v1741 = vadd.f32 %v1739, %v1740
    %v1742 = vsel %vm868, %v1725, 0.0
    %v1743 = vadd.f32 %v1741, %v1742
    %v1744 = vsel %vm868, %v1728, 0.0
    %v1745 = vadd.f32 %v1743, %v1744
    %v1746 = vsel %vm868, %v1730, 0.0
    %v1747 = vadd.f32 %v1745, %v1746
    %v1748 = vsel %vm868, %v1733, 0.0
    %v1749 = vadd.f32 %v1747, %v1748
    %v1750 = vsel %vm868, %v1735, 0.0
    %v1751 = vadd.f32 %v1749, %v1750
    %v1752 = vrot.slane %v1751, 4
    %v1753 = vadd.f32 %v1751, %v1752
    %v1754 = vrot.slane %v1753, 2
    %v1755 = vadd.f32 %v1753, %v1754
    %v1756 = vrot.slane %v1755, 1
    %v1757 = vadd.f32 %v1755, %v1756
    %v1758 = vmul.f32 %v1757, %v468
    %v1759 = vsub.f32 %v1718, %v1758
    %v1760 = vsub.f32 %v1720, %v1758
    %v1761 = vsub.f32 %v1723, %v1758
    %v1762 = vsub.f32 %v1725, %v1758
    %v1763 = vsub.f32 %v1728, %v1758
    %v1764 = vsub.f32 %v1730, %v1758
    %v1765 = vsub.f32 %v1733, %v1758
    %v1766 = vsub.f32 %v1735, %v1758
    %v1767 = vmul.f32 %v1759, %v1759
    %v1768 = vmul.f32 %v1760, %v1760
    %v1769 = vmul.f32 %v1761, %v1761
    %v1770 = vmul.f32 %v1762, %v1762
    %v1771 = vmul.f32 %v1763, %v1763
    %v1772 = vmul.f32 %v1764, %v1764
    %v1773 = vmul.f32 %v1765, %v1765
    %v1774 = vmul.f32 %v1766, %v1766
    %v1775 = vsel %vm868, %v1767, 0.0
    %v1776 = vsel %vm868, %v1768, 0.0
    %v1777 = vadd.f32 %v1775, %v1776
    %v1778 = vsel %vm868, %v1769, 0.0
    %v1779 = vadd.f32 %v1777, %v1778
    %v1780 = vsel %vm868, %v1770, 0.0
    %v1781 = vadd.f32 %v1779, %v1780
    %v1782 = vsel %vm868, %v1771, 0.0
    %v1783 = vadd.f32 %v1781, %v1782
    %v1784 = vsel %vm868, %v1772, 0.0
    %v1785 = vadd.f32 %v1783, %v1784
    %v1786 = vsel %vm868, %v1773, 0.0
    %v1787 = vadd.f32 %v1785, %v1786
    %v1788 = vsel %vm868, %v1774, 0.0
    %v1789 = vadd.f32 %v1787, %v1788
    %v1790 = vrot.slane %v1789, 4
    %v1791 = vadd.f32 %v1789, %v1790
    %v1792 = vrot.slane %v1791, 2
    %v1793 = vadd.f32 %v1791, %v1792
    %v1794 = vrot.slane %v1793, 1
    %v1795 = vadd.f32 %v1793, %v1794
    %v1796 = vmul.f32 %v1795, %v468
    %v1797 = vadd.f32 %v1796, 1e-05
    %v1798 = vrsqrt.pop %v1797
    %v1799 = vmul.f32 %v1798, %v1797
    %v1800 = vmul.f32 %v1799, %v1798
    %v1801 = vmul.f32 0.5, %v1800
    %v1802 = vsub.f32 1.5, %v1801
    %v1803 = vmul.f32 %v1798, %v1802
    %vm1804 = vweird.f32 %v1797
    %vm1805 = vweird.f32 %v1798
    %vm1806 = vmor %vm1804, %vm1805
    %v1807 = vsel %vm1806, %v1798, %v1803
    %v1808 = vmul.f32 %v1759, %v1807
    %v1809 = vmul.f32 %v1760, %v1807
    %v1810 = vmul.f32 %v1761, %v1807
    %v1811 = vmul.f32 %v1762, %v1807
    %v1812 = vmul.f32 %v1763, %v1807
    %v1813 = vmul.f32 %v1764, %v1807
    %v1814 = vmul.f32 %v1765, %v1807
    %v1815 = vmul.f32 %v1766, %v1807
    %v1816 = vmax.f32 %v1808, 0.0
    %v1817 = vmax.f32 %v1809, 0.0
    %v1818 = vmax.f32 %v1810, 0.0
    %v1819 = vmax.f32 %v1811, 0.0
    %v1820 = vmax.f32 %v1812, 0.0
    %v1821 = vmax.f32 %v1813, 0.0
    %v1822 = vmax.f32 %v1814, 0.0
    %v1823 = vmax.f32 %v1815, 0.0
    %v1824 = vpack.c.bf16 %v1817, %v1816
    %v1825 = vpack.c.bf16 %v1819, %v1818
    %v1826 = vpack.c.bf16 %v1821, %v1820
    %v1827 = vpack.c.bf16 %v1823, %v1822
    %v1829 = vsel %vm868, %v1824, 0
    %v1832 = vsel %vm868, %v1825, 0
    %v1835 = vsel %vm868, %v1826, 0
    %v1838 = vsel %vm868, %v1827, 0
    %1840 = vmatpush.bf16.msra.mxu0 0
    %1841 = vmatpush.bf16.msra.mxu0 0
    %1842 = vmatpush.bf16.msra.mxu0 0
    %1843 = vmatpush.bf16.msra.mxu0 0
    %1844 = vmatpush.bf16.msra.mxu0 %v979
    %1845 = vmatpush.bf16.msra.mxu0 %v978
    %1846 = vmatpush.bf16.msra.mxu0 %v977
    %1847 = vmatpush.bf16.msra.mxu0 %v976
    %1848 = vmatmul.bf16.gmra.mxu0 %v1829
    %v1849 = vpop.f32.mrf.mxu0
    %v1850 = vadd.f32 0.0, %v1849
    %v1851 = vpop.f32.mrf.mxu0
    %v1852 = vadd.f32 0.0, %v1851
    %1853 = vmatmul.bf16.gmra.mxu0 %v1832
    %v1854 = vpop.f32.mrf.mxu0
    %v1855 = vadd.f32 0.0, %v1854
    %v1856 = vpop.f32.mrf.mxu0
    %v1857 = vadd.f32 0.0, %v1856
    %1858 = vmatmul.bf16.gmra.mxu0 %v1835
    %v1859 = vpop.f32.mrf.mxu0
    %v1860 = vadd.f32 0.0, %v1859
    %v1861 = vpop.f32.mrf.mxu0
    %v1862 = vadd.f32 0.0, %v1861
    %1863 = vmatmul.bf16.gmra.mxu0 %v1838
    %v1864 = vpop.f32.mrf.mxu0
    %v1865 = vadd.f32 0.0, %v1864
    %v1866 = vpop.f32.mrf.mxu0
    %v1867 = vadd.f32 0.0, %v1866
    %1868 = vdwg.mxu0
    %v1869 = vsel %vm868, %v1850, 0.0
    %v1870 = vsel %vm868, %v1852, 0.0
    %v1871 = vadd.f32 %v1869, %v1870
    %v1872 = vsel %vm868, %v1855, 0.0
    %v1873 = vadd.f32 %v1871, %v1872
    %v1874 = vsel %vm868, %v1857, 0.0
    %v1875 = vadd.f32 %v1873, %v1874
    %v1876 = vsel %vm868, %v1860, 0.0
    %v1877 = vadd.f32 %v1875, %v1876
    %v1878 = vsel %vm868, %v1862, 0.0
    %v1879 = vadd.f32 %v1877, %v1878
    %v1880 = vsel %vm868, %v1865, 0.0
    %v1881 = vadd.f32 %v1879, %v1880
    %v1882 = vsel %vm868, %v1867, 0.0
    %v1883 = vadd.f32 %v1881, %v1882
    %v1884 = vrot.slane %v1883, 4
    %v1885 = vadd.f32 %v1883, %v1884
    %v1886 = vrot.slane %v1885, 2
    %v1887 = vadd.f32 %v1885, %v1886
    %v1888 = vrot.slane %v1887, 1
    %v1889 = vadd.f32 %v1887, %v1888
    %v1890 = vmul.f32 %v1889, %v468
    %v1891 = vsub.f32 %v1850, %v1890
    %v1892 = vsub.f32 %v1852, %v1890
    %v1893 = vsub.f32 %v1855, %v1890
    %v1894 = vsub.f32 %v1857, %v1890
    %v1895 = vsub.f32 %v1860, %v1890
    %v1896 = vsub.f32 %v1862, %v1890
    %v1897 = vsub.f32 %v1865, %v1890
    %v1898 = vsub.f32 %v1867, %v1890
    %v1899 = vmul.f32 %v1891, %v1891
    %v1900 = vmul.f32 %v1892, %v1892
    %v1901 = vmul.f32 %v1893, %v1893
    %v1902 = vmul.f32 %v1894, %v1894
    %v1903 = vmul.f32 %v1895, %v1895
    %v1904 = vmul.f32 %v1896, %v1896
    %v1905 = vmul.f32 %v1897, %v1897
    %v1906 = vmul.f32 %v1898, %v1898
    %v1907 = vsel %vm868, %v1899, 0.0
    %v1908 = vsel %vm868, %v1900, 0.0
    %v1909 = vadd.f32 %v1907, %v1908
    %v1910 = vsel %vm868, %v1901, 0.0
    %v1911 = vadd.f32 %v1909, %v1910
    %v1912 = vsel %vm868, %v1902, 0.0
    %v1913 = vadd.f32 %v1911, %v1912
    %v1914 = vsel %vm868, %v1903, 0.0
    %v1915 = vadd.f32 %v1913, %v1914
    %v1916 = vsel %vm868, %v1904, 0.0
    %v1917 = vadd.f32 %v1915, %v1916
    %v1918 = vsel %vm868, %v1905, 0.0
    %v1919 = vadd.f32 %v1917, %v1918
    %v1920 = vsel %vm868, %v1906, 0.0
    %v1921 = vadd.f32 %v1919, %v1920
    %v1922 = vrot.slane %v1921, 4
    %v1923 = vadd.f32 %v1921, %v1922
    %v1924 = vrot.slane %v1923, 2
    %v1925 = vadd.f32 %v1923, %v1924
    %v1926 = vrot.slane %v1925, 1
    %v1927 = vadd.f32 %v1925, %v1926
    %v1928 = vmul.f32 %v1927, %v468
    %v1929 = vadd.f32 %v1928, 1e-05
    %v1930 = vrsqrt.pop %v1929
    %v1931 = vmul.f32 %v1930, %v1929
    %v1932 = vmul.f32 %v1931, %v1930
    %v1933 = vmul.f32 0.5, %v1932
    %v1934 = vsub.f32 1.5, %v1933
    %v1935 = vmul.f32 %v1930, %v1934
    %vm1936 = vweird.f32 %v1929
    %vm1937 = vweird.f32 %v1930
    %vm1938 = vmor %vm1936, %vm1937
    %v1939 = vsel %vm1938, %v1930, %v1935
    %v1940 = vmul.f32 %v1891, %v1939
    %v1941 = vmul.f32 %v1892, %v1939
    %v1942 = vmul.f32 %v1893, %v1939
    %v1943 = vmul.f32 %v1894, %v1939
    %v1944 = vmul.f32 %v1895, %v1939
    %v1945 = vmul.f32 %v1896, %v1939
    %v1946 = vmul.f32 %v1897, %v1939
    %v1947 = vmul.f32 %v1898, %v1939
    %1948 = vmatpush.bf16.msra.mxu0 0
    %1949 = vmatpush.bf16.msra.mxu0 0
    %1950 = vmatpush.bf16.msra.mxu0 0
    %1951 = vmatpush.bf16.msra.mxu0 0
    %1952 = vmatpush.bf16.msra.mxu0 0
    %1953 = vmatpush.bf16.msra.mxu0 0
    %1954 = vmatpush.bf16.msra.mxu0 %v1113
    %1955 = vmatpush.bf16.msra.mxu0 %v1112
    %1956 = vmatmul.bf16.gmra.mxu0 %v1697
    %v1957 = vpop.f32.mrf.mxu0
    %v1958 = vadd.f32 0.0, %v1957
    %v1959 = vpop.f32.mrf.mxu0
    %v1960 = vadd.f32 0.0, %v1959
    %1961 = vmatmul.bf16.gmra.mxu0 %v1700
    %v1962 = vpop.f32.mrf.mxu0
    %v1963 = vadd.f32 0.0, %v1962
    %v1964 = vpop.f32.mrf.mxu0
    %v1965 = vadd.f32 0.0, %v1964
    %1966 = vmatmul.bf16.gmra.mxu0 %v1703
    %v1967 = vpop.f32.mrf.mxu0
    %v1968 = vadd.f32 0.0, %v1967
    %v1969 = vpop.f32.mrf.mxu0
    %v1970 = vadd.f32 0.0, %v1969
    %1971 = vmatmul.bf16.gmra.mxu0 %v1706
    %v1972 = vpop.f32.mrf.mxu0
    %v1973 = vadd.f32 0.0, %v1972
    %v1974 = vpop.f32.mrf.mxu0
    %v1975 = vadd.f32 0.0, %v1974
    %1976 = vdwg.mxu0
    %v1977 = vsel %vm868, %v1958, 0.0
    %v1978 = vsel %vm868, %v1960, 0.0
    %v1979 = vadd.f32 %v1977, %v1978
    %v1980 = vsel %vm868, %v1963, 0.0
    %v1981 = vadd.f32 %v1979, %v1980
    %v1982 = vsel %vm868, %v1965, 0.0
    %v1983 = vadd.f32 %v1981, %v1982
    %v1984 = vsel %vm868, %v1968, 0.0
    %v1985 = vadd.f32 %v1983, %v1984
    %v1986 = vsel %vm868, %v1970, 0.0
    %v1987 = vadd.f32 %v1985, %v1986
    %v1988 = vsel %vm868, %v1973, 0.0
    %v1989 = vadd.f32 %v1987, %v1988
    %v1990 = vsel %vm868, %v1975, 0.0
    %v1991 = vadd.f32 %v1989, %v1990
    %v1992 = vrot.slane %v1991, 4
    %v1993 = vadd.f32 %v1991, %v1992
    %v1994 = vrot.slane %v1993, 2
    %v1995 = vadd.f32 %v1993, %v1994
    %v1996 = vrot.slane %v1995, 1
    %v1997 = vadd.f32 %v1995, %v1996
    %v1998 = vmul.f32 %v1997, %v468
    %v1999 = vsub.f32 %v1958, %v1998
    %v2000 = vsub.f32 %v1960, %v1998
    %v2001 = vsub.f32 %v1963, %v1998
    %v2002 = vsub.f32 %v1965, %v1998
    %v2003 = vsub.f32 %v1968, %v1998
    %v2004 = vsub.f32 %v1970, %v1998
    %v2005 = vsub.f32 %v1973, %v1998
    %v2006 = vsub.f32 %v1975, %v1998
    %v2007 = vmul.f32 %v1999, %v1999
    %v2008 = vmul.f32 %v2000, %v2000
    %v2009 = vmul.f32 %v2001, %v2001
    %v2010 = vmul.f32 %v2002, %v2002
    %v2011 = vmul.f32 %v2003, %v2003
    %v2012 = vmul.f32 %v2004, %v2004
    %v2013 = vmul.f32 %v2005, %v2005
    %v2014 = vmul.f32 %v2006, %v2006
    %v2015 = vsel %vm868, %v2007, 0.0
    %v2016 = vsel %vm868, %v2008, 0.0
    %v2017 = vadd.f32 %v2015, %v2016
    %v2018 = vsel %vm868, %v2009, 0.0
    %v2019 = vadd.f32 %v2017, %v2018
    %v2020 = vsel %vm868, %v2010, 0.0
    %v2021 = vadd.f32 %v2019, %v2020
    %v2022 = vsel %vm868, %v2011, 0.0
    %v2023 = vadd.f32 %v2021, %v2022
    %v2024 = vsel %vm868, %v2012, 0.0
    %v2025 = vadd.f32 %v2023, %v2024
    %v2026 = vsel %vm868, %v2013, 0.0
    %v2027 = vadd.f32 %v2025, %v2026
    %v2028 = vsel %vm868, %v2014, 0.0
    %v2029 = vadd.f32 %v2027, %v2028
    %v2030 = vrot.slane %v2029, 4
    %v2031 = vadd.f32 %v2029, %v2030
    %v2032 = vrot.slane %v2031, 2
    %v2033 = vadd.f32 %v2031, %v2032
    %v2034 = vrot.slane %v2033, 1
    %v2035 = vadd.f32 %v2033, %v2034
    %v2036 = vmul.f32 %v2035, %v468
    %v2037 = vadd.f32 %v2036, 1e-05
    %v2038 = vrsqrt.pop %v2037
    %v2039 = vmul.f32 %v2038, %v2037
    %v2040 = vmul.f32 %v2039, %v2038
    %v2041 = vmul.f32 0.5, %v2040
    %v2042 = vsub.f32 1.5, %v2041
    %v2043 = vmul.f32 %v2038, %v2042
    %vm2044 = vweird.f32 %v2037
    %vm2045 = vweird.f32 %v2038
    %vm2046 = vmor %vm2044, %vm2045
    %v2047 = vsel %vm2046, %v2038, %v2043
    %v2048 = vmul.f32 %v1999, %v2047
    %v2049 = vmul.f32 %v2000, %v2047
    %v2050 = vmul.f32 %v2001, %v2047
    %v2051 = vmul.f32 %v2002, %v2047
    %v2052 = vmul.f32 %v2003, %v2047
    %v2053 = vmul.f32 %v2004, %v2047
    %v2054 = vmul.f32 %v2005, %v2047
    %v2055 = vmul.f32 %v2006, %v2047
    %v2056 = vadd.f32 %v1940, %v2048
    %v2057 = vadd.f32 %v1941, %v2049
    %v2058 = vadd.f32 %v1942, %v2050
    %v2059 = vadd.f32 %v1943, %v2051
    %v2060 = vadd.f32 %v1944, %v2052
    %v2061 = vadd.f32 %v1945, %v2053
    %v2062 = vadd.f32 %v1946, %v2054
    %v2063 = vadd.f32 %v1947, %v2055
    %v2064 = vmax.f32 %v2056, 0.0
    %v2065 = vmax.f32 %v2057, 0.0
    %v2066 = vmax.f32 %v2058, 0.0
    %v2067 = vmax.f32 %v2059, 0.0
    %v2068 = vmax.f32 %v2060, 0.0
    %v2069 = vmax.f32 %v2061, 0.0
    %v2070 = vmax.f32 %v2062, 0.0
    %v2071 = vmax.f32 %v2063, 0.0
    %v2072 = vpack.c.bf16 %v2065, %v2064
    %v2073 = vpack.c.bf16 %v2067, %v2066
    %v2074 = vpack.c.bf16 %v2069, %v2068
    %v2075 = vpack.c.bf16 %v2071, %v2070
    %v2077 = vsel %vm868, %v2072, 0
    %v2080 = vsel %vm868, %v2073, 0
    %v2083 = vsel %vm868, %v2074, 0
    %v2086 = vsel %vm868, %v2075, 0
    %2088 = vmatpush.bf16.msra.mxu0 0
    %2089 = vmatpush.bf16.msra.mxu0 0
    %2090 = vmatpush.bf16.msra.mxu0 0
    %2091 = vmatpush.bf16.msra.mxu0 0
    %2092 = vmatpush.bf16.msra.mxu0 %v1263
    %2093 = vmatpush.bf16.msra.mxu0 %v1262
    %2094 = vmatpush.bf16.msra.mxu0 %v1261
    %2095 = vmatpush.bf16.msra.mxu0 %v1260
    %2096 = vmatmul.bf16.gmra.mxu0 %v2077
    %v2097 = vpop.f32.mrf.mxu0
    %v2098 = vadd.f32 0.0, %v2097
    %v2099 = vpop.f32.mrf.mxu0
    %v2100 = vadd.f32 0.0, %v2099
    %2101 = vmatmul.bf16.gmra.mxu0 %v2080
    %v2102 = vpop.f32.mrf.mxu0
    %v2103 = vadd.f32 0.0, %v2102
    %v2104 = vpop.f32.mrf.mxu0
    %v2105 = vadd.f32 0.0, %v2104
    %2106 = vmatmul.bf16.gmra.mxu0 %v2083
    %v2107 = vpop.f32.mrf.mxu0
    %v2108 = vadd.f32 0.0, %v2107
    %v2109 = vpop.f32.mrf.mxu0
    %v2110 = vadd.f32 0.0, %v2109
    %2111 = vmatmul.bf16.gmra.mxu0 %v2086
    %v2112 = vpop.f32.mrf.mxu0
    %v2113 = vadd.f32 0.0, %v2112
    %v2114 = vpop.f32.mrf.mxu0
    %v2115 = vadd.f32 0.0, %v2114
    %2116 = vdwg.mxu0
    %v2117 = vsel %vm868, %v2098, 0.0
    %v2118 = vsel %vm868, %v2100, 0.0
    %v2119 = vadd.f32 %v2117, %v2118
    %v2120 = vsel %vm868, %v2103, 0.0
    %v2121 = vadd.f32 %v2119, %v2120
    %v2122 = vsel %vm868, %v2105, 0.0
    %v2123 = vadd.f32 %v2121, %v2122
    %v2124 = vsel %vm868, %v2108, 0.0
    %v2125 = vadd.f32 %v2123, %v2124
    %v2126 = vsel %vm868, %v2110, 0.0
    %v2127 = vadd.f32 %v2125, %v2126
    %v2128 = vsel %vm868, %v2113, 0.0
    %v2129 = vadd.f32 %v2127, %v2128
    %v2130 = vsel %vm868, %v2115, 0.0
    %v2131 = vadd.f32 %v2129, %v2130
    %v2132 = vrot.slane %v2131, 4
    %v2133 = vadd.f32 %v2131, %v2132
    %v2134 = vrot.slane %v2133, 2
    %v2135 = vadd.f32 %v2133, %v2134
    %v2136 = vrot.slane %v2135, 1
    %v2137 = vadd.f32 %v2135, %v2136
    %v2138 = vmul.f32 %v2137, %v468
    %v2139 = vsub.f32 %v2098, %v2138
    %v2140 = vsub.f32 %v2100, %v2138
    %v2141 = vsub.f32 %v2103, %v2138
    %v2142 = vsub.f32 %v2105, %v2138
    %v2143 = vsub.f32 %v2108, %v2138
    %v2144 = vsub.f32 %v2110, %v2138
    %v2145 = vsub.f32 %v2113, %v2138
    %v2146 = vsub.f32 %v2115, %v2138
    %v2147 = vmul.f32 %v2139, %v2139
    %v2148 = vmul.f32 %v2140, %v2140
    %v2149 = vmul.f32 %v2141, %v2141
    %v2150 = vmul.f32 %v2142, %v2142
    %v2151 = vmul.f32 %v2143, %v2143
    %v2152 = vmul.f32 %v2144, %v2144
    %v2153 = vmul.f32 %v2145, %v2145
    %v2154 = vmul.f32 %v2146, %v2146
    %v2155 = vsel %vm868, %v2147, 0.0
    %v2156 = vsel %vm868, %v2148, 0.0
    %v2157 = vadd.f32 %v2155, %v2156
    %v2158 = vsel %vm868, %v2149, 0.0
    %v2159 = vadd.f32 %v2157, %v2158
    %v2160 = vsel %vm868, %v2150, 0.0
    %v2161 = vadd.f32 %v2159, %v2160
    %v2162 = vsel %vm868, %v2151, 0.0
    %v2163 = vadd.f32 %v2161, %v2162
    %v2164 = vsel %vm868, %v2152, 0.0
    %v2165 = vadd.f32 %v2163, %v2164
    %v2166 = vsel %vm868, %v2153, 0.0
    %v2167 = vadd.f32 %v2165, %v2166
    %v2168 = vsel %vm868, %v2154, 0.0
    %v2169 = vadd.f32 %v2167, %v2168
    %v2170 = vrot.slane %v2169, 4
    %v2171 = vadd.f32 %v2169, %v2170
    %v2172 = vrot.slane %v2171, 2
    %v2173 = vadd.f32 %v2171, %v2172
    %v2174 = vrot.slane %v2173, 1
    %v2175 = vadd.f32 %v2173, %v2174
    %v2176 = vmul.f32 %v2175, %v468
    %v2177 = vadd.f32 %v2176, 1e-05
    %v2178 = vrsqrt.pop %v2177
    %v2179 = vmul.f32 %v2178, %v2177
    %v2180 = vmul.f32 %v2179, %v2178
    %v2181 = vmul.f32 0.5, %v2180
    %v2182 = vsub.f32 1.5, %v2181
    %v2183 = vmul.f32 %v2178, %v2182
    %vm2184 = vweird.f32 %v2177
    %vm2185 = vweird.f32 %v2178
    %vm2186 = vmor %vm2184, %vm2185
    %v2187 = vsel %vm2186, %v2178, %v2183
    %v2188 = vmul.f32 %v2139, %v2187
    %v2189 = vmul.f32 %v2140, %v2187
    %v2190 = vmul.f32 %v2141, %v2187
    %v2191 = vmul.f32 %v2142, %v2187
    %v2192 = vmul.f32 %v2143, %v2187
    %v2193 = vmul.f32 %v2144, %v2187
    %v2194 = vmul.f32 %v2145, %v2187
    %v2195 = vmul.f32 %v2146, %v2187
    %v2196 = vmax.f32 %v2188, 0.0
    %v2197 = vmax.f32 %v2189, 0.0
    %v2198 = vmax.f32 %v2190, 0.0
    %v2199 = vmax.f32 %v2191, 0.0
    %v2200 = vmax.f32 %v2192, 0.0
    %v2201 = vmax.f32 %v2193, 0.0
    %v2202 = vmax.f32 %v2194, 0.0
    %v2203 = vmax.f32 %v2195, 0.0
    %v2204 = vpack.c.bf16 %v2197, %v2196
    %v2205 = vpack.c.bf16 %v2199, %v2198
    %v2206 = vpack.c.bf16 %v2201, %v2200
    %v2207 = vpack.c.bf16 %v2203, %v2202
    %v2209 = vsel %vm868, %v2204, 0
    %v2212 = vsel %vm868, %v2205, 0
    %v2215 = vsel %vm868, %v2206, 0
    %v2218 = vsel %vm868, %v2207, 0
    %2220 = vmatpush.bf16.msra.mxu0 0
    %2221 = vmatpush.bf16.msra.mxu0 0
    %2222 = vmatpush.bf16.msra.mxu0 0
    %2223 = vmatpush.bf16.msra.mxu0 0
    %2224 = vmatpush.bf16.msra.mxu0 %v1419
    %2225 = vmatpush.bf16.msra.mxu0 %v1418
    %2226 = vmatpush.bf16.msra.mxu0 %v1417
    %2227 = vmatpush.bf16.msra.mxu0 %v1416
    %2228 = vmatmul.bf16.gmra.mxu0 %v2209
    %v2229 = vpop.f32.mrf.mxu0
    %v2230 = vadd.f32 0.0, %v2229
    %v2231 = vpop.f32.mrf.mxu0
    %v2232 = vadd.f32 0.0, %v2231
    %2233 = vmatmul.bf16.gmra.mxu0 %v2212
    %v2234 = vpop.f32.mrf.mxu0
    %v2235 = vadd.f32 0.0, %v2234
    %v2236 = vpop.f32.mrf.mxu0
    %v2237 = vadd.f32 0.0, %v2236
    %2238 = vmatmul.bf16.gmra.mxu0 %v2215
    %v2239 = vpop.f32.mrf.mxu0
    %v2240 = vadd.f32 0.0, %v2239
    %v2241 = vpop.f32.mrf.mxu0
    %v2242 = vadd.f32 0.0, %v2241
    %2243 = vmatmul.bf16.gmra.mxu0 %v2218
    %v2244 = vpop.f32.mrf.mxu0
    %v2245 = vadd.f32 0.0, %v2244
    %v2246 = vpop.f32.mrf.mxu0
    %v2247 = vadd.f32 0.0, %v2246
    %2248 = vdwg.mxu0
    %v2249 = vsel %vm868, %v2230, 0.0
    %v2250 = vsel %vm868, %v2232, 0.0
    %v2251 = vadd.f32 %v2249, %v2250
    %v2252 = vsel %vm868, %v2235, 0.0
    %v2253 = vadd.f32 %v2251, %v2252
    %v2254 = vsel %vm868, %v2237, 0.0
    %v2255 = vadd.f32 %v2253, %v2254
    %v2256 = vsel %vm868, %v2240, 0.0
    %v2257 = vadd.f32 %v2255, %v2256
    %v2258 = vsel %vm868, %v2242, 0.0
    %v2259 = vadd.f32 %v2257, %v2258
    %v2260 = vsel %vm868, %v2245, 0.0
    %v2261 = vadd.f32 %v2259, %v2260
    %v2262 = vsel %vm868, %v2247, 0.0
    %v2263 = vadd.f32 %v2261, %v2262
    %v2264 = vrot.slane %v2263, 4
    %v2265 = vadd.f32 %v2263, %v2264
    %v2266 = vrot.slane %v2265, 2
    %v2267 = vadd.f32 %v2265, %v2266
    %v2268 = vrot.slane %v2267, 1
    %v2269 = vadd.f32 %v2267, %v2268
    %v2270 = vmul.f32 %v2269, %v468
    %v2271 = vsub.f32 %v2230, %v2270
    %v2272 = vsub.f32 %v2232, %v2270
    %v2273 = vsub.f32 %v2235, %v2270
    %v2274 = vsub.f32 %v2237, %v2270
    %v2275 = vsub.f32 %v2240, %v2270
    %v2276 = vsub.f32 %v2242, %v2270
    %v2277 = vsub.f32 %v2245, %v2270
    %v2278 = vsub.f32 %v2247, %v2270
    %v2279 = vmul.f32 %v2271, %v2271
    %v2280 = vmul.f32 %v2272, %v2272
    %v2281 = vmul.f32 %v2273, %v2273
    %v2282 = vmul.f32 %v2274, %v2274
    %v2283 = vmul.f32 %v2275, %v2275
    %v2284 = vmul.f32 %v2276, %v2276
    %v2285 = vmul.f32 %v2277, %v2277
    %v2286 = vmul.f32 %v2278, %v2278
    %v2287 = vsel %vm868, %v2279, 0.0
    %v2288 = vsel %vm868, %v2280, 0.0
    %v2289 = vadd.f32 %v2287, %v2288
    %v2290 = vsel %vm868, %v2281, 0.0
    %v2291 = vadd.f32 %v2289, %v2290
    %v2292 = vsel %vm868, %v2282, 0.0
    %v2293 = vadd.f32 %v2291, %v2292
    %v2294 = vsel %vm868, %v2283, 0.0
    %v2295 = vadd.f32 %v2293, %v2294
    %v2296 = vsel %vm868, %v2284, 0.0
    %v2297 = vadd.f32 %v2295, %v2296
    %v2298 = vsel %vm868, %v2285, 0.0
    %v2299 = vadd.f32 %v2297, %v2298
    %v2300 = vsel %vm868, %v2286, 0.0
    %v2301 = vadd.f32 %v2299, %v2300
    %v2302 = vrot.slane %v2301, 4
    %v2303 = vadd.f32 %v2301, %v2302
    %v2304 = vrot.slane %v2303, 2
    %v2305 = vadd.f32 %v2303, %v2304
    %v2306 = vrot.slane %v2305, 1
    %v2307 = vadd.f32 %v2305, %v2306
    %v2308 = vmul.f32 %v2307, %v468
    %v2309 = vadd.f32 %v2308, 1e-05
    %v2310 = vrsqrt.pop %v2309
    %v2311 = vmul.f32 %v2310, %v2309
    %v2312 = vmul.f32 %v2311, %v2310
    %v2313 = vmul.f32 0.5, %v2312
    %v2314 = vsub.f32 1.5, %v2313
    %v2315 = vmul.f32 %v2310, %v2314
    %vm2316 = vweird.f32 %v2309
    %vm2317 = vweird.f32 %v2310
    %vm2318 = vmor %vm2316, %vm2317
    %v2319 = vsel %vm2318, %v2310, %v2315
    %v2320 = vmul.f32 %v2271, %v2319
    %v2321 = vmul.f32 %v2272, %v2319
    %v2322 = vmul.f32 %v2273, %v2319
    %v2323 = vmul.f32 %v2274, %v2319
    %v2324 = vmul.f32 %v2275, %v2319
    %v2325 = vmul.f32 %v2276, %v2319
    %v2326 = vmul.f32 %v2277, %v2319
    %v2327 = vmul.f32 %v2278, %v2319
    %v2328 = vadd.f32 %v2320, %v2064
    %v2329 = vadd.f32 %v2321, %v2065
    %v2330 = vadd.f32 %v2322, %v2066
    %v2331 = vadd.f32 %v2323, %v2067
    %v2332 = vadd.f32 %v2324, %v2068
    %v2333 = vadd.f32 %v2325, %v2069
    %v2334 = vadd.f32 %v2326, %v2070
    %v2335 = vadd.f32 %v2327, %v2071
    %v2336 = vmax.f32 %v2328, 0.0
    %v2337 = vmax.f32 %v2329, 0.0
    %v2338 = vmax.f32 %v2330, 0.0
    %v2339 = vmax.f32 %v2331, 0.0
    %v2340 = vmax.f32 %v2332, 0.0
    %v2341 = vmax.f32 %v2333, 0.0
    %v2342 = vmax.f32 %v2334, 0.0
    %v2343 = vmax.f32 %v2335, 0.0
    %v2344 = vpack.c.bf16 %v2337, %v2336
    %v2345 = vpack.c.bf16 %v2339, %v2338
    %v2346 = vpack.c.bf16 %v2341, %v2340
    %v2347 = vpack.c.bf16 %v2343, %v2342
    %v2356 = vunpack.c.l.b16 %v286
    %v2357 = vunpack.c.l.b16 %v287
    %v2358 = vunpack.c.l.b16 %v288
    %v2359 = vunpack.c.l.b16 %v289
    %v2360 = vunpack.c.l.b16 %v290
    %v2361 = vunpack.c.l.b16 %v291
    %v2362 = vunpack.c.l.b16 %v292
    %v2363 = vunpack.c.l.b16 %v293
    %v2364 = vpack.c.b16 %v2357, %v2356
    %v2365 = vpack.c.b16 %v2359, %v2358
    %v2366 = vpack.c.b16 %v2361, %v2360
    %v2367 = vpack.c.b16 %v2363, %v2362
    %v2373 = vsel %vm868, %v2344, 0
    %v2376 = vsel %vm868, %v2345, 0
    %v2379 = vsel %vm868, %v2346, 0
    %v2382 = vsel %vm868, %v2347, 0
    %2384 = vmatpush.bf16.msra.mxu0 0
    %2385 = vmatpush.bf16.msra.mxu0 0
    %2386 = vmatpush.bf16.msra.mxu0 0
    %2387 = vmatpush.bf16.msra.mxu0 0
    %2388 = vmatpush.bf16.msra.mxu0 %v2367
    %2389 = vmatpush.bf16.msra.mxu0 %v2366
    %2390 = vmatpush.bf16.msra.mxu0 %v2365
    %2391 = vmatpush.bf16.msra.mxu0 %v2364
    %2392 = vmatmul.bf16.gmra.mxu0 %v2373
    %v2393 = vpop.f32.mrf.mxu0
    %v2394 = vadd.f32 0.0, %v2393
    %v2395 = vpop.f32.mrf.mxu0
    %v2396 = vadd.f32 0.0, %v2395
    %2397 = vmatmul.bf16.gmra.mxu0 %v2376
    %v2398 = vpop.f32.mrf.mxu0
    %v2399 = vadd.f32 0.0, %v2398
    %v2400 = vpop.f32.mrf.mxu0
    %v2401 = vadd.f32 0.0, %v2400
    %2402 = vmatmul.bf16.gmra.mxu0 %v2379
    %v2403 = vpop.f32.mrf.mxu0
    %v2404 = vadd.f32 0.0, %v2403
    %v2405 = vpop.f32.mrf.mxu0
    %v2406 = vadd.f32 0.0, %v2405
    %2407 = vmatmul.bf16.gmra.mxu0 %v2382
    %v2408 = vpop.f32.mrf.mxu0
    %v2409 = vadd.f32 0.0, %v2408
    %v2410 = vpop.f32.mrf.mxu0
    %v2411 = vadd.f32 0.0, %v2410
    %2412 = vdwg.mxu0
    %v2413 = vpack.c.bf16 %v1553, %v1552
    %v2414 = vpack.c.bf16 %v1555, %v1554
    %v2415 = vpack.c.bf16 %v1557, %v1556
    %v2416 = vpack.c.bf16 %v1559, %v1558
    %v2425 = vunpack.c.l.b16 %v294
    %v2426 = vunpack.c.l.b16 %v295
    %v2427 = vunpack.c.l.b16 %v296
    %v2428 = vunpack.c.l.b16 %v297
    %v2429 = vunpack.c.l.b16 %v298
    %v2430 = vunpack.c.l.b16 %v299
    %v2431 = vunpack.c.l.b16 %v300
    %v2432 = vunpack.c.l.b16 %v301
    %v2433 = vpack.c.b16 %v2426, %v2425
    %v2434 = vpack.c.b16 %v2428, %v2427
    %v2435 = vpack.c.b16 %v2430, %v2429
    %v2436 = vpack.c.b16 %v2432, %v2431
    %v2442 = vsel %vm868, %v2413, 0
    %v2445 = vsel %vm868, %v2414, 0
    %v2448 = vsel %vm868, %v2415, 0
    %v2451 = vsel %vm868, %v2416, 0
    %2453 = vmatpush.bf16.msra.mxu0 0
    %2454 = vmatpush.bf16.msra.mxu0 0
    %2455 = vmatpush.bf16.msra.mxu0 0
    %2456 = vmatpush.bf16.msra.mxu0 0
    %2457 = vmatpush.bf16.msra.mxu0 %v2436
    %2458 = vmatpush.bf16.msra.mxu0 %v2435
    %2459 = vmatpush.bf16.msra.mxu0 %v2434
    %2460 = vmatpush.bf16.msra.mxu0 %v2433
    %2461 = vmatmul.bf16.gmra.mxu0 %v2442
    %v2462 = vpop.f32.mrf.mxu0
    %v2463 = vadd.f32 0.0, %v2462
    %v2464 = vpop.f32.mrf.mxu0
    %v2465 = vadd.f32 0.0, %v2464
    %2466 = vmatmul.bf16.gmra.mxu0 %v2445
    %v2467 = vpop.f32.mrf.mxu0
    %v2468 = vadd.f32 0.0, %v2467
    %v2469 = vpop.f32.mrf.mxu0
    %v2470 = vadd.f32 0.0, %v2469
    %2471 = vmatmul.bf16.gmra.mxu0 %v2448
    %v2472 = vpop.f32.mrf.mxu0
    %v2473 = vadd.f32 0.0, %v2472
    %v2474 = vpop.f32.mrf.mxu0
    %v2475 = vadd.f32 0.0, %v2474
    %2476 = vmatmul.bf16.gmra.mxu0 %v2451
    %v2477 = vpop.f32.mrf.mxu0
    %v2478 = vadd.f32 0.0, %v2477
    %v2479 = vpop.f32.mrf.mxu0
    %v2480 = vadd.f32 0.0, %v2479
    %2481 = vdwg.mxu0
    %v2482 = vpack.c.bf16 %v2396, %v2394
    %v2483 = vpack.c.bf16 %v2401, %v2399
    %v2484 = vpack.c.bf16 %v2406, %v2404
    %v2485 = vpack.c.bf16 %v2411, %v2409
    %v2486 = vpack.c.bf16 %v2465, %v2463
    %v2487 = vpack.c.bf16 %v2470, %v2468
    %v2488 = vpack.c.bf16 %v2475, %v2473
    %v2489 = vpack.c.bf16 %v2480, %v2478
    %v2491 = vsel %vm868, %v2482, 0
    %v2494 = vsel %vm868, %v2483, 0
    %v2497 = vsel %vm868, %v2484, 0
    %v2500 = vsel %vm868, %v2485, 0
    %v2503 = vsel %vm868, %v2486, 0
    %v2506 = vsel %vm868, %v2487, 0
    %v2509 = vsel %vm868, %v2488, 0
    %v2512 = vsel %vm868, %v2489, 0
    %2514 = vmatpush.bf16.xpose.msra.mxu0 0
    %2515 = vmatpush.bf16.xpose.msra.mxu0 0
    %2516 = vmatpush.bf16.xpose.msra.mxu0 0
    %2517 = vmatpush.bf16.xpose.msra.mxu0 0
    %2518 = vmatpush.bf16.xpose.msra.mxu0 %v2512
    %2519 = vmatpush.bf16.xpose.msra.mxu0 %v2509
    %2520 = vmatpush.bf16.xpose.msra.mxu0 %v2506
    %2521 = vmatpush.bf16.xpose.msra.mxu0 %v2503
    %2522 = vmatmul.bf16.gmra.mxu0 %v2491
    %v2523 = vpop.f32.mrf.mxu0
    %v2524 = vadd.f32 0.0, %v2523
    %v2525 = vpop.f32.mrf.mxu0
    %v2526 = vadd.f32 0.0, %v2525
    %2527 = vmatmul.bf16.gmra.mxu0 %v2494
    %v2528 = vpop.f32.mrf.mxu0
    %v2529 = vadd.f32 0.0, %v2528
    %v2530 = vpop.f32.mrf.mxu0
    %v2531 = vadd.f32 0.0, %v2530
    %2532 = vmatmul.bf16.gmra.mxu0 %v2497
    %v2533 = vpop.f32.mrf.mxu0
    %v2534 = vadd.f32 0.0, %v2533
    %v2535 = vpop.f32.mrf.mxu0
    %v2536 = vadd.f32 0.0, %v2535
    %2537 = vmatmul.bf16.gmra.mxu0 %v2500
    %v2538 = vpop.f32.mrf.mxu0
    %v2539 = vadd.f32 0.0, %v2538
    %v2540 = vpop.f32.mrf.mxu0
    %v2541 = vadd.f32 0.0, %v2540
    %2542 = vdwg.mxu0
    %v2543 = vsel %vm868, %v2524, -inf
    %2544 = vmax.xlane.f32.xlu0 %v2543
    %v2545 = vpop.xlane.xlu0 %2544
    %v2546 = vsel %vm868, %v2526, -inf
    %2547 = vmax.xlane.f32.xlu0 %v2546
    %v2548 = vpop.xlane.xlu0 %2547
    %v2549 = vsel %vm868, %v2529, -inf
    %2550 = vmax.xlane.f32.xlu0 %v2549
    %v2551 = vpop.xlane.xlu0 %2550
    %v2552 = vsel %vm868, %v2531, -inf
    %2553 = vmax.xlane.f32.xlu0 %v2552
    %v2554 = vpop.xlane.xlu0 %2553
    %v2555 = vsel %vm868, %v2534, -inf
    %2556 = vmax.xlane.f32.xlu0 %v2555
    %v2557 = vpop.xlane.xlu0 %2556
    %v2558 = vsel %vm868, %v2536, -inf
    %2559 = vmax.xlane.f32.xlu0 %v2558
    %v2560 = vpop.xlane.xlu0 %2559
    %v2561 = vsel %vm868, %v2539, -inf
    %2562 = vmax.xlane.f32.xlu0 %v2561
    %v2563 = vpop.xlane.xlu0 %2562
    %v2564 = vsel %vm868, %v2541, -inf
    %2565 = vmax.xlane.f32.xlu0 %v2564
    %v2566 = vpop.xlane.xlu0 %2565
    %v2567 = vsub.f32 %v2524, %v2545
    %v2568 = vsub.f32 %v2526, %v2548
    %v2569 = vsub.f32 %v2529, %v2551
    %v2570 = vsub.f32 %v2531, %v2554
    %v2571 = vsub.f32 %v2534, %v2557
    %v2572 = vsub.f32 %v2536, %v2560
    %v2573 = vsub.f32 %v2539, %v2563
    %v2574 = vsub.f32 %v2541, %v2566
    %v2575 = vmul.f32 %v2567, 1.442695
    %v2576 = vpow.pop %v2575
    %v2577 = vmul.f32 %v2568, 1.442695
    %v2578 = vpow.pop %v2577
    %v2579 = vmul.f32 %v2569, 1.442695
    %v2580 = vpow.pop %v2579
    %v2581 = vmul.f32 %v2570, 1.442695
    %v2582 = vpow.pop %v2581
    %v2583 = vmul.f32 %v2571, 1.442695
    %v2584 = vpow.pop %v2583
    %v2585 = vmul.f32 %v2572, 1.442695
    %v2586 = vpow.pop %v2585
    %v2587 = vmul.f32 %v2573, 1.442695
    %v2588 = vpow.pop %v2587
    %v2589 = vmul.f32 %v2574, 1.442695
    %v2590 = vpow.pop %v2589
    %v2591 = vsel %vm868, %v2576, 0.0
    %2592 = vadd.xlane.f32.xlu0 %v2591
    %v2593 = vpop.xlane.xlu0 %2592
    %v2594 = vsel %vm868, %v2578, 0.0
    %2595 = vadd.xlane.f32.xlu0 %v2594
    %v2596 = vpop.xlane.xlu0 %2595
    %v2597 = vsel %vm868, %v2580, 0.0
    %2598 = vadd.xlane.f32.xlu0 %v2597
    %v2599 = vpop.xlane.xlu0 %2598
    %v2600 = vsel %vm868, %v2582, 0.0
    %2601 = vadd.xlane.f32.xlu0 %v2600
    %v2602 = vpop.xlane.xlu0 %2601
    %v2603 = vsel %vm868, %v2584, 0.0
    %2604 = vadd.xlane.f32.xlu0 %v2603
    %v2605 = vpop.xlane.xlu0 %2604
    %v2606 = vsel %vm868, %v2586, 0.0
    %2607 = vadd.xlane.f32.xlu0 %v2606
    %v2608 = vpop.xlane.xlu0 %2607
    %v2609 = vsel %vm868, %v2588, 0.0
    %2610 = vadd.xlane.f32.xlu0 %v2609
    %v2611 = vpop.xlane.xlu0 %2610
    %v2612 = vsel %vm868, %v2590, 0.0
    %2613 = vadd.xlane.f32.xlu0 %v2612
    %v2614 = vpop.xlane.xlu0 %2613
    %v2615 = vpack.c.bf16 %v2578, %v2576
    %v2616 = vpack.c.bf16 %v2582, %v2580
    %v2617 = vpack.c.bf16 %v2586, %v2584
    %v2618 = vpack.c.bf16 %v2590, %v2588
    %2623 = vrot.lane.b32.xlu0 %v2486, 64
    %v2624 = vpop.permute.xlu0 %2623
    %2625 = vrot.lane.b32.xlu0 %v2487, 64
    %v2626 = vpop.permute.xlu0 %2625
    %2627 = vrot.lane.b32.xlu0 %v2488, 64
    %v2628 = vpop.permute.xlu0 %2627
    %2629 = vrot.lane.b32.xlu0 %v2489, 64
    %v2630 = vpop.permute.xlu0 %2629
    %v2636 = vsel %vm868, %v2615, 0
    %v2639 = vsel %vm868, %v2616, 0
    %v2642 = vsel %vm868, %v2617, 0
    %v2645 = vsel %vm868, %v2618, 0
    %2647 = vmatpush.bf16.msra.mxu0 0
    %2648 = vmatpush.bf16.msra.mxu0 0
    %2649 = vmatpush.bf16.msra.mxu0 0
    %2650 = vmatpush.bf16.msra.mxu0 0
    %2651 = vmatpush.bf16.msra.mxu0 %v2630
    %2652 = vmatpush.bf16.msra.mxu0 %v2628
    %2653 = vmatpush.bf16.msra.mxu0 %v2626
    %2654 = vmatpush.bf16.msra.mxu0 %v2624
    %2655 = vmatmul.bf16.gmra.mxu0 %v2636
    %v2656 = vpop.f32.mrf.mxu0
    %v2657 = vadd.f32 0.0, %v2656
    %v2658 = vpop.f32.mrf.mxu0
    %v2659 = vadd.f32 0.0, %v2658
    %2660 = vmatmul.bf16.gmra.mxu0 %v2639
    %v2661 = vpop.f32.mrf.mxu0
    %v2662 = vadd.f32 0.0, %v2661
    %v2663 = vpop.f32.mrf.mxu0
    %v2664 = vadd.f32 0.0, %v2663
    %2665 = vmatmul.bf16.gmra.mxu0 %v2642
    %v2666 = vpop.f32.mrf.mxu0
    %v2667 = vadd.f32 0.0, %v2666
    %v2668 = vpop.f32.mrf.mxu0
    %v2669 = vadd.f32 0.0, %v2668
    %2670 = vmatmul.bf16.gmra.mxu0 %v2645
    %v2671 = vpop.f32.mrf.mxu0
    %v2672 = vadd.f32 0.0, %v2671
    %v2673 = vpop.f32.mrf.mxu0
    %v2674 = vadd.f32 0.0, %v2673
    %2675 = vdwg.mxu0
    %v2676 = vrcp.pop %v2593
    %v2677 = vrcp.pop %v2596
    %v2678 = vrcp.pop %v2599
    %v2679 = vrcp.pop %v2602
    %v2680 = vrcp.pop %v2605
    %v2681 = vrcp.pop %v2608
    %v2682 = vrcp.pop %v2611
    %v2683 = vrcp.pop %v2614
    %v2684 = vmul.f32 %v2657, %v2676
    %v2685 = vmul.f32 %v2659, %v2677
    %v2686 = vmul.f32 %v2662, %v2678
    %v2687 = vmul.f32 %v2664, %v2679
    %v2688 = vmul.f32 %v2667, %v2680
    %v2689 = vmul.f32 %v2669, %v2681
    %v2690 = vmul.f32 %v2672, %v2682
    %v2691 = vmul.f32 %v2674, %v2683
    %v2696 = vunpack.c.l.b16 %v302
    %v2697 = vunpack.c.l.b16 %v303
    %v2698 = vunpack.c.l.b16 %v304
    %v2699 = vunpack.c.l.b16 %v305
    %v2700 = vpack.c.b16 %v2697, %v2696
    %v2701 = vpack.c.b16 %v2699, %v2698
    %2704 = vmatpush.bf16.msra.mxu0 0
    %2705 = vmatpush.bf16.msra.mxu0 0
    %2706 = vmatpush.bf16.msra.mxu0 0
    %2707 = vmatpush.bf16.msra.mxu0 0
    %2708 = vmatpush.bf16.msra.mxu0 0
    %2709 = vmatpush.bf16.msra.mxu0 0
    %2710 = vmatpush.bf16.msra.mxu0 %v2701
    %2711 = vmatpush.bf16.msra.mxu0 %v2700
    %2712 = vmatmul.bf16.gmra.mxu0 %v1565
    %v2713 = vpop.f32.mrf.mxu0
    %v2714 = vadd.f32 0.0, %v2713
    %v2715 = vpop.f32.mrf.mxu0
    %v2716 = vadd.f32 0.0, %v2715
    %2717 = vmatmul.bf16.gmra.mxu0 %v1568
    %v2718 = vpop.f32.mrf.mxu0
    %v2719 = vadd.f32 0.0, %v2718
    %v2720 = vpop.f32.mrf.mxu0
    %v2721 = vadd.f32 0.0, %v2720
    %2722 = vmatmul.bf16.gmra.mxu0 %v1571
    %v2723 = vpop.f32.mrf.mxu0
    %v2724 = vadd.f32 0.0, %v2723
    %v2725 = vpop.f32.mrf.mxu0
    %v2726 = vadd.f32 0.0, %v2725
    %2727 = vmatmul.bf16.gmra.mxu0 %v1574
    %v2728 = vpop.f32.mrf.mxu0
    %v2729 = vadd.f32 0.0, %v2728
    %v2730 = vpop.f32.mrf.mxu0
    %v2731 = vadd.f32 0.0, %v2730
    %2732 = vdwg.mxu0
    %v2733 = vsel %vm868, %v2714, 0.0
    %v2734 = vsel %vm868, %v2716, 0.0
    %v2735 = vadd.f32 %v2733, %v2734
    %v2736 = vsel %vm868, %v2719, 0.0
    %v2737 = vadd.f32 %v2735, %v2736
    %v2738 = vsel %vm868, %v2721, 0.0
    %v2739 = vadd.f32 %v2737, %v2738
    %v2740 = vsel %vm868, %v2724, 0.0
    %v2741 = vadd.f32 %v2739, %v2740
    %v2742 = vsel %vm868, %v2726, 0.0
    %v2743 = vadd.f32 %v2741, %v2742
    %v2744 = vsel %vm868, %v2729, 0.0
    %v2745 = vadd.f32 %v2743, %v2744
    %v2746 = vsel %vm868, %v2731, 0.0
    %v2747 = vadd.f32 %v2745, %v2746
    %v2748 = vrot.slane %v2747, 4
    %v2749 = vadd.f32 %v2747, %v2748
    %v2750 = vrot.slane %v2749, 2
    %v2751 = vadd.f32 %v2749, %v2750
    %v2752 = vrot.slane %v2751, 1
    %v2753 = vadd.f32 %v2751, %v2752
    %v2754 = vmul.f32 %v2753, %v468
    %v2755 = vsub.f32 %v2714, %v2754
    %v2756 = vsub.f32 %v2716, %v2754
    %v2757 = vsub.f32 %v2719, %v2754
    %v2758 = vsub.f32 %v2721, %v2754
    %v2759 = vsub.f32 %v2724, %v2754
    %v2760 = vsub.f32 %v2726, %v2754
    %v2761 = vsub.f32 %v2729, %v2754
    %v2762 = vsub.f32 %v2731, %v2754
    %v2763 = vmul.f32 %v2755, %v2755
    %v2764 = vmul.f32 %v2756, %v2756
    %v2765 = vmul.f32 %v2757, %v2757
    %v2766 = vmul.f32 %v2758, %v2758
    %v2767 = vmul.f32 %v2759, %v2759
    %v2768 = vmul.f32 %v2760, %v2760
    %v2769 = vmul.f32 %v2761, %v2761
    %v2770 = vmul.f32 %v2762, %v2762
    %v2771 = vsel %vm868, %v2763, 0.0
    %v2772 = vsel %vm868, %v2764, 0.0
    %v2773 = vadd.f32 %v2771, %v2772
    %v2774 = vsel %vm868, %v2765, 0.0
    %v2775 = vadd.f32 %v2773, %v2774
    %v2776 = vsel %vm868, %v2766, 0.0
    %v2777 = vadd.f32 %v2775, %v2776
    %v2778 = vsel %vm868, %v2767, 0.0
    %v2779 = vadd.f32 %v2777, %v2778
    %v2780 = vsel %vm868, %v2768, 0.0
    %v2781 = vadd.f32 %v2779, %v2780
    %v2782 = vsel %vm868, %v2769, 0.0
    %v2783 = vadd.f32 %v2781, %v2782
    %v2784 = vsel %vm868, %v2770, 0.0
    %v2785 = vadd.f32 %v2783, %v2784
    %v2786 = vrot.slane %v2785, 4
    %v2787 = vadd.f32 %v2785, %v2786
    %v2788 = vrot.slane %v2787, 2
    %v2789 = vadd.f32 %v2787, %v2788
    %v2790 = vrot.slane %v2789, 1
    %v2791 = vadd.f32 %v2789, %v2790
    %v2792 = vmul.f32 %v2791, %v468
    %v2793 = vadd.f32 %v2792, 1e-05
    %v2794 = vrsqrt.pop %v2793
    %v2795 = vmul.f32 %v2794, %v2793
    %v2796 = vmul.f32 %v2795, %v2794
    %v2797 = vmul.f32 0.5, %v2796
    %v2798 = vsub.f32 1.5, %v2797
    %v2799 = vmul.f32 %v2794, %v2798
    %vm2800 = vweird.f32 %v2793
    %vm2801 = vweird.f32 %v2794
    %vm2802 = vmor %vm2800, %vm2801
    %v2803 = vsel %vm2802, %v2794, %v2799
    %v2804 = vmul.f32 %v2755, %v2803
    %v2805 = vmul.f32 %v2756, %v2803
    %v2806 = vmul.f32 %v2757, %v2803
    %v2807 = vmul.f32 %v2758, %v2803
    %v2808 = vmul.f32 %v2759, %v2803
    %v2809 = vmul.f32 %v2760, %v2803
    %v2810 = vmul.f32 %v2761, %v2803
    %v2811 = vmul.f32 %v2762, %v2803
    %v2812 = vmax.f32 %v2804, 0.0
    %v2813 = vmax.f32 %v2805, 0.0
    %v2814 = vmax.f32 %v2806, 0.0
    %v2815 = vmax.f32 %v2807, 0.0
    %v2816 = vmax.f32 %v2808, 0.0
    %v2817 = vmax.f32 %v2809, 0.0
    %v2818 = vmax.f32 %v2810, 0.0
    %v2819 = vmax.f32 %v2811, 0.0
    %v2820 = vadd.f32 %v2684, %v2812
    %v2821 = vadd.f32 %v2685, %v2813
    %v2822 = vadd.f32 %v2686, %v2814
    %v2823 = vadd.f32 %v2687, %v2815
    %v2824 = vadd.f32 %v2688, %v2816
    %v2825 = vadd.f32 %v2689, %v2817
    %v2826 = vadd.f32 %v2690, %v2818
    %v2827 = vadd.f32 %v2691, %v2819
    %v2828 = vpack.c.bf16 %v2821, %v2820
    %v2829 = vpack.c.bf16 %v2823, %v2822
    %v2830 = vpack.c.bf16 %v2825, %v2824
    %v2831 = vpack.c.bf16 %v2827, %v2826
    %v2840 = vunpack.c.l.b16 %v306
    %v2841 = vunpack.c.l.b16 %v307
    %v2842 = vunpack.c.l.b16 %v308
    %v2843 = vunpack.c.l.b16 %v309
    %v2844 = vunpack.c.l.b16 %v310
    %v2845 = vunpack.c.l.b16 %v311
    %v2846 = vunpack.c.l.b16 %v312
    %v2847 = vunpack.c.l.b16 %v313
    %v2848 = vpack.c.b16 %v2841, %v2840
    %v2849 = vpack.c.b16 %v2843, %v2842
    %v2850 = vpack.c.b16 %v2845, %v2844
    %v2851 = vpack.c.b16 %v2847, %v2846
    %v2857 = vsel %vm868, %v2828, 0
    %v2860 = vsel %vm868, %v2829, 0
    %v2863 = vsel %vm868, %v2830, 0
    %v2866 = vsel %vm868, %v2831, 0
    %2868 = vmatpush.bf16.msra.mxu0 0
    %2869 = vmatpush.bf16.msra.mxu0 0
    %2870 = vmatpush.bf16.msra.mxu0 0
    %2871 = vmatpush.bf16.msra.mxu0 0
    %2872 = vmatpush.bf16.msra.mxu0 %v2851
    %2873 = vmatpush.bf16.msra.mxu0 %v2850
    %2874 = vmatpush.bf16.msra.mxu0 %v2849
    %2875 = vmatpush.bf16.msra.mxu0 %v2848
    %2876 = vmatmul.bf16.gmra.mxu0 %v2857
    %v2877 = vpop.f32.mrf.mxu0
    %v2878 = vadd.f32 0.0, %v2877
    %v2879 = vpop.f32.mrf.mxu0
    %v2880 = vadd.f32 0.0, %v2879
    %2881 = vmatmul.bf16.gmra.mxu0 %v2860
    %v2882 = vpop.f32.mrf.mxu0
    %v2883 = vadd.f32 0.0, %v2882
    %v2884 = vpop.f32.mrf.mxu0
    %v2885 = vadd.f32 0.0, %v2884
    %2886 = vmatmul.bf16.gmra.mxu0 %v2863
    %v2887 = vpop.f32.mrf.mxu0
    %v2888 = vadd.f32 0.0, %v2887
    %v2889 = vpop.f32.mrf.mxu0
    %v2890 = vadd.f32 0.0, %v2889
    %2891 = vmatmul.bf16.gmra.mxu0 %v2866
    %v2892 = vpop.f32.mrf.mxu0
    %v2893 = vadd.f32 0.0, %v2892
    %v2894 = vpop.f32.mrf.mxu0
    %v2895 = vadd.f32 0.0, %v2894
    %2896 = vdwg.mxu0
    %v2897 = vsel %vm440, %v2878, 0.0
    %v2898 = vsel %vm440, %v2880, 0.0
    %v2899 = vadd.f32 %v2897, %v2898
    %v2900 = vsel %vm440, %v2883, 0.0
    %v2901 = vadd.f32 %v2899, %v2900
    %v2902 = vsel %vm440, %v2885, 0.0
    %v2903 = vadd.f32 %v2901, %v2902
    %v2904 = vsel %vm440, %v2888, 0.0
    %v2905 = vadd.f32 %v2903, %v2904
    %v2906 = vsel %vm440, %v2890, 0.0
    %v2907 = vadd.f32 %v2905, %v2906
    %v2908 = vsel %vm440, %v2893, 0.0
    %v2909 = vadd.f32 %v2907, %v2908
    %v2910 = vsel %vm440, %v2895, 0.0
    %v2911 = vadd.f32 %v2909, %v2910
    %v2912 = vrot.slane %v2911, 4
    %v2913 = vadd.f32 %v2911, %v2912
    %v2914 = vrot.slane %v2913, 2
    %v2915 = vadd.f32 %v2913, %v2914
    %v2916 = vrot.slane %v2915, 1
    %v2917 = vadd.f32 %v2915, %v2916
    %v2918 = vmul.f32 %v2917, %v468
    %v2919 = vsub.f32 %v2878, %v2918
    %v2920 = vsub.f32 %v2880, %v2918
    %v2921 = vsub.f32 %v2883, %v2918
    %v2922 = vsub.f32 %v2885, %v2918
    %v2923 = vsub.f32 %v2888, %v2918
    %v2924 = vsub.f32 %v2890, %v2918
    %v2925 = vsub.f32 %v2893, %v2918
    %v2926 = vsub.f32 %v2895, %v2918
    %v2927 = vmul.f32 %v2919, %v2919
    %v2928 = vmul.f32 %v2920, %v2920
    %v2929 = vmul.f32 %v2921, %v2921
    %v2930 = vmul.f32 %v2922, %v2922
    %v2931 = vmul.f32 %v2923, %v2923
    %v2932 = vmul.f32 %v2924, %v2924
    %v2933 = vmul.f32 %v2925, %v2925
    %v2934 = vmul.f32 %v2926, %v2926
    %v2935 = vsel %vm440, %v2927, 0.0
    %v2936 = vsel %vm440, %v2928, 0.0
    %v2937 = vadd.f32 %v2935, %v2936
    %v2938 = vsel %vm440, %v2929, 0.0
    %v2939 = vadd.f32 %v2937, %v2938
    %v2940 = vsel %vm440, %v2930, 0.0
    %v2941 = vadd.f32 %v2939, %v2940
    %v2942 = vsel %vm440, %v2931, 0.0
    %v2943 = vadd.f32 %v2941, %v2942
    %v2944 = vsel %vm440, %v2932, 0.0
    %v2945 = vadd.f32 %v2943, %v2944
    %v2946 = vsel %vm440, %v2933, 0.0
    %v2947 = vadd.f32 %v2945, %v2946
    %v2948 = vsel %vm440, %v2934, 0.0
    %v2949 = vadd.f32 %v2947, %v2948
    %v2950 = vrot.slane %v2949, 4
    %v2951 = vadd.f32 %v2949, %v2950
    %v2952 = vrot.slane %v2951, 2
    %v2953 = vadd.f32 %v2951, %v2952
    %v2954 = vrot.slane %v2953, 1
    %v2955 = vadd.f32 %v2953, %v2954
    %v2956 = vmul.f32 %v2955, %v468
    %v2957 = vadd.f32 %v2956, 1e-05
    %v2958 = vrsqrt.pop %v2957
    %v2959 = vmul.f32 %v2958, %v2957
    %v2960 = vmul.f32 %v2959, %v2958
    %v2961 = vmul.f32 0.5, %v2960
    %v2962 = vsub.f32 1.5, %v2961
    %v2963 = vmul.f32 %v2958, %v2962
    %vm2964 = vweird.f32 %v2957
    %vm2965 = vweird.f32 %v2958
    %vm2966 = vmor %vm2964, %vm2965
    %v2967 = vsel %vm2966, %v2958, %v2963
    %v2968 = vmul.f32 %v2919, %v2967
    %v2969 = vmul.f32 %v2920, %v2967
    %v2970 = vmul.f32 %v2921, %v2967
    %v2971 = vmul.f32 %v2922, %v2967
    %v2972 = vmul.f32 %v2923, %v2967
    %v2973 = vmul.f32 %v2924, %v2967
    %v2974 = vmul.f32 %v2925, %v2967
    %v2975 = vmul.f32 %v2926, %v2967
    %v2976 = vmax.f32 %v2968, 0.0
    %v2977 = vmax.f32 %v2969, 0.0
    %v2978 = vmax.f32 %v2970, 0.0
    %v2979 = vmax.f32 %v2971, 0.0
    %v2980 = vmax.f32 %v2972, 0.0
    %v2981 = vmax.f32 %v2973, 0.0
    %v2982 = vmax.f32 %v2974, 0.0
    %v2983 = vmax.f32 %v2975, 0.0
    %v2984 = vpack.c.bf16 %v2977, %v2976
    %v2985 = vpack.c.bf16 %v2979, %v2978
    %v2986 = vpack.c.bf16 %v2981, %v2980
    %v2987 = vpack.c.bf16 %v2983, %v2982
    %v2992 = vunpack.c.l.b16 %v318
    %v2993 = vunpack.c.l.b16 %v319
    %v2994 = vunpack.c.l.b16 %v320
    %v2995 = vunpack.c.l.b16 %v321
    %v2996 = vpack.c.b16 %v2993, %v2992
    %v2997 = vpack.c.b16 %v2995, %v2994
    %3000 = vmatpush.bf16.msra.mxu0 0
    %3001 = vmatpush.bf16.msra.mxu0 0
    %3002 = vmatpush.bf16.msra.mxu0 0
    %3003 = vmatpush.bf16.msra.mxu0 0
    %3004 = vmatpush.bf16.msra.mxu0 0
    %3005 = vmatpush.bf16.msra.mxu0 0
    %3006 = vmatpush.bf16.msra.mxu0 %v2997
    %3007 = vmatpush.bf16.msra.mxu0 %v2996
    %3008 = vmatmul.bf16.gmra.mxu0 %v1565
    %v3009 = vpop.f32.mrf.mxu0
    %v3010 = vadd.f32 0.0, %v3009
    %v3011 = vpop.f32.mrf.mxu0
    %v3012 = vadd.f32 0.0, %v3011
    %3013 = vmatmul.bf16.gmra.mxu0 %v1568
    %v3014 = vpop.f32.mrf.mxu0
    %v3015 = vadd.f32 0.0, %v3014
    %v3016 = vpop.f32.mrf.mxu0
    %v3017 = vadd.f32 0.0, %v3016
    %3018 = vmatmul.bf16.gmra.mxu0 %v1571
    %v3019 = vpop.f32.mrf.mxu0
    %v3020 = vadd.f32 0.0, %v3019
    %v3021 = vpop.f32.mrf.mxu0
    %v3022 = vadd.f32 0.0, %v3021
    %3023 = vmatmul.bf16.gmra.mxu0 %v1574
    %v3024 = vpop.f32.mrf.mxu0
    %v3025 = vadd.f32 0.0, %v3024
    %v3026 = vpop.f32.mrf.mxu0
    %v3027 = vadd.f32 0.0, %v3026
    %3028 = vdwg.mxu0
    %v3033 = vunpack.c.l.b16 %v314
    %v3034 = vunpack.c.l.b16 %v315
    %v3035 = vunpack.c.l.b16 %v316
    %v3036 = vunpack.c.l.b16 %v317
    %v3037 = vpack.c.b16 %v3034, %v3033
    %v3038 = vpack.c.b16 %v3036, %v3035
    %v3042 = vsel %vm440, %v2984, 0
    %v3045 = vsel %vm440, %v2985, 0
    %v3048 = vsel %vm440, %v2986, 0
    %v3051 = vsel %vm440, %v2987, 0
    %3053 = vmatpush.bf16.msra.mxu0 0
    %3054 = vmatpush.bf16.msra.mxu0 0
    %3055 = vmatpush.bf16.msra.mxu0 0
    %3056 = vmatpush.bf16.msra.mxu0 0
    %3057 = vmatpush.bf16.msra.mxu0 0
    %3058 = vmatpush.bf16.msra.mxu0 0
    %3059 = vmatpush.bf16.msra.mxu0 %v3038
    %3060 = vmatpush.bf16.msra.mxu0 %v3037
    %3061 = vmatmul.bf16.gmra.mxu0 %v3042
    %v3062 = vpop.f32.mrf.mxu0
    %v3063 = vadd.f32 %v3010, %v3062
    %v3064 = vpop.f32.mrf.mxu0
    %v3065 = vadd.f32 %v3012, %v3064
    %3066 = vmatmul.bf16.gmra.mxu0 %v3045
    %v3067 = vpop.f32.mrf.mxu0
    %v3068 = vadd.f32 %v3015, %v3067
    %v3069 = vpop.f32.mrf.mxu0
    %v3070 = vadd.f32 %v3017, %v3069
    %3071 = vmatmul.bf16.gmra.mxu0 %v3048
    %v3072 = vpop.f32.mrf.mxu0
    %v3073 = vadd.f32 %v3020, %v3072
    %v3074 = vpop.f32.mrf.mxu0
    %v3075 = vadd.f32 %v3022, %v3074
    %3076 = vmatmul.bf16.gmra.mxu0 %v3051
    %v3077 = vpop.f32.mrf.mxu0
    %v3078 = vadd.f32 %v3025, %v3077
    %v3079 = vpop.f32.mrf.mxu0
    %v3080 = vadd.f32 %v3027, %v3079
    %3081 = vdwg.mxu0
    %vm3082 = vcmask 785408
    %v3083 = vsel %vm3082, %v3063, 0.0
    %v3084 = vsel %vm3082, %v3065, 0.0
    %v3085 = vadd.f32 %v3083, %v3084
    %v3086 = vsel %vm3082, %v3068, 0.0
    %v3087 = vadd.f32 %v3085, %v3086
    %v3088 = vsel %vm3082, %v3070, 0.0
    %v3089 = vadd.f32 %v3087, %v3088
    %v3090 = vsel %vm3082, %v3073, 0.0
    %v3091 = vadd.f32 %v3089, %v3090
    %v3092 = vsel %vm3082, %v3075, 0.0
    %v3093 = vadd.f32 %v3091, %v3092
    %v3094 = vsel %vm3082, %v3078, 0.0
    %v3095 = vadd.f32 %v3093, %v3094
    %v3096 = vsel %vm3082, %v3080, 0.0
    %v3097 = vadd.f32 %v3095, %v3096
    %v3098 = vrot.slane %v3097, 4
    %v3099 = vadd.f32 %v3097, %v3098
    %v3100 = vrot.slane %v3099, 2
    %v3101 = vadd.f32 %v3099, %v3100
    %v3102 = vrot.slane %v3101, 1
    %v3103 = vadd.f32 %v3101, %v3102
    %v3104 = vmul.f32 %v3103, %v468
    %v3105 = vsub.f32 %v3063, %v3104
    %v3106 = vsub.f32 %v3065, %v3104
    %v3107 = vsub.f32 %v3068, %v3104
    %v3108 = vsub.f32 %v3070, %v3104
    %v3109 = vsub.f32 %v3073, %v3104
    %v3110 = vsub.f32 %v3075, %v3104
    %v3111 = vsub.f32 %v3078, %v3104
    %v3112 = vsub.f32 %v3080, %v3104
    %v3113 = vmul.f32 %v3105, %v3105
    %v3114 = vmul.f32 %v3106, %v3106
    %v3115 = vmul.f32 %v3107, %v3107
    %v3116 = vmul.f32 %v3108, %v3108
    %v3117 = vmul.f32 %v3109, %v3109
    %v3118 = vmul.f32 %v3110, %v3110
    %v3119 = vmul.f32 %v3111, %v3111
    %v3120 = vmul.f32 %v3112, %v3112
    %v3121 = vsel %vm3082, %v3113, 0.0
    %v3122 = vsel %vm3082, %v3114, 0.0
    %v3123 = vadd.f32 %v3121, %v3122
    %v3124 = vsel %vm3082, %v3115, 0.0
    %v3125 = vadd.f32 %v3123, %v3124
    %v3126 = vsel %vm3082, %v3116, 0.0
    %v3127 = vadd.f32 %v3125, %v3126
    %v3128 = vsel %vm3082, %v3117, 0.0
    %v3129 = vadd.f32 %v3127, %v3128
    %v3130 = vsel %vm3082, %v3118, 0.0
    %v3131 = vadd.f32 %v3129, %v3130
    %v3132 = vsel %vm3082, %v3119, 0.0
    %v3133 = vadd.f32 %v3131, %v3132
    %v3134 = vsel %vm3082, %v3120, 0.0
    %v3135 = vadd.f32 %v3133, %v3134
    %v3136 = vrot.slane %v3135, 4
    %v3137 = vadd.f32 %v3135, %v3136
    %v3138 = vrot.slane %v3137, 2
    %v3139 = vadd.f32 %v3137, %v3138
    %v3140 = vrot.slane %v3139, 1
    %v3141 = vadd.f32 %v3139, %v3140
    %v3142 = vmul.f32 %v3141, %v468
    %v3143 = vadd.f32 %v3142, 1e-05
    %v3144 = vrsqrt.pop %v3143
    %v3145 = vmul.f32 %v3144, %v3143
    %v3146 = vmul.f32 %v3145, %v3144
    %v3147 = vmul.f32 0.5, %v3146
    %v3148 = vsub.f32 1.5, %v3147
    %v3149 = vmul.f32 %v3144, %v3148
    %vm3150 = vweird.f32 %v3143
    %vm3151 = vweird.f32 %v3144
    %vm3152 = vmor %vm3150, %vm3151
    %v3153 = vsel %vm3152, %v3144, %v3149
    %v3154 = vmul.f32 %v3105, %v3153
    %v3155 = vmul.f32 %v3106, %v3153
    %v3156 = vmul.f32 %v3107, %v3153
    %v3157 = vmul.f32 %v3108, %v3153
    %v3158 = vmul.f32 %v3109, %v3153
    %v3159 = vmul.f32 %v3110, %v3153
    %v3160 = vmul.f32 %v3111, %v3153
    %v3161 = vmul.f32 %v3112, %v3153
    %v3162 = vmax.f32 %v3154, 0.0
    %v3163 = vmax.f32 %v3155, 0.0
    %v3164 = vmax.f32 %v3156, 0.0
    %v3165 = vmax.f32 %v3157, 0.0
    %v3166 = vmax.f32 %v3158, 0.0
    %v3167 = vmax.f32 %v3159, 0.0
    %v3168 = vmax.f32 %v3160, 0.0
    %v3169 = vmax.f32 %v3161, 0.0
    %v3170 = vpack.c.bf16 %v3163, %v3162
    %v3171 = vpack.c.bf16 %v3165, %v3164
    %v3172 = vpack.c.bf16 %v3167, %v3166
    %v3173 = vpack.c.bf16 %v3169, %v3168
    %v3186 = vunpack.c.l.b16 %v322
    %v3187 = vunpack.c.l.b16 %v323
    %v3188 = vunpack.c.l.b16 %v324
    %v3189 = vunpack.c.l.b16 %v325
    %v3190 = vunpack.c.l.b16 %v326
    %v3191 = vunpack.c.l.b16 %v327
    %v3192 = vunpack.c.l.b16 %v328
    %v3193 = vunpack.c.l.b16 %v329
    %v3194 = vunpack.c.l.b16 %v330
    %v3195 = vunpack.c.l.b16 %v331
    %v3196 = vunpack.c.l.b16 %v332
    %v3197 = vunpack.c.l.b16 %v333
    %v3198 = vpack.c.b16 %v3187, %v3186
    %v3199 = vpack.c.b16 %v3189, %v3188
    %v3200 = vpack.c.b16 %v3191, %v3190
    %v3201 = vpack.c.b16 %v3193, %v3192
    %v3202 = vpack.c.b16 %v3195, %v3194
    %v3203 = vpack.c.b16 %v3197, %v3196
    %v3211 = vsel %vm3082, %v3170, 0
    %v3214 = vsel %vm3082, %v3171, 0
    %v3217 = vsel %vm3082, %v3172, 0
    %v3220 = vsel %vm3082, %v3173, 0
    %3222 = vmatpush.bf16.msra.mxu0 0
    %3223 = vmatpush.bf16.msra.mxu0 0
    %3224 = vmatpush.bf16.msra.mxu0 %v3203
    %3225 = vmatpush.bf16.msra.mxu0 %v3202
    %3226 = vmatpush.bf16.msra.mxu0 %v3201
    %3227 = vmatpush.bf16.msra.mxu0 %v3200
    %3228 = vmatpush.bf16.msra.mxu0 %v3199
    %3229 = vmatpush.bf16.msra.mxu0 %v3198
    %3230 = vmatmul.bf16.gmra.mxu0 %v3211
    %v3231 = vpop.f32.mrf.mxu0
    %v3232 = vadd.f32 0.0, %v3231
    %v3233 = vpop.f32.mrf.mxu0
    %v3234 = vadd.f32 0.0, %v3233
    %3235 = vmatmul.bf16.gmra.mxu0 %v3214
    %v3236 = vpop.f32.mrf.mxu0
    %v3237 = vadd.f32 0.0, %v3236
    %v3238 = vpop.f32.mrf.mxu0
    %v3239 = vadd.f32 0.0, %v3238
    %3240 = vmatmul.bf16.gmra.mxu0 %v3217
    %v3241 = vpop.f32.mrf.mxu0
    %v3242 = vadd.f32 0.0, %v3241
    %v3243 = vpop.f32.mrf.mxu0
    %v3244 = vadd.f32 0.0, %v3243
    %3245 = vmatmul.bf16.gmra.mxu0 %v3220
    %v3246 = vpop.f32.mrf.mxu0
    %v3247 = vadd.f32 0.0, %v3246
    %v3248 = vpop.f32.mrf.mxu0
    %v3249 = vadd.f32 0.0, %v3248
    %3250 = vdwg.mxu0
    %v3251 = vsel %vm3082, %v3232, 0.0
    %v3252 = vsel %vm3082, %v3234, 0.0
    %v3253 = vadd.f32 %v3251, %v3252
    %v3254 = vsel %vm3082, %v3237, 0.0
    %v3255 = vadd.f32 %v3253, %v3254
    %v3256 = vsel %vm3082, %v3239, 0.0
    %v3257 = vadd.f32 %v3255, %v3256
    %v3258 = vsel %vm3082, %v3242, 0.0
    %v3259 = vadd.f32 %v3257, %v3258
    %v3260 = vsel %vm3082, %v3244, 0.0
    %v3261 = vadd.f32 %v3259, %v3260
    %v3262 = vsel %vm3082, %v3247, 0.0
    %v3263 = vadd.f32 %v3261, %v3262
    %v3264 = vsel %vm3082, %v3249, 0.0
    %v3265 = vadd.f32 %v3263, %v3264
    %v3266 = vrot.slane %v3265, 4
    %v3267 = vadd.f32 %v3265, %v3266
    %v3268 = vrot.slane %v3267, 2
    %v3269 = vadd.f32 %v3267, %v3268
    %v3270 = vrot.slane %v3269, 1
    %v3271 = vadd.f32 %v3269, %v3270
    %v3272 = vmul.f32 %v3271, %v468
    %v3273 = vsub.f32 %v3232, %v3272
    %v3274 = vsub.f32 %v3234, %v3272
    %v3275 = vsub.f32 %v3237, %v3272
    %v3276 = vsub.f32 %v3239, %v3272
    %v3277 = vsub.f32 %v3242, %v3272
    %v3278 = vsub.f32 %v3244, %v3272
    %v3279 = vsub.f32 %v3247, %v3272
    %v3280 = vsub.f32 %v3249, %v3272
    %v3281 = vmul.f32 %v3273, %v3273
    %v3282 = vmul.f32 %v3274, %v3274
    %v3283 = vmul.f32 %v3275, %v3275
    %v3284 = vmul.f32 %v3276, %v3276
    %v3285 = vmul.f32 %v3277, %v3277
    %v3286 = vmul.f32 %v3278, %v3278
    %v3287 = vmul.f32 %v3279, %v3279
    %v3288 = vmul.f32 %v3280, %v3280
    %v3289 = vsel %vm3082, %v3281, 0.0
    %v3290 = vsel %vm3082, %v3282, 0.0
    %v3291 = vadd.f32 %v3289, %v3290
    %v3292 = vsel %vm3082, %v3283, 0.0
    %v3293 = vadd.f32 %v3291, %v3292
    %v3294 = vsel %vm3082, %v3284, 0.0
    %v3295 = vadd.f32 %v3293, %v3294
    %v3296 = vsel %vm3082, %v3285, 0.0
    %v3297 = vadd.f32 %v3295, %v3296
    %v3298 = vsel %vm3082, %v3286, 0.0
    %v3299 = vadd.f32 %v3297, %v3298
    %v3300 = vsel %vm3082, %v3287, 0.0
    %v3301 = vadd.f32 %v3299, %v3300
    %v3302 = vsel %vm3082, %v3288, 0.0
    %v3303 = vadd.f32 %v3301, %v3302
    %v3304 = vrot.slane %v3303, 4
    %v3305 = vadd.f32 %v3303, %v3304
    %v3306 = vrot.slane %v3305, 2
    %v3307 = vadd.f32 %v3305, %v3306
    %v3308 = vrot.slane %v3307, 1
    %v3309 = vadd.f32 %v3307, %v3308
    %v3310 = vmul.f32 %v3309, %v468
    %v3311 = vadd.f32 %v3310, 1e-05
    %v3312 = vrsqrt.pop %v3311
    %v3313 = vmul.f32 %v3312, %v3311
    %v3314 = vmul.f32 %v3313, %v3312
    %v3315 = vmul.f32 0.5, %v3314
    %v3316 = vsub.f32 1.5, %v3315
    %v3317 = vmul.f32 %v3312, %v3316
    %vm3318 = vweird.f32 %v3311
    %vm3319 = vweird.f32 %v3312
    %vm3320 = vmor %vm3318, %vm3319
    %v3321 = vsel %vm3320, %v3312, %v3317
    %v3322 = vmul.f32 %v3273, %v3321
    %v3323 = vmul.f32 %v3274, %v3321
    %v3324 = vmul.f32 %v3275, %v3321
    %v3325 = vmul.f32 %v3276, %v3321
    %v3326 = vmul.f32 %v3277, %v3321
    %v3327 = vmul.f32 %v3278, %v3321
    %v3328 = vmul.f32 %v3279, %v3321
    %v3329 = vmul.f32 %v3280, %v3321
    %v3334 = vunpack.c.l.b16 %v338
    %v3335 = vunpack.c.l.b16 %v339
    %v3336 = vunpack.c.l.b16 %v340
    %v3337 = vunpack.c.l.b16 %v341
    %v3338 = vpack.c.b16 %v3335, %v3334
    %v3339 = vpack.c.b16 %v3337, %v3336
    %3342 = vmatpush.bf16.msra.mxu0 0
    %3343 = vmatpush.bf16.msra.mxu0 0
    %3344 = vmatpush.bf16.msra.mxu0 0
    %3345 = vmatpush.bf16.msra.mxu0 0
    %3346 = vmatpush.bf16.msra.mxu0 0
    %3347 = vmatpush.bf16.msra.mxu0 0
    %3348 = vmatpush.bf16.msra.mxu0 %v3339
    %3349 = vmatpush.bf16.msra.mxu0 %v3338
    %3350 = vmatmul.bf16.gmra.mxu0 %v1565
    %v3351 = vpop.f32.mrf.mxu0
    %v3352 = vadd.f32 0.0, %v3351
    %v3353 = vpop.f32.mrf.mxu0
    %v3354 = vadd.f32 0.0, %v3353
    %3355 = vmatmul.bf16.gmra.mxu0 %v1568
    %v3356 = vpop.f32.mrf.mxu0
    %v3357 = vadd.f32 0.0, %v3356
    %v3358 = vpop.f32.mrf.mxu0
    %v3359 = vadd.f32 0.0, %v3358
    %3360 = vmatmul.bf16.gmra.mxu0 %v1571
    %v3361 = vpop.f32.mrf.mxu0
    %v3362 = vadd.f32 0.0, %v3361
    %v3363 = vpop.f32.mrf.mxu0
    %v3364 = vadd.f32 0.0, %v3363
    %3365 = vmatmul.bf16.gmra.mxu0 %v1574
    %v3366 = vpop.f32.mrf.mxu0
    %v3367 = vadd.f32 0.0, %v3366
    %v3368 = vpop.f32.mrf.mxu0
    %v3369 = vadd.f32 0.0, %v3368
    %3370 = vdwg.mxu0
    %v3375 = vunpack.c.l.b16 %v334
    %v3376 = vunpack.c.l.b16 %v335
    %v3377 = vunpack.c.l.b16 %v336
    %v3378 = vunpack.c.l.b16 %v337
    %v3379 = vpack.c.b16 %v3376, %v3375
    %v3380 = vpack.c.b16 %v3378, %v3377
    %3383 = vmatpush.bf16.msra.mxu0 0
    %3384 = vmatpush.bf16.msra.mxu0 0
    %3385 = vmatpush.bf16.msra.mxu0 0
    %3386 = vmatpush.bf16.msra.mxu0 0
    %3387 = vmatpush.bf16.msra.mxu0 0
    %3388 = vmatpush.bf16.msra.mxu0 0
    %3389 = vmatpush.bf16.msra.mxu0 %v3380
    %3390 = vmatpush.bf16.msra.mxu0 %v3379
    %3391 = vmatmul.bf16.gmra.mxu0 %v3042
    %v3392 = vpop.f32.mrf.mxu0
    %v3393 = vadd.f32 %v3352, %v3392
    %v3394 = vpop.f32.mrf.mxu0
    %v3395 = vadd.f32 %v3354, %v3394
    %3396 = vmatmul.bf16.gmra.mxu0 %v3045
    %v3397 = vpop.f32.mrf.mxu0
    %v3398 = vadd.f32 %v3357, %v3397
    %v3399 = vpop.f32.mrf.mxu0
    %v3400 = vadd.f32 %v3359, %v3399
    %3401 = vmatmul.bf16.gmra.mxu0 %v3048
    %v3402 = vpop.f32.mrf.mxu0
    %v3403 = vadd.f32 %v3362, %v3402
    %v3404 = vpop.f32.mrf.mxu0
    %v3405 = vadd.f32 %v3364, %v3404
    %3406 = vmatmul.bf16.gmra.mxu0 %v3051
    %v3407 = vpop.f32.mrf.mxu0
    %v3408 = vadd.f32 %v3367, %v3407
    %v3409 = vpop.f32.mrf.mxu0
    %v3410 = vadd.f32 %v3369, %v3409
    %3411 = vdwg.mxu0
    %v3412 = vsel %vm3082, %v3393, 0.0
    %v3413 = vsel %vm3082, %v3395, 0.0
    %v3414 = vadd.f32 %v3412, %v3413
    %v3415 = vsel %vm3082, %v3398, 0.0
    %v3416 = vadd.f32 %v3414, %v3415
    %v3417 = vsel %vm3082, %v3400, 0.0
    %v3418 = vadd.f32 %v3416, %v3417
    %v3419 = vsel %vm3082, %v3403, 0.0
    %v3420 = vadd.f32 %v3418, %v3419
    %v3421 = vsel %vm3082, %v3405, 0.0
    %v3422 = vadd.f32 %v3420, %v3421
    %v3423 = vsel %vm3082, %v3408, 0.0
    %v3424 = vadd.f32 %v3422, %v3423
    %v3425 = vsel %vm3082, %v3410, 0.0
    %v3426 = vadd.f32 %v3424, %v3425
    %v3427 = vrot.slane %v3426, 4
    %v3428 = vadd.f32 %v3426, %v3427
    %v3429 = vrot.slane %v3428, 2
    %v3430 = vadd.f32 %v3428, %v3429
    %v3431 = vrot.slane %v3430, 1
    %v3432 = vadd.f32 %v3430, %v3431
    %v3433 = vmul.f32 %v3432, %v468
    %v3434 = vsub.f32 %v3393, %v3433
    %v3435 = vsub.f32 %v3395, %v3433
    %v3436 = vsub.f32 %v3398, %v3433
    %v3437 = vsub.f32 %v3400, %v3433
    %v3438 = vsub.f32 %v3403, %v3433
    %v3439 = vsub.f32 %v3405, %v3433
    %v3440 = vsub.f32 %v3408, %v3433
    %v3441 = vsub.f32 %v3410, %v3433
    %v3442 = vmul.f32 %v3434, %v3434
    %v3443 = vmul.f32 %v3435, %v3435
    %v3444 = vmul.f32 %v3436, %v3436
    %v3445 = vmul.f32 %v3437, %v3437
    %v3446 = vmul.f32 %v3438, %v3438
    %v3447 = vmul.f32 %v3439, %v3439
    %v3448 = vmul.f32 %v3440, %v3440
    %v3449 = vmul.f32 %v3441, %v3441
    %v3450 = vsel %vm3082, %v3442, 0.0
    %v3451 = vsel %vm3082, %v3443, 0.0
    %v3452 = vadd.f32 %v3450, %v3451
    %v3453 = vsel %vm3082, %v3444, 0.0
    %v3454 = vadd.f32 %v3452, %v3453
    %v3455 = vsel %vm3082, %v3445, 0.0
    %v3456 = vadd.f32 %v3454, %v3455
    %v3457 = vsel %vm3082, %v3446, 0.0
    %v3458 = vadd.f32 %v3456, %v3457
    %v3459 = vsel %vm3082, %v3447, 0.0
    %v3460 = vadd.f32 %v3458, %v3459
    %v3461 = vsel %vm3082, %v3448, 0.0
    %v3462 = vadd.f32 %v3460, %v3461
    %v3463 = vsel %vm3082, %v3449, 0.0
    %v3464 = vadd.f32 %v3462, %v3463
    %v3465 = vrot.slane %v3464, 4
    %v3466 = vadd.f32 %v3464, %v3465
    %v3467 = vrot.slane %v3466, 2
    %v3468 = vadd.f32 %v3466, %v3467
    %v3469 = vrot.slane %v3468, 1
    %v3470 = vadd.f32 %v3468, %v3469
    %v3471 = vmul.f32 %v3470, %v468
    %v3472 = vadd.f32 %v3471, 1e-05
    %v3473 = vrsqrt.pop %v3472
    %v3474 = vmul.f32 %v3473, %v3472
    %v3475 = vmul.f32 %v3474, %v3473
    %v3476 = vmul.f32 0.5, %v3475
    %v3477 = vsub.f32 1.5, %v3476
    %v3478 = vmul.f32 %v3473, %v3477
    %vm3479 = vweird.f32 %v3472
    %vm3480 = vweird.f32 %v3473
    %vm3481 = vmor %vm3479, %vm3480
    %v3482 = vsel %vm3481, %v3473, %v3478
    %v3483 = vmul.f32 %v3434, %v3482
    %v3484 = vmul.f32 %v3435, %v3482
    %v3485 = vmul.f32 %v3436, %v3482
    %v3486 = vmul.f32 %v3437, %v3482
    %v3487 = vmul.f32 %v3438, %v3482
    %v3488 = vmul.f32 %v3439, %v3482
    %v3489 = vmul.f32 %v3440, %v3482
    %v3490 = vmul.f32 %v3441, %v3482
    %v3491 = vadd.f32 %v3322, %v3483
    %v3492 = vadd.f32 %v3323, %v3484
    %v3493 = vadd.f32 %v3324, %v3485
    %v3494 = vadd.f32 %v3325, %v3486
    %v3495 = vadd.f32 %v3326, %v3487
    %v3496 = vadd.f32 %v3327, %v3488
    %v3497 = vadd.f32 %v3328, %v3489
    %v3498 = vadd.f32 %v3329, %v3490
    %v3499 = vmax.f32 %v3491, 0.0
    %v3500 = vmax.f32 %v3492, 0.0
    %v3501 = vmax.f32 %v3493, 0.0
    %v3502 = vmax.f32 %v3494, 0.0
    %v3503 = vmax.f32 %v3495, 0.0
    %v3504 = vmax.f32 %v3496, 0.0
    %v3505 = vmax.f32 %v3497, 0.0
    %v3506 = vmax.f32 %v3498, 0.0
    %v3507 = vpack.c.bf16 %v3500, %v3499
    %v3508 = vpack.c.bf16 %v3502, %v3501
    %v3509 = vpack.c.bf16 %v3504, %v3503
    %v3510 = vpack.c.bf16 %v3506, %v3505
    %v3523 = vunpack.c.l.b16 %v342
    %v3524 = vunpack.c.l.b16 %v343
    %v3525 = vunpack.c.l.b16 %v344
    %v3526 = vunpack.c.l.b16 %v345
    %v3527 = vunpack.c.l.b16 %v346
    %v3528 = vunpack.c.l.b16 %v347
    %v3529 = vunpack.c.l.b16 %v348
    %v3530 = vunpack.c.l.b16 %v349
    %v3531 = vunpack.c.l.b16 %v350
    %v3532 = vunpack.c.l.b16 %v351
    %v3533 = vunpack.c.l.b16 %v352
    %v3534 = vunpack.c.l.b16 %v353
    %v3535 = vpack.c.b16 %v3524, %v3523
    %v3536 = vpack.c.b16 %v3526, %v3525
    %v3537 = vpack.c.b16 %v3528, %v3527
    %v3538 = vpack.c.b16 %v3530, %v3529
    %v3539 = vpack.c.b16 %v3532, %v3531
    %v3540 = vpack.c.b16 %v3534, %v3533
    %v3548 = vsel %vm3082, %v3507, 0
    %v3551 = vsel %vm3082, %v3508, 0
    %v3554 = vsel %vm3082, %v3509, 0
    %v3557 = vsel %vm3082, %v3510, 0
    %3559 = vmatpush.bf16.msra.mxu0 0
    %3560 = vmatpush.bf16.msra.mxu0 0
    %3561 = vmatpush.bf16.msra.mxu0 %v3540
    %3562 = vmatpush.bf16.msra.mxu0 %v3539
    %3563 = vmatpush.bf16.msra.mxu0 %v3538
    %3564 = vmatpush.bf16.msra.mxu0 %v3537
    %3565 = vmatpush.bf16.msra.mxu0 %v3536
    %3566 = vmatpush.bf16.msra.mxu0 %v3535
    %3567 = vmatmul.bf16.gmra.mxu0 %v3548
    %v3568 = vpop.f32.mrf.mxu0
    %v3569 = vadd.f32 0.0, %v3568
    %v3570 = vpop.f32.mrf.mxu0
    %v3571 = vadd.f32 0.0, %v3570
    %3572 = vmatmul.bf16.gmra.mxu0 %v3551
    %v3573 = vpop.f32.mrf.mxu0
    %v3574 = vadd.f32 0.0, %v3573
    %v3575 = vpop.f32.mrf.mxu0
    %v3576 = vadd.f32 0.0, %v3575
    %3577 = vmatmul.bf16.gmra.mxu0 %v3554
    %v3578 = vpop.f32.mrf.mxu0
    %v3579 = vadd.f32 0.0, %v3578
    %v3580 = vpop.f32.mrf.mxu0
    %v3581 = vadd.f32 0.0, %v3580
    %3582 = vmatmul.bf16.gmra.mxu0 %v3557
    %v3583 = vpop.f32.mrf.mxu0
    %v3584 = vadd.f32 0.0, %v3583
    %v3585 = vpop.f32.mrf.mxu0
    %v3586 = vadd.f32 0.0, %v3585
    %3587 = vdwg.mxu0
    %v3588 = vsel %vm3082, %v3569, 0.0
    %v3589 = vsel %vm3082, %v3571, 0.0
    %v3590 = vadd.f32 %v3588, %v3589
    %v3591 = vsel %vm3082, %v3574, 0.0
    %v3592 = vadd.f32 %v3590, %v3591
    %v3593 = vsel %vm3082, %v3576, 0.0
    %v3594 = vadd.f32 %v3592, %v3593
    %v3595 = vsel %vm3082, %v3579, 0.0
    %v3596 = vadd.f32 %v3594, %v3595
    %v3597 = vsel %vm3082, %v3581, 0.0
    %v3598 = vadd.f32 %v3596, %v3597
    %v3599 = vsel %vm3082, %v3584, 0.0
    %v3600 = vadd.f32 %v3598, %v3599
    %v3601 = vsel %vm3082, %v3586, 0.0
    %v3602 = vadd.f32 %v3600, %v3601
    %v3603 = vrot.slane %v3602, 4
    %v3604 = vadd.f32 %v3602, %v3603
    %v3605 = vrot.slane %v3604, 2
    %v3606 = vadd.f32 %v3604, %v3605
    %v3607 = vrot.slane %v3606, 1
    %v3608 = vadd.f32 %v3606, %v3607
    %v3609 = vmul.f32 %v3608, %v468
    %v3610 = vsub.f32 %v3569, %v3609
    %v3611 = vsub.f32 %v3571, %v3609
    %v3612 = vsub.f32 %v3574, %v3609
    %v3613 = vsub.f32 %v3576, %v3609
    %v3614 = vsub.f32 %v3579, %v3609
    %v3615 = vsub.f32 %v3581, %v3609
    %v3616 = vsub.f32 %v3584, %v3609
    %v3617 = vsub.f32 %v3586, %v3609
    %v3618 = vmul.f32 %v3610, %v3610
    %v3619 = vmul.f32 %v3611, %v3611
    %v3620 = vmul.f32 %v3612, %v3612
    %v3621 = vmul.f32 %v3613, %v3613
    %v3622 = vmul.f32 %v3614, %v3614
    %v3623 = vmul.f32 %v3615, %v3615
    %v3624 = vmul.f32 %v3616, %v3616
    %v3625 = vmul.f32 %v3617, %v3617
    %v3626 = vsel %vm3082, %v3618, 0.0
    %v3627 = vsel %vm3082, %v3619, 0.0
    %v3628 = vadd.f32 %v3626, %v3627
    %v3629 = vsel %vm3082, %v3620, 0.0
    %v3630 = vadd.f32 %v3628, %v3629
    %v3631 = vsel %vm3082, %v3621, 0.0
    %v3632 = vadd.f32 %v3630, %v3631
    %v3633 = vsel %vm3082, %v3622, 0.0
    %v3634 = vadd.f32 %v3632, %v3633
    %v3635 = vsel %vm3082, %v3623, 0.0
    %v3636 = vadd.f32 %v3634, %v3635
    %v3637 = vsel %vm3082, %v3624, 0.0
    %v3638 = vadd.f32 %v3636, %v3637
    %v3639 = vsel %vm3082, %v3625, 0.0
    %v3640 = vadd.f32 %v3638, %v3639
    %v3641 = vrot.slane %v3640, 4
    %v3642 = vadd.f32 %v3640, %v3641
    %v3643 = vrot.slane %v3642, 2
    %v3644 = vadd.f32 %v3642, %v3643
    %v3645 = vrot.slane %v3644, 1
    %v3646 = vadd.f32 %v3644, %v3645
    %v3647 = vmul.f32 %v3646, %v468
    %v3648 = vadd.f32 %v3647, 1e-05
    %v3649 = vrsqrt.pop %v3648
    %v3650 = vmul.f32 %v3649, %v3648
    %v3651 = vmul.f32 %v3650, %v3649
    %v3652 = vmul.f32 0.5, %v3651
    %v3653 = vsub.f32 1.5, %v3652
    %v3654 = vmul.f32 %v3649, %v3653
    %vm3655 = vweird.f32 %v3648
    %vm3656 = vweird.f32 %v3649
    %vm3657 = vmor %vm3655, %vm3656
    %v3658 = vsel %vm3657, %v3649, %v3654
    %v3659 = vmul.f32 %v3610, %v3658
    %v3660 = vmul.f32 %v3611, %v3658
    %v3661 = vmul.f32 %v3612, %v3658
    %v3662 = vmul.f32 %v3613, %v3658
    %v3663 = vmul.f32 %v3614, %v3658
    %v3664 = vmul.f32 %v3615, %v3658
    %v3665 = vmul.f32 %v3616, %v3658
    %v3666 = vmul.f32 %v3617, %v3658
    %v3667 = vmax.f32 %v3659, 0.0
    %v3668 = vmax.f32 %v3660, 0.0
    %v3669 = vmax.f32 %v3661, 0.0
    %v3670 = vmax.f32 %v3662, 0.0
    %v3671 = vmax.f32 %v3663, 0.0
    %v3672 = vmax.f32 %v3664, 0.0
    %v3673 = vmax.f32 %v3665, 0.0
    %v3674 = vmax.f32 %v3666, 0.0
    %v3675 = vpack.c.bf16 %v3668, %v3667
    %v3676 = vpack.c.bf16 %v3670, %v3669
    %v3677 = vpack.c.bf16 %v3672, %v3671
    %v3678 = vpack.c.bf16 %v3674, %v3673
    %v3691 = vunpack.c.l.b16 %v354
    %v3692 = vunpack.c.l.b16 %v355
    %v3693 = vunpack.c.l.b16 %v356
    %v3694 = vunpack.c.l.b16 %v357
    %v3695 = vunpack.c.l.b16 %v358
    %v3696 = vunpack.c.l.b16 %v359
    %v3697 = vunpack.c.l.b16 %v360
    %v3698 = vunpack.c.l.b16 %v361
    %v3699 = vunpack.c.l.b16 %v362
    %v3700 = vunpack.c.l.b16 %v363
    %v3701 = vunpack.c.l.b16 %v364
    %v3702 = vunpack.c.l.b16 %v365
    %v3703 = vpack.c.b16 %v3692, %v3691
    %v3704 = vpack.c.b16 %v3694, %v3693
    %v3705 = vpack.c.b16 %v3696, %v3695
    %v3706 = vpack.c.b16 %v3698, %v3697
    %v3707 = vpack.c.b16 %v3700, %v3699
    %v3708 = vpack.c.b16 %v3702, %v3701
    %v3716 = vsel %vm3082, %v3675, 0
    %v3719 = vsel %vm3082, %v3676, 0
    %v3722 = vsel %vm3082, %v3677, 0
    %v3725 = vsel %vm3082, %v3678, 0
    %3727 = vmatpush.bf16.msra.mxu0 0
    %3728 = vmatpush.bf16.msra.mxu0 0
    %3729 = vmatpush.bf16.msra.mxu0 %v3708
    %3730 = vmatpush.bf16.msra.mxu0 %v3707
    %3731 = vmatpush.bf16.msra.mxu0 %v3706
    %3732 = vmatpush.bf16.msra.mxu0 %v3705
    %3733 = vmatpush.bf16.msra.mxu0 %v3704
    %3734 = vmatpush.bf16.msra.mxu0 %v3703
    %3735 = vmatmul.bf16.gmra.mxu0 %v3716
    %v3736 = vpop.f32.mrf.mxu0
    %v3737 = vadd.f32 0.0, %v3736
    %v3738 = vpop.f32.mrf.mxu0
    %v3739 = vadd.f32 0.0, %v3738
    %3740 = vmatmul.bf16.gmra.mxu0 %v3719
    %v3741 = vpop.f32.mrf.mxu0
    %v3742 = vadd.f32 0.0, %v3741
    %v3743 = vpop.f32.mrf.mxu0
    %v3744 = vadd.f32 0.0, %v3743
    %3745 = vmatmul.bf16.gmra.mxu0 %v3722
    %v3746 = vpop.f32.mrf.mxu0
    %v3747 = vadd.f32 0.0, %v3746
    %v3748 = vpop.f32.mrf.mxu0
    %v3749 = vadd.f32 0.0, %v3748
    %3750 = vmatmul.bf16.gmra.mxu0 %v3725
    %v3751 = vpop.f32.mrf.mxu0
    %v3752 = vadd.f32 0.0, %v3751
    %v3753 = vpop.f32.mrf.mxu0
    %v3754 = vadd.f32 0.0, %v3753
    %3755 = vdwg.mxu0
    %v3756 = vsel %vm3082, %v3737, 0.0
    %v3757 = vsel %vm3082, %v3739, 0.0
    %v3758 = vadd.f32 %v3756, %v3757
    %v3759 = vsel %vm3082, %v3742, 0.0
    %v3760 = vadd.f32 %v3758, %v3759
    %v3761 = vsel %vm3082, %v3744, 0.0
    %v3762 = vadd.f32 %v3760, %v3761
    %v3763 = vsel %vm3082, %v3747, 0.0
    %v3764 = vadd.f32 %v3762, %v3763
    %v3765 = vsel %vm3082, %v3749, 0.0
    %v3766 = vadd.f32 %v3764, %v3765
    %v3767 = vsel %vm3082, %v3752, 0.0
    %v3768 = vadd.f32 %v3766, %v3767
    %v3769 = vsel %vm3082, %v3754, 0.0
    %v3770 = vadd.f32 %v3768, %v3769
    %v3771 = vrot.slane %v3770, 4
    %v3772 = vadd.f32 %v3770, %v3771
    %v3773 = vrot.slane %v3772, 2
    %v3774 = vadd.f32 %v3772, %v3773
    %v3775 = vrot.slane %v3774, 1
    %v3776 = vadd.f32 %v3774, %v3775
    %v3777 = vmul.f32 %v3776, %v468
    %v3778 = vsub.f32 %v3737, %v3777
    %v3779 = vsub.f32 %v3739, %v3777
    %v3780 = vsub.f32 %v3742, %v3777
    %v3781 = vsub.f32 %v3744, %v3777
    %v3782 = vsub.f32 %v3747, %v3777
    %v3783 = vsub.f32 %v3749, %v3777
    %v3784 = vsub.f32 %v3752, %v3777
    %v3785 = vsub.f32 %v3754, %v3777
    %v3786 = vmul.f32 %v3778, %v3778
    %v3787 = vmul.f32 %v3779, %v3779
    %v3788 = vmul.f32 %v3780, %v3780
    %v3789 = vmul.f32 %v3781, %v3781
    %v3790 = vmul.f32 %v3782, %v3782
    %v3791 = vmul.f32 %v3783, %v3783
    %v3792 = vmul.f32 %v3784, %v3784
    %v3793 = vmul.f32 %v3785, %v3785
    %v3794 = vsel %vm3082, %v3786, 0.0
    %v3795 = vsel %vm3082, %v3787, 0.0
    %v3796 = vadd.f32 %v3794, %v3795
    %v3797 = vsel %vm3082, %v3788, 0.0
    %v3798 = vadd.f32 %v3796, %v3797
    %v3799 = vsel %vm3082, %v3789, 0.0
    %v3800 = vadd.f32 %v3798, %v3799
    %v3801 = vsel %vm3082, %v3790, 0.0
    %v3802 = vadd.f32 %v3800, %v3801
    %v3803 = vsel %vm3082, %v3791, 0.0
    %v3804 = vadd.f32 %v3802, %v3803
    %v3805 = vsel %vm3082, %v3792, 0.0
    %v3806 = vadd.f32 %v3804, %v3805
    %v3807 = vsel %vm3082, %v3793, 0.0
    %v3808 = vadd.f32 %v3806, %v3807
    %v3809 = vrot.slane %v3808, 4
    %v3810 = vadd.f32 %v3808, %v3809
    %v3811 = vrot.slane %v3810, 2
    %v3812 = vadd.f32 %v3810, %v3811
    %v3813 = vrot.slane %v3812, 1
    %v3814 = vadd.f32 %v3812, %v3813
    %v3815 = vmul.f32 %v3814, %v468
    %v3816 = vadd.f32 %v3815, 1e-05
    %v3817 = vrsqrt.pop %v3816
    %v3818 = vmul.f32 %v3817, %v3816
    %v3819 = vmul.f32 %v3818, %v3817
    %v3820 = vmul.f32 0.5, %v3819
    %v3821 = vsub.f32 1.5, %v3820
    %v3822 = vmul.f32 %v3817, %v3821
    %vm3823 = vweird.f32 %v3816
    %vm3824 = vweird.f32 %v3817
    %vm3825 = vmor %vm3823, %vm3824
    %v3826 = vsel %vm3825, %v3817, %v3822
    %v3827 = vmul.f32 %v3778, %v3826
    %v3828 = vmul.f32 %v3779, %v3826
    %v3829 = vmul.f32 %v3780, %v3826
    %v3830 = vmul.f32 %v3781, %v3826
    %v3831 = vmul.f32 %v3782, %v3826
    %v3832 = vmul.f32 %v3783, %v3826
    %v3833 = vmul.f32 %v3784, %v3826
    %v3834 = vmul.f32 %v3785, %v3826
    %v3835 = vadd.f32 %v3827, %v3499
    %v3836 = vadd.f32 %v3828, %v3500
    %v3837 = vadd.f32 %v3829, %v3501
    %v3838 = vadd.f32 %v3830, %v3502
    %v3839 = vadd.f32 %v3831, %v3503
    %v3840 = vadd.f32 %v3832, %v3504
    %v3841 = vadd.f32 %v3833, %v3505
    %v3842 = vadd.f32 %v3834, %v3506
    %v3843 = vmax.f32 %v3835, 0.0
    %v3844 = vmax.f32 %v3836, 0.0
    %v3845 = vmax.f32 %v3837, 0.0
    %v3846 = vmax.f32 %v3838, 0.0
    %v3847 = vmax.f32 %v3839, 0.0
    %v3848 = vmax.f32 %v3840, 0.0
    %v3849 = vmax.f32 %v3841, 0.0
    %v3850 = vmax.f32 %v3842, 0.0
    %v3859 = vunpack.c.l.b16 %v366
    %v3860 = vunpack.c.l.b16 %v367
    %v3861 = vunpack.c.l.b16 %v368
    %v3862 = vunpack.c.l.b16 %v369
    %v3863 = vunpack.c.l.b16 %v370
    %v3864 = vunpack.c.l.b16 %v371
    %v3865 = vunpack.c.l.b16 %v372
    %v3866 = vunpack.c.l.b16 %v373
    %v3867 = vpack.c.b16 %v3860, %v3859
    %v3868 = vpack.c.b16 %v3862, %v3861
    %v3869 = vpack.c.b16 %v3864, %v3863
    %v3870 = vpack.c.b16 %v3866, %v3865
    %3875 = vmatpush.bf16.msra.mxu0 0
    %3876 = vmatpush.bf16.msra.mxu0 0
    %3877 = vmatpush.bf16.msra.mxu0 0
    %3878 = vmatpush.bf16.msra.mxu0 0
    %3879 = vmatpush.bf16.msra.mxu0 %v3870
    %3880 = vmatpush.bf16.msra.mxu0 %v3869
    %3881 = vmatpush.bf16.msra.mxu0 %v3868
    %3882 = vmatpush.bf16.msra.mxu0 %v3867
    %3883 = vmatmul.bf16.gmra.mxu0 %v2857
    %v3884 = vpop.f32.mrf.mxu0
    %v3885 = vadd.f32 0.0, %v3884
    %v3886 = vpop.f32.mrf.mxu0
    %v3887 = vadd.f32 0.0, %v3886
    %3888 = vmatmul.bf16.gmra.mxu0 %v2860
    %v3889 = vpop.f32.mrf.mxu0
    %v3890 = vadd.f32 0.0, %v3889
    %v3891 = vpop.f32.mrf.mxu0
    %v3892 = vadd.f32 0.0, %v3891
    %3893 = vmatmul.bf16.gmra.mxu0 %v2863
    %v3894 = vpop.f32.mrf.mxu0
    %v3895 = vadd.f32 0.0, %v3894
    %v3896 = vpop.f32.mrf.mxu0
    %v3897 = vadd.f32 0.0, %v3896
    %3898 = vmatmul.bf16.gmra.mxu0 %v2866
    %v3899 = vpop.f32.mrf.mxu0
    %v3900 = vadd.f32 0.0, %v3899
    %v3901 = vpop.f32.mrf.mxu0
    %v3902 = vadd.f32 0.0, %v3901
    %3903 = vdwg.mxu0
    %v3904 = vsel %vm3082, %v3885, 0.0
    %v3905 = vsel %vm3082, %v3887, 0.0
    %v3906 = vadd.f32 %v3904, %v3905
    %v3907 = vsel %vm3082, %v3890, 0.0
    %v3908 = vadd.f32 %v3906, %v3907
    %v3909 = vsel %vm3082, %v3892, 0.0
    %v3910 = vadd.f32 %v3908, %v3909
    %v3911 = vsel %vm3082, %v3895, 0.0
    %v3912 = vadd.f32 %v3910, %v3911
    %v3913 = vsel %vm3082, %v3897, 0.0
    %v3914 = vadd.f32 %v3912, %v3913
    %v3915 = vsel %vm3082, %v3900, 0.0
    %v3916 = vadd.f32 %v3914, %v3915
    %v3917 = vsel %vm3082, %v3902, 0.0
    %v3918 = vadd.f32 %v3916, %v3917
    %v3919 = vrot.slane %v3918, 4
    %v3920 = vadd.f32 %v3918, %v3919
    %v3921 = vrot.slane %v3920, 2
    %v3922 = vadd.f32 %v3920, %v3921
    %v3923 = vrot.slane %v3922, 1
    %v3924 = vadd.f32 %v3922, %v3923
    %v3925 = vmul.f32 %v3924, %v468
    %v3926 = vsub.f32 %v3885, %v3925
    %v3927 = vsub.f32 %v3887, %v3925
    %v3928 = vsub.f32 %v3890, %v3925
    %v3929 = vsub.f32 %v3892, %v3925
    %v3930 = vsub.f32 %v3895, %v3925
    %v3931 = vsub.f32 %v3897, %v3925
    %v3932 = vsub.f32 %v3900, %v3925
    %v3933 = vsub.f32 %v3902, %v3925
    %v3934 = vmul.f32 %v3926, %v3926
    %v3935 = vmul.f32 %v3927, %v3927
    %v3936 = vmul.f32 %v3928, %v3928
    %v3937 = vmul.f32 %v3929, %v3929
    %v3938 = vmul.f32 %v3930, %v3930
    %v3939 = vmul.f32 %v3931, %v3931
    %v3940 = vmul.f32 %v3932, %v3932
    %v3941 = vmul.f32 %v3933, %v3933
    %v3942 = vsel %vm3082, %v3934, 0.0
    %v3943 = vsel %vm3082, %v3935, 0.0
    %v3944 = vadd.f32 %v3942, %v3943
    %v3945 = vsel %vm3082, %v3936, 0.0
    %v3946 = vadd.f32 %v3944, %v3945
    %v3947 = vsel %vm3082, %v3937, 0.0
    %v3948 = vadd.f32 %v3946, %v3947
    %v3949 = vsel %vm3082, %v3938, 0.0
    %v3950 = vadd.f32 %v3948, %v3949
    %v3951 = vsel %vm3082, %v3939, 0.0
    %v3952 = vadd.f32 %v3950, %v3951
    %v3953 = vsel %vm3082, %v3940, 0.0
    %v3954 = vadd.f32 %v3952, %v3953
    %v3955 = vsel %vm3082, %v3941, 0.0
    %v3956 = vadd.f32 %v3954, %v3955
    %v3957 = vrot.slane %v3956, 4
    %v3958 = vadd.f32 %v3956, %v3957
    %v3959 = vrot.slane %v3958, 2
    %v3960 = vadd.f32 %v3958, %v3959
    %v3961 = vrot.slane %v3960, 1
    %v3962 = vadd.f32 %v3960, %v3961
    %v3963 = vmul.f32 %v3962, %v468
    %v3964 = vadd.f32 %v3963, 1e-05
    %v3965 = vrsqrt.pop %v3964
    %v3966 = vmul.f32 %v3965, %v3964
    %v3967 = vmul.f32 %v3966, %v3965
    %v3968 = vmul.f32 0.5, %v3967
    %v3969 = vsub.f32 1.5, %v3968
    %v3970 = vmul.f32 %v3965, %v3969
    %vm3971 = vweird.f32 %v3964
    %vm3972 = vweird.f32 %v3965
    %vm3973 = vmor %vm3971, %vm3972
    %v3974 = vsel %vm3973, %v3965, %v3970
    %v3975 = vmul.f32 %v3926, %v3974
    %v3976 = vmul.f32 %v3927, %v3974
    %v3977 = vmul.f32 %v3928, %v3974
    %v3978 = vmul.f32 %v3929, %v3974
    %v3979 = vmul.f32 %v3930, %v3974
    %v3980 = vmul.f32 %v3931, %v3974
    %v3981 = vmul.f32 %v3932, %v3974
    %v3982 = vmul.f32 %v3933, %v3974
    %v3983 = vmax.f32 %v3975, 0.0
    %v3984 = vmax.f32 %v3976, 0.0
    %v3985 = vmax.f32 %v3977, 0.0
    %v3986 = vmax.f32 %v3978, 0.0
    %v3987 = vmax.f32 %v3979, 0.0
    %v3988 = vmax.f32 %v3980, 0.0
    %v3989 = vmax.f32 %v3981, 0.0
    %v3990 = vmax.f32 %v3982, 0.0
    %v3991 = vadd.f32 %v3843, %v3983
    %v3992 = vadd.f32 %v3844, %v3984
    %v3993 = vadd.f32 %v3845, %v3985
    %v3994 = vadd.f32 %v3846, %v3986
    %v3995 = vadd.f32 %v3847, %v3987
    %v3996 = vadd.f32 %v3848, %v3988
    %v3997 = vadd.f32 %v3849, %v3989
    %v3998 = vadd.f32 %v3850, %v3990
    %3999 = vst.msk [vmem:[#allocation22] sm:$0xff] %vm3082, %v3991
    %4000 = vst.msk [vmem:[#allocation22 + $0x8] sm:$0xff] %vm3082, %v3992
    %4001 = vst.msk [vmem:[#allocation22 + $0x10] sm:$0xff] %vm3082, %v3993
    %4002 = vst.msk [vmem:[#allocation22 + $0x18] sm:$0xff] %vm3082, %v3994
    %4003 = vst.msk [vmem:[#allocation22 + $0x20] sm:$0xff] %vm3082, %v3995
    %4004 = vst.msk [vmem:[#allocation22 + $0x28] sm:$0xff] %vm3082, %v3996
    %4005 = vst.msk [vmem:[#allocation22 + $0x30] sm:$0xff] %vm3082, %v3997
    %4006 = vst.msk [vmem:[#allocation22 + $0x38] sm:$0xff] %vm3082, %v3998
    // Predicated region
    $region126: #{attention_block0_forward.1} parent=1 // pred_check
      _
    $region127: #{attention_block0_forward.1} parent=1 // pred_check_branch
      %4008 = sbr.rel (0) target = $region129
    $region128: #{attention_block0_forward.1} parent=1 // pred_region
      %4010 = vsyncadd [#allocation4], 0
      %s4011 = sshll.u32 [#allocation22], 4
      %s4012 = int_to_ptr.vmem [resolvable:$true] %s4011
      %s4013 = sshll.u32 %s19, 4
      %s4014 = int_to_ptr.hbm [resolvable:$true] %s4013
      %4019 = dma.vmem_to_hbm [thread:$0]  %s4012, 1024, %s4014, [#allocation4], 128, 128, 8
    $region129: #{attention_block0_forward.1} parent=1 // pred_fallthru
      _
    // Predicated region
    $region130: #{attention_block0_forward.1} parent=1 // pred_check
      _
    $region131: #{attention_block0_forward.1} parent=1 // pred_check_branch
      %4021 = sbr.rel (0) target = $region133
    $region132: #{attention_block0_forward.1} parent=1 // pred_region
      %4023 = dma.done [#allocation4], 1024
    $region133: #{attention_block0_forward.1} parent=1 // pred_fallthru
      _
    %4024 = vsyncpa [#allocation3], 1
    %4025 = vsyncpa [#allocation6], 1
    %4026 = vsyncpa [#allocation9], 1
    %4027 = vsyncpa [#allocation12], 1
    %4028 = vsyncpa [#allocation15], 1
    %4029 = vsyncpa [#allocation18], 1
    %4030 = vsyncpa [#allocation21], 1
    %4031 = vsyncpa [#allocation4], 1

</llo_original>
